<compile_context>
chip_gen: v7x
topology: tpu7x:2x2x1
jax: 0.10.0
libtpu: 0.0.40
codegen_flags: <defaults>
</compile_context>

<pallas_src>
import functools

import jax
import jax.numpy as jnp
from jax.experimental import pallas as pl
from jax.experimental.pallas import tpu as pltpu

_HP = 128  # padded per-gate width (one full lane block)


def _gru_model_kernel(
    xf_ref,                                   # (T*Bp, I)  time-major, batch-padded, flattened
    t2v_w_ref, t2v_b_ref,                     # (I,15) (1,15)
    a_ref, w2_ref, b2_ref,                    # (15,3Hp) (I,3Hp) (1,3Hp)  folded pre-GRU affine
    whh_ref, bhh_ref,                         # (Hp,3Hp) (1,3Hp), gate order [r,z,n]
    l1_w_ref, l1_b_ref, bn1_g_ref, bn1_b_ref, # (Hp,128) (1,128) (1,128) (1,128)
    l2_w_ref, l2_b_ref, bn2_g_ref, bn2_b_ref, # (128,256) (1,256) (1,256) (1,256)
    l3_w_ref, l3_b_ref,                       # (256,128) (1,128)  (only col 0 is real)
    out_ref,                                  # (Bp, 128)  (only col 0 is real)
    *, T, B_pad, B_real,
):
    Hp = whh_ref.shape[0]
    eps = 1e-5

    xf = xf_ref[...]                                       # (T*Bp, I)

    # ---- t2v sin branch; linear branch + layer0 + GRU input proj pre-folded offline ----
    v1 = jnp.sin(
        jnp.dot(xf, t2v_w_ref[...], preferred_element_type=jnp.float32) + t2v_b_ref[...]
    )                                                      # (T*Bp, 15)
    xp = (
        jnp.dot(v1, a_ref[...], preferred_element_type=jnp.float32)
        + jnp.dot(xf, w2_ref[...], preferred_element_type=jnp.float32)
        + b2_ref[...]
    )                                                      # (T*Bp, 3*Hp)

    # Hoist loop-invariant weight load and bias broadcast out of the recurrence.
    whh = whh_ref[...]                                     # (Hp, 3Hp)
    bhh = jnp.broadcast_to(bhh_ref[...], (B_pad, 3 * Hp))  # (Bp, 3Hp)

    # Padded lanes of h stay exactly 0:
    #   padded gate columns/biases are 0 -> r=z=sigmoid(0)=0.5, n=tanh(0)=0,
    #   h_new = 0.5*0 + 0.5*h_old = 0 given h_init = 0.
    h = jnp.zeros((B_pad, Hp), jnp.float32)

    # T is small here (<=16): fully unroll the serial recurrence.
    # TODO(synk): for large T, switch to lax.fori_loop over timestep chunks staged
    # through VMEM scratch instead of full unroll + full xp materialization.
    for t in range(T):
        gi = xp[t * B_pad:(t + 1) * B_pad, :]              # contiguous, sublane-aligned block
        gh = jnp.dot(h, whh, preferred_element_type=jnp.float32) + bhh
        i_r, i_z, i_n = gi[:, :Hp], gi[:, Hp:2 * Hp], gi[:, 2 * Hp:]
        h_r, h_z, h_n = gh[:, :Hp], gh[:, Hp:2 * Hp], gh[:, 2 * Hp:]
        r = jax.nn.sigmoid(i_r + h_r)
        z = jax.nn.sigmoid(i_z + h_z)
        n = jnp.tanh(i_n + r * h_n)
        h = (1.0 - z) * n + z * h                          # (Bp, Hp)

    # ---- MLP head; BatchNorm1d in training mode (batch stats over the REAL rows only) ----
    row = jax.lax.broadcasted_iota(jnp.int32, (B_pad, 1), 0)
    mask = (row < B_real).astype(jnp.float32)              # (Bp, 1)
    inv_b = 1.0 / float(B_real)

    def bn(a, g_ref, b_ref):
        am = a * mask
        m = jnp.sum(am, axis=0, keepdims=True) * inv_b
        m2 = jnp.sum(am * a, axis=0, keepdims=True) * inv_b
        var = jnp.maximum(m2 - m * m, 0.0)                 # biased variance, fp-safe clamp
        return (a - m) * jax.lax.rsqrt(var + eps) * g_ref[...] + b_ref[...]

    a1 = jnp.dot(h, l1_w_ref[...], preferred_element_type=jnp.float32) + l1_b_ref[...]   # (Bp,128)
    a1 = bn(a1, bn1_g_ref, bn1_b_ref)

    a2 = jnp.dot(a1, l2_w_ref[...], preferred_element_type=jnp.float32) + l2_b_ref[...]  # (Bp,256)
    a2 = bn(a2, bn2_g_ref, bn2_b_ref)

    out = jnp.dot(a2, l3_w_ref[...], preferred_element_type=jnp.float32) + l3_b_ref[...] # (Bp,128)
    out_ref[...] = out.astype(out_ref.dtype)               # lane-dense, unmasked store


def init_params(key, input_size, hidden_size):
    """Deterministic synthetic parameters (shapes match the PyTorch module)."""
    ks = jax.random.split(key, 16)
    I, H = input_size, hidden_size
    p = {}
    # SineActivation(in_features=I, out_features=16)
    p["t2v_w"] = jax.random.normal(ks[0], (I, 15), jnp.float32)
    p["t2v_b"] = jax.random.normal(ks[1], (1, 15), jnp.float32)
    p["t2v_w0"] = jax.random.normal(ks[2], (I, 1), jnp.float32)
    p["t2v_b0"] = jax.random.normal(ks[3], (1, 1), jnp.float32)
    # layer0: Linear(16, I) — stored transposed (16, I), split into sin part (15) / linear part (1)
    l0_w = 0.1 * jax.random.normal(ks[4], (16, I), jnp.float32)
    p["l0_wa"] = l0_w[:15, :]
    p["l0_wb"] = l0_w[15:, :]
    p["l0_b"] = 0.1 * jax.random.normal(ks[5], (1, I), jnp.float32)
    # GRU(I, H): stored transposed, gate order [r, z, n]
    p["gru_wih"] = 0.1 * jax.random.normal(ks[6], (I, 3 * H), jnp.float32)
    p["gru_bih"] = 0.1 * jax.random.normal(ks[7], (1, 3 * H), jnp.float32)
    p["gru_whh"] = 0.1 * jax.random.normal(ks[8], (H, 3 * H), jnp.float32)
    p["gru_bhh"] = 0.1 * jax.random.normal(ks[9], (1, 3 * H), jnp.float32)
    # Head (arc_num == 1)
    p["l1_w"] = 0.1 * jax.random.normal(ks[10], (H, 128), jnp.float32)
    p["l1_b"] = 0.1 * jax.random.normal(ks[11], (1, 128), jnp.float32)
    p["bn1_g"] = jnp.ones((1, 128), jnp.float32)
    p["bn1_b"] = jnp.zeros((1, 128), jnp.float32)
    p["l2_w"] = 0.1 * jax.random.normal(ks[12], (128, 256), jnp.float32)
    p["l2_b"] = 0.1 * jax.random.normal(ks[13], (1, 256), jnp.float32)
    p["bn2_g"] = jnp.ones((1, 256), jnp.float32)
    p["bn2_b"] = jnp.zeros((1, 256), jnp.float32)
    p["l3_w"] = 0.1 * jax.random.normal(ks[14], (256, 1), jnp.float32)
    p["l3_b"] = 0.1 * jax.random.normal(ks[15], (1, 1), jnp.float32)
    return p


def prepare_params(p, input_size, hidden_size, hp=_HP):
    """One-time offline weight folding + lane-aligned gate padding."""
    I, H = input_size, hidden_size

    # Pad each GRU gate from H to hp lanes (zero padding -> numerically exact).
    def pad_gate_cols(w):                                    # (rows, 3H) -> (rows, 3*hp)
        rows = w.shape[0]
        out = jnp.zeros((rows, 3 * hp), jnp.float32)
        for g in range(3):
            out = out.at[:, g * hp: g * hp + H].set(w[:, g * H:(g + 1) * H])
        return out

    wih_p = pad_gate_cols(p["gru_wih"])                      # (I, 3hp)
    bih_p = pad_gate_cols(p["gru_bih"])                      # (1, 3hp)
    bhh_p = pad_gate_cols(p["gru_bhh"])                      # (1, 3hp)
    whh_p = jnp.zeros((hp, 3 * hp), jnp.float32).at[:H, :].set(pad_gate_cols(p["gru_whh"]))

    # Fold t2v linear branch + layer0 + GRU input projection into a single affine map:
    #   xp = sin(x @ t2v_w + t2v_b) @ A + x @ W2 + b2
    w_lin = jnp.dot(p["t2v_w0"], p["l0_wb"])                 # (I, I)
    l0_b_f = p["l0_b"] + p["t2v_b0"] * p["l0_wb"]            # (1, I)
    a_fold = jnp.dot(p["l0_wa"], wih_p)                      # (15, 3hp)
    w2_fold = jnp.dot(w_lin, wih_p)                          # (I, 3hp)
    b2_fold = jnp.dot(l0_b_f, wih_p) + bih_p                 # (1, 3hp)

    l1_w_p = jnp.zeros((hp, 128), jnp.float32).at[:H, :].set(p["l1_w"])

    # Lane-dense output: pad final Linear(256,1) to 128 output columns (col 0 real).
    l3_w_p = jnp.zeros((256, 128), jnp.float32).at[:, :1].set(p["l3_w"])
    l3_b_p = jnp.zeros((1, 128), jnp.float32).at[:, :1].set(p["l3_b"])

    return {
        "t2v_w": p["t2v_w"], "t2v_b": p["t2v_b"],
        "A": a_fold, "W2": w2_fold, "b2": b2_fold,
        "whh": whh_p, "bhh": bhh_p,
        "l1_w": l1_w_p, "l1_b": p["l1_b"], "bn1_g": p["bn1_g"], "bn1_b": p["bn1_b"],
        "l2_w": p["l2_w"], "l2_b": p["l2_b"], "bn2_g": p["bn2_g"], "bn2_b": p["bn2_b"],
        "l3_w": l3_w_p, "l3_b": l3_b_p,
    }


@jax.jit
def gru_model_forward(x, pp):
    """x: (B, T, I) float32 (or (B, I), mirroring x.unsqueeze(1)) -> (B, 1) float32."""
    if x.ndim < 3:
        x = x[:, None, :]
    B, T, I = x.shape
    B_pad = max(8, ((B + 7) // 8) * 8)

    # Time-major + sublane-padded batch, flattened in the wrapper (cheap XLA relayout).
    xt = jnp.transpose(x, (1, 0, 2))                         # (T, B, I)
    xt = jnp.pad(xt, ((0, 0), (0, B_pad - B), (0, 0)))       # (T, Bp, I)
    xf = xt.reshape(T * B_pad, I)

    kernel = functools.partial(_gru_model_kernel, T=T, B_pad=B_pad, B_real=B)
    args = (
        xf,
        pp["t2v_w"], pp["t2v_b"],
        pp["A"], pp["W2"], pp["b2"],
        pp["whh"], pp["bhh"],
        pp["l1_w"], pp["l1_b"], pp["bn1_g"], pp["bn1_b"],
        pp["l2_w"], pp["l2_b"], pp["bn2_g"], pp["bn2_b"],
        pp["l3_w"], pp["l3_b"],
    )
    vmem = pl.BlockSpec(memory_space=pltpu.MemorySpace.VMEM)
    out = pl.pallas_call(
        kernel,
        out_shape=jax.ShapeDtypeStruct((B_pad, 128), jnp.float32),
        in_specs=[vmem] * len(args),
        out_specs=vmem,
    )(*args)
    return out[:B, :1]


if __name__ == "__main__":
    B, T, INPUT_SIZE, HIDDEN_SIZE = 2, 8, 4, 32
    key = jax.random.PRNGKey(0)
    kx, kp = jax.random.split(key)
    x = jax.random.normal(kx, (B, T, INPUT_SIZE), jnp.float32)
    params = init_params(kp, INPUT_SIZE, HIDDEN_SIZE)
    prepped = prepare_params(params, INPUT_SIZE, HIDDEN_SIZE)

    out = gru_model_forward(x, prepped)
    out = jax.block_until_ready(out)
    assert out.shape == (B, 1), out.shape
    assert bool(jnp.all(jnp.isfinite(out)))
    print("KERNEL_OK")
</pallas_src>

<mosaic_0001>
module attributes {stable_mosaic.version = 11 : i64} {
  func.func @_gru_model_kernel(%arg0: memref<64x4xf32, #tpu.memory_space<vmem>>, %arg1: memref<4x15xf32, #tpu.memory_space<vmem>>, %arg2: memref<1x15xf32, #tpu.memory_space<vmem>>, %arg3: memref<15x384xf32, #tpu.memory_space<vmem>>, %arg4: memref<4x384xf32, #tpu.memory_space<vmem>>, %arg5: memref<1x384xf32, #tpu.memory_space<vmem>>, %arg6: memref<128x384xf32, #tpu.memory_space<vmem>>, %arg7: memref<1x384xf32, #tpu.memory_space<vmem>>, %arg8: memref<128x128xf32, #tpu.memory_space<vmem>>, %arg9: memref<1x128xf32, #tpu.memory_space<vmem>>, %arg10: memref<1x128xf32, #tpu.memory_space<vmem>>, %arg11: memref<1x128xf32, #tpu.memory_space<vmem>>, %arg12: memref<128x256xf32, #tpu.memory_space<vmem>>, %arg13: memref<1x256xf32, #tpu.memory_space<vmem>>, %arg14: memref<1x256xf32, #tpu.memory_space<vmem>>, %arg15: memref<1x256xf32, #tpu.memory_space<vmem>>, %arg16: memref<256x128xf32, #tpu.memory_space<vmem>>, %arg17: memref<1x128xf32, #tpu.memory_space<vmem>>, %arg18: memref<8x128xf32, #tpu.memory_space<vmem>>) attributes {dimension_semantics = [], scalar_prefetch = 0 : i64, scratch_operands = 0 : i64, tpu.core_type = #tpu.core_type<tc>} {
    %c0 = arith.constant 0 : index
    %c0_0 = arith.constant 0 : index
    %0 = vector.load %arg0[%c0, %c0_0] : memref<64x4xf32, #tpu.memory_space<vmem>>, vector<64x4xf32>
    %c0_1 = arith.constant 0 : index
    %c0_2 = arith.constant 0 : index
    %1 = vector.load %arg1[%c0_1, %c0_2] : memref<4x15xf32, #tpu.memory_space<vmem>>, vector<4x15xf32>
    %cst = arith.constant dense<0.000000e+00> : vector<64x15xf32>
    %2 = tpu.matmul %0, %1, %cst {dimension_numbers = #tpu.dot_dimension_numbers<[1], [0], [0], [1], [0, 0, 1, 1], [], []>} : vector<64x4xf32>, vector<4x15xf32>, vector<64x15xf32> -> vector<64x15xf32>
    %c0_3 = arith.constant 0 : index
    %c0_4 = arith.constant 0 : index
    %3 = vector.load %arg2[%c0_3, %c0_4] : memref<1x15xf32, #tpu.memory_space<vmem>>, vector<1x15xf32>
    %4 = vector.broadcast %3 : vector<1x15xf32> to vector<64x15xf32>
    %5 = arith.addf %2, %4 : vector<64x15xf32>
    %6 = math.sin %5 : vector<64x15xf32>
    %c0_5 = arith.constant 0 : index
    %c0_6 = arith.constant 0 : index
    %7 = vector.load %arg3[%c0_5, %c0_6] : memref<15x384xf32, #tpu.memory_space<vmem>>, vector<15x384xf32>
    %cst_7 = arith.constant dense<0.000000e+00> : vector<64x384xf32>
    %8 = tpu.matmul %6, %7, %cst_7 {dimension_numbers = #tpu.dot_dimension_numbers<[1], [0], [0], [1], [0, 0, 1, 1], [], []>} : vector<64x15xf32>, vector<15x384xf32>, vector<64x384xf32> -> vector<64x384xf32>
    %c0_8 = arith.constant 0 : index
    %c0_9 = arith.constant 0 : index
    %9 = vector.load %arg4[%c0_8, %c0_9] : memref<4x384xf32, #tpu.memory_space<vmem>>, vector<4x384xf32>
    %cst_10 = arith.constant dense<0.000000e+00> : vector<64x384xf32>
    %10 = tpu.matmul %0, %9, %cst_10 {dimension_numbers = #tpu.dot_dimension_numbers<[1], [0], [0], [1], [0, 0, 1, 1], [], []>} : vector<64x4xf32>, vector<4x384xf32>, vector<64x384xf32> -> vector<64x384xf32>
    %11 = arith.addf %8, %10 : vector<64x384xf32>
    %c0_11 = arith.constant 0 : index
    %c0_12 = arith.constant 0 : index
    %12 = vector.load %arg5[%c0_11, %c0_12] : memref<1x384xf32, #tpu.memory_space<vmem>>, vector<1x384xf32>
    %13 = vector.broadcast %12 : vector<1x384xf32> to vector<64x384xf32>
    %14 = arith.addf %11, %13 : vector<64x384xf32>
    %c0_13 = arith.constant 0 : index
    %c0_14 = arith.constant 0 : index
    %15 = vector.load %arg6[%c0_13, %c0_14] : memref<128x384xf32, #tpu.memory_space<vmem>>, vector<128x384xf32>
    %c0_15 = arith.constant 0 : index
    %c0_16 = arith.constant 0 : index
    %16 = vector.load %arg7[%c0_15, %c0_16] : memref<1x384xf32, #tpu.memory_space<vmem>>, vector<1x384xf32>
    %17 = vector.shape_cast %16 : vector<1x384xf32> to vector<1x384xf32>
    %18 = vector.broadcast %17 : vector<1x384xf32> to vector<8x384xf32>
    %cst_17 = arith.constant 0.000000e+00 : f32
    %19 = vector.broadcast %cst_17 : f32 to vector<8x128xf32>
    %20 = vector.extract_strided_slice %14 {offsets = [0, 0], sizes = [8, 384], strides = [1, 1]} : vector<64x384xf32> to vector<8x384xf32>
    %cst_18 = arith.constant dense<0.000000e+00> : vector<8x384xf32>
    %21 = tpu.matmul %19, %15, %cst_18 {dimension_numbers = #tpu.dot_dimension_numbers<[1], [0], [0], [1], [0, 0, 1, 1], [], []>} : vector<8x128xf32>, vector<128x384xf32>, vector<8x384xf32> -> vector<8x384xf32>
    %22 = arith.addf %21, %18 : vector<8x384xf32>
    %23 = vector.extract_strided_slice %20 {offsets = [0, 0], sizes = [8, 128], strides = [1, 1]} : vector<8x384xf32> to vector<8x128xf32>
    %24 = vector.extract_strided_slice %20 {offsets = [0, 128], sizes = [8, 128], strides = [1, 1]} : vector<8x384xf32> to vector<8x128xf32>
    %25 = vector.extract_strided_slice %20 {offsets = [0, 256], sizes = [8, 128], strides = [1, 1]} : vector<8x384xf32> to vector<8x128xf32>
    %26 = vector.extract_strided_slice %22 {offsets = [0, 0], sizes = [8, 128], strides = [1, 1]} : vector<8x384xf32> to vector<8x128xf32>
    %27 = vector.extract_strided_slice %22 {offsets = [0, 128], sizes = [8, 128], strides = [1, 1]} : vector<8x384xf32> to vector<8x128xf32>
    %28 = vector.extract_strided_slice %22 {offsets = [0, 256], sizes = [8, 128], strides = [1, 1]} : vector<8x384xf32> to vector<8x128xf32>
    %29 = arith.addf %23, %26 : vector<8x128xf32>
    %30 = arith.negf %29 : vector<8x128xf32>
    %31 = math.exp %30 : vector<8x128xf32>
    %cst_19 = arith.constant 1.000000e+00 : f32
    %32 = vector.broadcast %cst_19 : f32 to vector<8x128xf32>
    %33 = arith.addf %32, %31 : vector<8x128xf32>
    %34 = arith.divf %32, %33 : vector<8x128xf32>
    %35 = arith.addf %24, %27 : vector<8x128xf32>
    %36 = arith.negf %35 : vector<8x128xf32>
    %37 = math.exp %36 : vector<8x128xf32>
    %cst_20 = arith.constant 1.000000e+00 : f32
    %38 = vector.broadcast %cst_20 : f32 to vector<8x128xf32>
    %39 = arith.addf %38, %37 : vector<8x128xf32>
    %40 = arith.divf %38, %39 : vector<8x128xf32>
    %41 = arith.mulf %34, %28 : vector<8x128xf32>
    %42 = arith.addf %25, %41 : vector<8x128xf32>
    %43 = math.tanh %42 : vector<8x128xf32>
    %cst_21 = arith.constant 1.000000e+00 : f32
    %44 = vector.broadcast %cst_21 : f32 to vector<8x128xf32>
    %45 = arith.subf %44, %40 : vector<8x128xf32>
    %46 = arith.mulf %45, %43 : vector<8x128xf32>
    %47 = arith.mulf %40, %19 : vector<8x128xf32>
    %48 = arith.addf %46, %47 : vector<8x128xf32>
    %49 = vector.extract_strided_slice %14 {offsets = [8, 0], sizes = [8, 384], strides = [1, 1]} : vector<64x384xf32> to vector<8x384xf32>
    %cst_22 = arith.constant dense<0.000000e+00> : vector<8x384xf32>
    %50 = tpu.matmul %48, %15, %cst_22 {dimension_numbers = #tpu.dot_dimension_numbers<[1], [0], [0], [1], [0, 0, 1, 1], [], []>} : vector<8x128xf32>, vector<128x384xf32>, vector<8x384xf32> -> vector<8x384xf32>
    %51 = arith.addf %50, %18 : vector<8x384xf32>
    %52 = vector.extract_strided_slice %49 {offsets = [0, 0], sizes = [8, 128], strides = [1, 1]} : vector<8x384xf32> to vector<8x128xf32>
    %53 = vector.extract_strided_slice %49 {offsets = [0, 128], sizes = [8, 128], strides = [1, 1]} : vector<8x384xf32> to vector<8x128xf32>
    %54 = vector.extract_strided_slice %49 {offsets = [0, 256], sizes = [8, 128], strides = [1, 1]} : vector<8x384xf32> to vector<8x128xf32>
    %55 = vector.extract_strided_slice %51 {offsets = [0, 0], sizes = [8, 128], strides = [1, 1]} : vector<8x384xf32> to vector<8x128xf32>
    %56 = vector.extract_strided_slice %51 {offsets = [0, 128], sizes = [8, 128], strides = [1, 1]} : vector<8x384xf32> to vector<8x128xf32>
    %57 = vector.extract_strided_slice %51 {offsets = [0, 256], sizes = [8, 128], strides = [1, 1]} : vector<8x384xf32> to vector<8x128xf32>
    %58 = arith.addf %52, %55 : vector<8x128xf32>
    %59 = arith.negf %58 : vector<8x128xf32>
    %60 = math.exp %59 : vector<8x128xf32>
    %cst_23 = arith.constant 1.000000e+00 : f32
    %61 = vector.broadcast %cst_23 : f32 to vector<8x128xf32>
    %62 = arith.addf %61, %60 : vector<8x128xf32>
    %63 = arith.divf %61, %62 : vector<8x128xf32>
    %64 = arith.addf %53, %56 : vector<8x128xf32>
    %65 = arith.negf %64 : vector<8x128xf32>
    %66 = math.exp %65 : vector<8x128xf32>
    %cst_24 = arith.constant 1.000000e+00 : f32
    %67 = vector.broadcast %cst_24 : f32 to vector<8x128xf32>
    %68 = arith.addf %67, %66 : vector<8x128xf32>
    %69 = arith.divf %67, %68 : vector<8x128xf32>
    %70 = arith.mulf %63, %57 : vector<8x128xf32>
    %71 = arith.addf %54, %70 : vector<8x128xf32>
    %72 = math.tanh %71 : vector<8x128xf32>
    %cst_25 = arith.constant 1.000000e+00 : f32
    %73 = vector.broadcast %cst_25 : f32 to vector<8x128xf32>
    %74 = arith.subf %73, %69 : vector<8x128xf32>
    %75 = arith.mulf %74, %72 : vector<8x128xf32>
    %76 = arith.mulf %69, %48 : vector<8x128xf32>
    %77 = arith.addf %75, %76 : vector<8x128xf32>
    %78 = vector.extract_strided_slice %14 {offsets = [16, 0], sizes = [8, 384], strides = [1, 1]} : vector<64x384xf32> to vector<8x384xf32>
    %cst_26 = arith.constant dense<0.000000e+00> : vector<8x384xf32>
    %79 = tpu.matmul %77, %15, %cst_26 {dimension_numbers = #tpu.dot_dimension_numbers<[1], [0], [0], [1], [0, 0, 1, 1], [], []>} : vector<8x128xf32>, vector<128x384xf32>, vector<8x384xf32> -> vector<8x384xf32>
    %80 = arith.addf %79, %18 : vector<8x384xf32>
    %81 = vector.extract_strided_slice %78 {offsets = [0, 0], sizes = [8, 128], strides = [1, 1]} : vector<8x384xf32> to vector<8x128xf32>
    %82 = vector.extract_strided_slice %78 {offsets = [0, 128], sizes = [8, 128], strides = [1, 1]} : vector<8x384xf32> to vector<8x128xf32>
    %83 = vector.extract_strided_slice %78 {offsets = [0, 256], sizes = [8, 128], strides = [1, 1]} : vector<8x384xf32> to vector<8x128xf32>
    %84 = vector.extract_strided_slice %80 {offsets = [0, 0], sizes = [8, 128], strides = [1, 1]} : vector<8x384xf32> to vector<8x128xf32>
    %85 = vector.extract_strided_slice %80 {offsets = [0, 128], sizes = [8, 128], strides = [1, 1]} : vector<8x384xf32> to vector<8x128xf32>
    %86 = vector.extract_strided_slice %80 {offsets = [0, 256], sizes = [8, 128], strides = [1, 1]} : vector<8x384xf32> to vector<8x128xf32>
    %87 = arith.addf %81, %84 : vector<8x128xf32>
    %88 = arith.negf %87 : vector<8x128xf32>
    %89 = math.exp %88 : vector<8x128xf32>
    %cst_27 = arith.constant 1.000000e+00 : f32
    %90 = vector.broadcast %cst_27 : f32 to vector<8x128xf32>
    %91 = arith.addf %90, %89 : vector<8x128xf32>
    %92 = arith.divf %90, %91 : vector<8x128xf32>
    %93 = arith.addf %82, %85 : vector<8x128xf32>
    %94 = arith.negf %93 : vector<8x128xf32>
    %95 = math.exp %94 : vector<8x128xf32>
    %cst_28 = arith.constant 1.000000e+00 : f32
    %96 = vector.broadcast %cst_28 : f32 to vector<8x128xf32>
    %97 = arith.addf %96, %95 : vector<8x128xf32>
    %98 = arith.divf %96, %97 : vector<8x128xf32>
    %99 = arith.mulf %92, %86 : vector<8x128xf32>
    %100 = arith.addf %83, %99 : vector<8x128xf32>
    %101 = math.tanh %100 : vector<8x128xf32>
    %cst_29 = arith.constant 1.000000e+00 : f32
    %102 = vector.broadcast %cst_29 : f32 to vector<8x128xf32>
    %103 = arith.subf %102, %98 : vector<8x128xf32>
    %104 = arith.mulf %103, %101 : vector<8x128xf32>
    %105 = arith.mulf %98, %77 : vector<8x128xf32>
    %106 = arith.addf %104, %105 : vector<8x128xf32>
    %107 = vector.extract_strided_slice %14 {offsets = [24, 0], sizes = [8, 384], strides = [1, 1]} : vector<64x384xf32> to vector<8x384xf32>
    %cst_30 = arith.constant dense<0.000000e+00> : vector<8x384xf32>
    %108 = tpu.matmul %106, %15, %cst_30 {dimension_numbers = #tpu.dot_dimension_numbers<[1], [0], [0], [1], [0, 0, 1, 1], [], []>} : vector<8x128xf32>, vector<128x384xf32>, vector<8x384xf32> -> vector<8x384xf32>
    %109 = arith.addf %108, %18 : vector<8x384xf32>
    %110 = vector.extract_strided_slice %107 {offsets = [0, 0], sizes = [8, 128], strides = [1, 1]} : vector<8x384xf32> to vector<8x128xf32>
    %111 = vector.extract_strided_slice %107 {offsets = [0, 128], sizes = [8, 128], strides = [1, 1]} : vector<8x384xf32> to vector<8x128xf32>
    %112 = vector.extract_strided_slice %107 {offsets = [0, 256], sizes = [8, 128], strides = [1, 1]} : vector<8x384xf32> to vector<8x128xf32>
    %113 = vector.extract_strided_slice %109 {offsets = [0, 0], sizes = [8, 128], strides = [1, 1]} : vector<8x384xf32> to vector<8x128xf32>
    %114 = vector.extract_strided_slice %109 {offsets = [0, 128], sizes = [8, 128], strides = [1, 1]} : vector<8x384xf32> to vector<8x128xf32>
    %115 = vector.extract_strided_slice %109 {offsets = [0, 256], sizes = [8, 128], strides = [1, 1]} : vector<8x384xf32> to vector<8x128xf32>
    %116 = arith.addf %110, %113 : vector<8x128xf32>
    %117 = arith.negf %116 : vector<8x128xf32>
    %118 = math.exp %117 : vector<8x128xf32>
    %cst_31 = arith.constant 1.000000e+00 : f32
    %119 = vector.broadcast %cst_31 : f32 to vector<8x128xf32>
    %120 = arith.addf %119, %118 : vector<8x128xf32>
    %121 = arith.divf %119, %120 : vector<8x128xf32>
    %122 = arith.addf %111, %114 : vector<8x128xf32>
    %123 = arith.negf %122 : vector<8x128xf32>
    %124 = math.exp %123 : vector<8x128xf32>
    %cst_32 = arith.constant 1.000000e+00 : f32
    %125 = vector.broadcast %cst_32 : f32 to vector<8x128xf32>
    %126 = arith.addf %125, %124 : vector<8x128xf32>
    %127 = arith.divf %125, %126 : vector<8x128xf32>
    %128 = arith.mulf %121, %115 : vector<8x128xf32>
    %129 = arith.addf %112, %128 : vector<8x128xf32>
    %130 = math.tanh %129 : vector<8x128xf32>
    %cst_33 = arith.constant 1.000000e+00 : f32
    %131 = vector.broadcast %cst_33 : f32 to vector<8x128xf32>
    %132 = arith.subf %131, %127 : vector<8x128xf32>
    %133 = arith.mulf %132, %130 : vector<8x128xf32>
    %134 = arith.mulf %127, %106 : vector<8x128xf32>
    %135 = arith.addf %133, %134 : vector<8x128xf32>
    %136 = vector.extract_strided_slice %14 {offsets = [32, 0], sizes = [8, 384], strides = [1, 1]} : vector<64x384xf32> to vector<8x384xf32>
    %cst_34 = arith.constant dense<0.000000e+00> : vector<8x384xf32>
    %137 = tpu.matmul %135, %15, %cst_34 {dimension_numbers = #tpu.dot_dimension_numbers<[1], [0], [0], [1], [0, 0, 1, 1], [], []>} : vector<8x128xf32>, vector<128x384xf32>, vector<8x384xf32> -> vector<8x384xf32>
    %138 = arith.addf %137, %18 : vector<8x384xf32>
    %139 = vector.extract_strided_slice %136 {offsets = [0, 0], sizes = [8, 128], strides = [1, 1]} : vector<8x384xf32> to vector<8x128xf32>
    %140 = vector.extract_strided_slice %136 {offsets = [0, 128], sizes = [8, 128], strides = [1, 1]} : vector<8x384xf32> to vector<8x128xf32>
    %141 = vector.extract_strided_slice %136 {offsets = [0, 256], sizes = [8, 128], strides = [1, 1]} : vector<8x384xf32> to vector<8x128xf32>
    %142 = vector.extract_strided_slice %138 {offsets = [0, 0], sizes = [8, 128], strides = [1, 1]} : vector<8x384xf32> to vector<8x128xf32>
    %143 = vector.extract_strided_slice %138 {offsets = [0, 128], sizes = [8, 128], strides = [1, 1]} : vector<8x384xf32> to vector<8x128xf32>
    %144 = vector.extract_strided_slice %138 {offsets = [0, 256], sizes = [8, 128], strides = [1, 1]} : vector<8x384xf32> to vector<8x128xf32>
    %145 = arith.addf %139, %142 : vector<8x128xf32>
    %146 = arith.negf %145 : vector<8x128xf32>
    %147 = math.exp %146 : vector<8x128xf32>
    %cst_35 = arith.constant 1.000000e+00 : f32
    %148 = vector.broadcast %cst_35 : f32 to vector<8x128xf32>
    %149 = arith.addf %148, %147 : vector<8x128xf32>
    %150 = arith.divf %148, %149 : vector<8x128xf32>
    %151 = arith.addf %140, %143 : vector<8x128xf32>
    %152 = arith.negf %151 : vector<8x128xf32>
    %153 = math.exp %152 : vector<8x128xf32>
    %cst_36 = arith.constant 1.000000e+00 : f32
    %154 = vector.broadcast %cst_36 : f32 to vector<8x128xf32>
    %155 = arith.addf %154, %153 : vector<8x128xf32>
    %156 = arith.divf %154, %155 : vector<8x128xf32>
    %157 = arith.mulf %150, %144 : vector<8x128xf32>
    %158 = arith.addf %141, %157 : vector<8x128xf32>
    %159 = math.tanh %158 : vector<8x128xf32>
    %cst_37 = arith.constant 1.000000e+00 : f32
    %160 = vector.broadcast %cst_37 : f32 to vector<8x128xf32>
    %161 = arith.subf %160, %156 : vector<8x128xf32>
    %162 = arith.mulf %161, %159 : vector<8x128xf32>
    %163 = arith.mulf %156, %135 : vector<8x128xf32>
    %164 = arith.addf %162, %163 : vector<8x128xf32>
    %165 = vector.extract_strided_slice %14 {offsets = [40, 0], sizes = [8, 384], strides = [1, 1]} : vector<64x384xf32> to vector<8x384xf32>
    %cst_38 = arith.constant dense<0.000000e+00> : vector<8x384xf32>
    %166 = tpu.matmul %164, %15, %cst_38 {dimension_numbers = #tpu.dot_dimension_numbers<[1], [0], [0], [1], [0, 0, 1, 1], [], []>} : vector<8x128xf32>, vector<128x384xf32>, vector<8x384xf32> -> vector<8x384xf32>
    %167 = arith.addf %166, %18 : vector<8x384xf32>
    %168 = vector.extract_strided_slice %165 {offsets = [0, 0], sizes = [8, 128], strides = [1, 1]} : vector<8x384xf32> to vector<8x128xf32>
    %169 = vector.extract_strided_slice %165 {offsets = [0, 128], sizes = [8, 128], strides = [1, 1]} : vector<8x384xf32> to vector<8x128xf32>
    %170 = vector.extract_strided_slice %165 {offsets = [0, 256], sizes = [8, 128], strides = [1, 1]} : vector<8x384xf32> to vector<8x128xf32>
    %171 = vector.extract_strided_slice %167 {offsets = [0, 0], sizes = [8, 128], strides = [1, 1]} : vector<8x384xf32> to vector<8x128xf32>
    %172 = vector.extract_strided_slice %167 {offsets = [0, 128], sizes = [8, 128], strides = [1, 1]} : vector<8x384xf32> to vector<8x128xf32>
    %173 = vector.extract_strided_slice %167 {offsets = [0, 256], sizes = [8, 128], strides = [1, 1]} : vector<8x384xf32> to vector<8x128xf32>
    %174 = arith.addf %168, %171 : vector<8x128xf32>
    %175 = arith.negf %174 : vector<8x128xf32>
    %176 = math.exp %175 : vector<8x128xf32>
    %cst_39 = arith.constant 1.000000e+00 : f32
    %177 = vector.broadcast %cst_39 : f32 to vector<8x128xf32>
    %178 = arith.addf %177, %176 : vector<8x128xf32>
    %179 = arith.divf %177, %178 : vector<8x128xf32>
    %180 = arith.addf %169, %172 : vector<8x128xf32>
    %181 = arith.negf %180 : vector<8x128xf32>
    %182 = math.exp %181 : vector<8x128xf32>
    %cst_40 = arith.constant 1.000000e+00 : f32
    %183 = vector.broadcast %cst_40 : f32 to vector<8x128xf32>
    %184 = arith.addf %183, %182 : vector<8x128xf32>
    %185 = arith.divf %183, %184 : vector<8x128xf32>
    %186 = arith.mulf %179, %173 : vector<8x128xf32>
    %187 = arith.addf %170, %186 : vector<8x128xf32>
    %188 = math.tanh %187 : vector<8x128xf32>
    %cst_41 = arith.constant 1.000000e+00 : f32
    %189 = vector.broadcast %cst_41 : f32 to vector<8x128xf32>
    %190 = arith.subf %189, %185 : vector<8x128xf32>
    %191 = arith.mulf %190, %188 : vector<8x128xf32>
    %192 = arith.mulf %185, %164 : vector<8x128xf32>
    %193 = arith.addf %191, %192 : vector<8x128xf32>
    %194 = vector.extract_strided_slice %14 {offsets = [48, 0], sizes = [8, 384], strides = [1, 1]} : vector<64x384xf32> to vector<8x384xf32>
    %cst_42 = arith.constant dense<0.000000e+00> : vector<8x384xf32>
    %195 = tpu.matmul %193, %15, %cst_42 {dimension_numbers = #tpu.dot_dimension_numbers<[1], [0], [0], [1], [0, 0, 1, 1], [], []>} : vector<8x128xf32>, vector<128x384xf32>, vector<8x384xf32> -> vector<8x384xf32>
    %196 = arith.addf %195, %18 : vector<8x384xf32>
    %197 = vector.extract_strided_slice %194 {offsets = [0, 0], sizes = [8, 128], strides = [1, 1]} : vector<8x384xf32> to vector<8x128xf32>
    %198 = vector.extract_strided_slice %194 {offsets = [0, 128], sizes = [8, 128], strides = [1, 1]} : vector<8x384xf32> to vector<8x128xf32>
    %199 = vector.extract_strided_slice %194 {offsets = [0, 256], sizes = [8, 128], strides = [1, 1]} : vector<8x384xf32> to vector<8x128xf32>
    %200 = vector.extract_strided_slice %196 {offsets = [0, 0], sizes = [8, 128], strides = [1, 1]} : vector<8x384xf32> to vector<8x128xf32>
    %201 = vector.extract_strided_slice %196 {offsets = [0, 128], sizes = [8, 128], strides = [1, 1]} : vector<8x384xf32> to vector<8x128xf32>
    %202 = vector.extract_strided_slice %196 {offsets = [0, 256], sizes = [8, 128], strides = [1, 1]} : vector<8x384xf32> to vector<8x128xf32>
    %203 = arith.addf %197, %200 : vector<8x128xf32>
    %204 = arith.negf %203 : vector<8x128xf32>
    %205 = math.exp %204 : vector<8x128xf32>
    %cst_43 = arith.constant 1.000000e+00 : f32
    %206 = vector.broadcast %cst_43 : f32 to vector<8x128xf32>
    %207 = arith.addf %206, %205 : vector<8x128xf32>
    %208 = arith.divf %206, %207 : vector<8x128xf32>
    %209 = arith.addf %198, %201 : vector<8x128xf32>
    %210 = arith.negf %209 : vector<8x128xf32>
    %211 = math.exp %210 : vector<8x128xf32>
    %cst_44 = arith.constant 1.000000e+00 : f32
    %212 = vector.broadcast %cst_44 : f32 to vector<8x128xf32>
    %213 = arith.addf %212, %211 : vector<8x128xf32>
    %214 = arith.divf %212, %213 : vector<8x128xf32>
    %215 = arith.mulf %208, %202 : vector<8x128xf32>
    %216 = arith.addf %199, %215 : vector<8x128xf32>
    %217 = math.tanh %216 : vector<8x128xf32>
    %cst_45 = arith.constant 1.000000e+00 : f32
    %218 = vector.broadcast %cst_45 : f32 to vector<8x128xf32>
    %219 = arith.subf %218, %214 : vector<8x128xf32>
    %220 = arith.mulf %219, %217 : vector<8x128xf32>
    %221 = arith.mulf %214, %193 : vector<8x128xf32>
    %222 = arith.addf %220, %221 : vector<8x128xf32>
    %223 = vector.extract_strided_slice %14 {offsets = [56, 0], sizes = [8, 384], strides = [1, 1]} : vector<64x384xf32> to vector<8x384xf32>
    %cst_46 = arith.constant dense<0.000000e+00> : vector<8x384xf32>
    %224 = tpu.matmul %222, %15, %cst_46 {dimension_numbers = #tpu.dot_dimension_numbers<[1], [0], [0], [1], [0, 0, 1, 1], [], []>} : vector<8x128xf32>, vector<128x384xf32>, vector<8x384xf32> -> vector<8x384xf32>
    %225 = arith.addf %224, %18 : vector<8x384xf32>
    %226 = vector.extract_strided_slice %223 {offsets = [0, 0], sizes = [8, 128], strides = [1, 1]} : vector<8x384xf32> to vector<8x128xf32>
    %227 = vector.extract_strided_slice %223 {offsets = [0, 128], sizes = [8, 128], strides = [1, 1]} : vector<8x384xf32> to vector<8x128xf32>
    %228 = vector.extract_strided_slice %223 {offsets = [0, 256], sizes = [8, 128], strides = [1, 1]} : vector<8x384xf32> to vector<8x128xf32>
    %229 = vector.extract_strided_slice %225 {offsets = [0, 0], sizes = [8, 128], strides = [1, 1]} : vector<8x384xf32> to vector<8x128xf32>
    %230 = vector.extract_strided_slice %225 {offsets = [0, 128], sizes = [8, 128], strides = [1, 1]} : vector<8x384xf32> to vector<8x128xf32>
    %231 = vector.extract_strided_slice %225 {offsets = [0, 256], sizes = [8, 128], strides = [1, 1]} : vector<8x384xf32> to vector<8x128xf32>
    %232 = arith.addf %226, %229 : vector<8x128xf32>
    %233 = arith.negf %232 : vector<8x128xf32>
    %234 = math.exp %233 : vector<8x128xf32>
    %cst_47 = arith.constant 1.000000e+00 : f32
    %235 = vector.broadcast %cst_47 : f32 to vector<8x128xf32>
    %236 = arith.addf %235, %234 : vector<8x128xf32>
    %237 = arith.divf %235, %236 : vector<8x128xf32>
    %238 = arith.addf %227, %230 : vector<8x128xf32>
    %239 = arith.negf %238 : vector<8x128xf32>
    %240 = math.exp %239 : vector<8x128xf32>
    %cst_48 = arith.constant 1.000000e+00 : f32
    %241 = vector.broadcast %cst_48 : f32 to vector<8x128xf32>
    %242 = arith.addf %241, %240 : vector<8x128xf32>
    %243 = arith.divf %241, %242 : vector<8x128xf32>
    %244 = arith.mulf %237, %231 : vector<8x128xf32>
    %245 = arith.addf %228, %244 : vector<8x128xf32>
    %246 = math.tanh %245 : vector<8x128xf32>
    %cst_49 = arith.constant 1.000000e+00 : f32
    %247 = vector.broadcast %cst_49 : f32 to vector<8x128xf32>
    %248 = arith.subf %247, %243 : vector<8x128xf32>
    %249 = arith.mulf %248, %246 : vector<8x128xf32>
    %250 = arith.mulf %243, %222 : vector<8x128xf32>
    %251 = arith.addf %249, %250 : vector<8x128xf32>
    %252 = tpu.iota {dimensions = array<i32: 0>} : vector<8x1xi32>
    %c2_i32 = arith.constant 2 : i32
    %253 = vector.broadcast %c2_i32 : i32 to vector<8x1xi32>
    %254 = arith.cmpi slt, %252, %253 : vector<8x1xi32>
    %255 = arith.extui %254 : vector<8x1xi1> to vector<8x1xi32>
    %256 = arith.sitofp %255 : vector<8x1xi32> to vector<8x1xf32>
    %c0_50 = arith.constant 0 : index
    %c0_51 = arith.constant 0 : index
    %257 = vector.load %arg8[%c0_50, %c0_51] : memref<128x128xf32, #tpu.memory_space<vmem>>, vector<128x128xf32>
    %cst_52 = arith.constant dense<0.000000e+00> : vector<8x128xf32>
    %258 = tpu.matmul %251, %257, %cst_52 {dimension_numbers = #tpu.dot_dimension_numbers<[1], [0], [0], [1], [0, 0, 1, 1], [], []>} : vector<8x128xf32>, vector<128x128xf32>, vector<8x128xf32> -> vector<8x128xf32>
    %c0_53 = arith.constant 0 : index
    %c0_54 = arith.constant 0 : index
    %259 = vector.load %arg9[%c0_53, %c0_54] : memref<1x128xf32, #tpu.memory_space<vmem>>, vector<1x128xf32>
    %260 = vector.broadcast %259 : vector<1x128xf32> to vector<8x128xf32>
    %261 = arith.addf %258, %260 : vector<8x128xf32>
    %262 = vector.broadcast %256 : vector<8x1xf32> to vector<8x128xf32>
    %263 = arith.mulf %261, %262 : vector<8x128xf32>
    %cst_55 = arith.constant dense<0.000000e+00> : vector<128xf32>
    %264 = vector.multi_reduction <add>, %263, %cst_55 [0] : vector<8x128xf32> to vector<128xf32>
    %265 = vector.shape_cast %264 : vector<128xf32> to vector<1x128xf32>
    %cst_56 = arith.constant 5.000000e-01 : f32
    %266 = vector.broadcast %cst_56 : f32 to vector<1x128xf32>
    %267 = arith.mulf %265, %266 : vector<1x128xf32>
    %268 = arith.mulf %263, %261 : vector<8x128xf32>
    %cst_57 = arith.constant dense<0.000000e+00> : vector<128xf32>
    %269 = vector.multi_reduction <add>, %268, %cst_57 [0] : vector<8x128xf32> to vector<128xf32>
    %270 = vector.shape_cast %269 : vector<128xf32> to vector<1x128xf32>
    %cst_58 = arith.constant 5.000000e-01 : f32
    %271 = vector.broadcast %cst_58 : f32 to vector<1x128xf32>
    %272 = arith.mulf %270, %271 : vector<1x128xf32>
    %273 = arith.mulf %267, %267 : vector<1x128xf32>
    %274 = arith.subf %272, %273 : vector<1x128xf32>
    %cst_59 = arith.constant 0.000000e+00 : f32
    %275 = vector.broadcast %cst_59 : f32 to vector<1x128xf32>
    %276 = arith.maximumf %274, %275 : vector<1x128xf32>
    %277 = vector.broadcast %267 : vector<1x128xf32> to vector<8x128xf32>
    %278 = arith.subf %261, %277 : vector<8x128xf32>
    %cst_60 = arith.constant 9.99999974E-6 : f32
    %279 = vector.broadcast %cst_60 : f32 to vector<1x128xf32>
    %280 = arith.addf %276, %279 : vector<1x128xf32>
    %281 = math.rsqrt %280 : vector<1x128xf32>
    %282 = vector.broadcast %281 : vector<1x128xf32> to vector<8x128xf32>
    %283 = arith.mulf %278, %282 : vector<8x128xf32>
    %c0_61 = arith.constant 0 : index
    %c0_62 = arith.constant 0 : index
    %284 = vector.load %arg10[%c0_61, %c0_62] : memref<1x128xf32, #tpu.memory_space<vmem>>, vector<1x128xf32>
    %285 = vector.broadcast %284 : vector<1x128xf32> to vector<8x128xf32>
    %286 = arith.mulf %283, %285 : vector<8x128xf32>
    %c0_63 = arith.constant 0 : index
    %c0_64 = arith.constant 0 : index
    %287 = vector.load %arg11[%c0_63, %c0_64] : memref<1x128xf32, #tpu.memory_space<vmem>>, vector<1x128xf32>
    %288 = vector.broadcast %287 : vector<1x128xf32> to vector<8x128xf32>
    %289 = arith.addf %286, %288 : vector<8x128xf32>
    %c0_65 = arith.constant 0 : index
    %c0_66 = arith.constant 0 : index
    %290 = vector.load %arg12[%c0_65, %c0_66] : memref<128x256xf32, #tpu.memory_space<vmem>>, vector<128x256xf32>
    %cst_67 = arith.constant dense<0.000000e+00> : vector<8x256xf32>
    %291 = tpu.matmul %289, %290, %cst_67 {dimension_numbers = #tpu.dot_dimension_numbers<[1], [0], [0], [1], [0, 0, 1, 1], [], []>} : vector<8x128xf32>, vector<128x256xf32>, vector<8x256xf32> -> vector<8x256xf32>
    %c0_68 = arith.constant 0 : index
    %c0_69 = arith.constant 0 : index
    %292 = vector.load %arg13[%c0_68, %c0_69] : memref<1x256xf32, #tpu.memory_space<vmem>>, vector<1x256xf32>
    %293 = vector.broadcast %292 : vector<1x256xf32> to vector<8x256xf32>
    %294 = arith.addf %291, %293 : vector<8x256xf32>
    %295 = vector.broadcast %256 : vector<8x1xf32> to vector<8x256xf32>
    %296 = arith.mulf %294, %295 : vector<8x256xf32>
    %cst_70 = arith.constant dense<0.000000e+00> : vector<256xf32>
    %297 = vector.multi_reduction <add>, %296, %cst_70 [0] : vector<8x256xf32> to vector<256xf32>
    %298 = vector.shape_cast %297 : vector<256xf32> to vector<1x256xf32>
    %cst_71 = arith.constant 5.000000e-01 : f32
    %299 = vector.broadcast %cst_71 : f32 to vector<1x256xf32>
    %300 = arith.mulf %298, %299 : vector<1x256xf32>
    %301 = arith.mulf %296, %294 : vector<8x256xf32>
    %cst_72 = arith.constant dense<0.000000e+00> : vector<256xf32>
    %302 = vector.multi_reduction <add>, %301, %cst_72 [0] : vector<8x256xf32> to vector<256xf32>
    %303 = vector.shape_cast %302 : vector<256xf32> to vector<1x256xf32>
    %cst_73 = arith.constant 5.000000e-01 : f32
    %304 = vector.broadcast %cst_73 : f32 to vector<1x256xf32>
    %305 = arith.mulf %303, %304 : vector<1x256xf32>
    %306 = arith.mulf %300, %300 : vector<1x256xf32>
    %307 = arith.subf %305, %306 : vector<1x256xf32>
    %cst_74 = arith.constant 0.000000e+00 : f32
    %308 = vector.broadcast %cst_74 : f32 to vector<1x256xf32>
    %309 = arith.maximumf %307, %308 : vector<1x256xf32>
    %310 = vector.broadcast %300 : vector<1x256xf32> to vector<8x256xf32>
    %311 = arith.subf %294, %310 : vector<8x256xf32>
    %cst_75 = arith.constant 9.99999974E-6 : f32
    %312 = vector.broadcast %cst_75 : f32 to vector<1x256xf32>
    %313 = arith.addf %309, %312 : vector<1x256xf32>
    %314 = math.rsqrt %313 : vector<1x256xf32>
    %315 = vector.broadcast %314 : vector<1x256xf32> to vector<8x256xf32>
    %316 = arith.mulf %311, %315 : vector<8x256xf32>
    %c0_76 = arith.constant 0 : index
    %c0_77 = arith.constant 0 : index
    %317 = vector.load %arg14[%c0_76, %c0_77] : memref<1x256xf32, #tpu.memory_space<vmem>>, vector<1x256xf32>
    %318 = vector.broadcast %317 : vector<1x256xf32> to vector<8x256xf32>
    %319 = arith.mulf %316, %318 : vector<8x256xf32>
    %c0_78 = arith.constant 0 : index
    %c0_79 = arith.constant 0 : index
    %320 = vector.load %arg15[%c0_78, %c0_79] : memref<1x256xf32, #tpu.memory_space<vmem>>, vector<1x256xf32>
    %321 = vector.broadcast %320 : vector<1x256xf32> to vector<8x256xf32>
    %322 = arith.addf %319, %321 : vector<8x256xf32>
    %c0_80 = arith.constant 0 : index
    %c0_81 = arith.constant 0 : index
    %323 = vector.load %arg16[%c0_80, %c0_81] : memref<256x128xf32, #tpu.memory_space<vmem>>, vector<256x128xf32>
    %cst_82 = arith.constant dense<0.000000e+00> : vector<8x128xf32>
    %324 = tpu.matmul %322, %323, %cst_82 {dimension_numbers = #tpu.dot_dimension_numbers<[1], [0], [0], [1], [0, 0, 1, 1], [], []>} : vector<8x256xf32>, vector<256x128xf32>, vector<8x128xf32> -> vector<8x128xf32>
    %c0_83 = arith.constant 0 : index
    %c0_84 = arith.constant 0 : index
    %325 = vector.load %arg17[%c0_83, %c0_84] : memref<1x128xf32, #tpu.memory_space<vmem>>, vector<1x128xf32>
    %326 = vector.broadcast %325 : vector<1x128xf32> to vector<8x128xf32>
    %327 = arith.addf %324, %326 : vector<8x128xf32>
    %c0_85 = arith.constant 0 : index
    %c0_86 = arith.constant 0 : index
    %328 = vector.load %arg18[%c0_85, %c0_86] : memref<8x128xf32, #tpu.memory_space<vmem>>, vector<8x128xf32>
    tpu.vector_store %arg18[%c0_85, %c0_86], %327 {strides = array<i32>} : memref<8x128xf32, #tpu.memory_space<vmem>>, vector<8x128xf32>,
    return
  }
}

</mosaic_0001>

<llo_original>
// kernel: gru_model_forward.1
$region0: #{gru_model_forward.1}
  #allocation0 [shape = 'u32[]', space=smem, size = 0x4, offset = 0x4, fixed_abs, tag = 'smem constant byte address 0x4 - core index']
  #allocation1 [shape = 'u32[144,128]{1,0:T(1,128)}', space=vmem, size = 0x12000, scoped, tag = 'internal scratch']
  %s0 = inlined_call_operand.vmem [shape: f32[64,4], index: 0, kind: input, shape index: {}]
  %s1 = inlined_call_operand.vmem [shape: f32[4,15], index: 1, kind: input, shape index: {}]
  %s2 = inlined_call_operand.vmem [shape: f32[1,15], index: 2, kind: input, shape index: {}]
  %s3 = inlined_call_operand.hbm [shape: f32[15,384], index: 3, kind: input, shape index: {}]
  %s4 = inlined_call_operand.vmem [shape: f32[4,384], index: 4, kind: input, shape index: {}]
  %s5 = inlined_call_operand.hbm [shape: f32[1,384], index: 5, kind: input, shape index: {}]
  %s6 = inlined_call_operand.hbm [shape: f32[128,384], index: 6, kind: input, shape index: {}]
  %s7 = inlined_call_operand.hbm [shape: f32[1,384], index: 7, kind: input, shape index: {}]
  %s8 = inlined_call_operand.vmem [shape: f32[128,128], index: 8, kind: input, shape index: {}]
  %s9 = inlined_call_operand.hbm [shape: f32[1,128], index: 9, kind: input, shape index: {}]
  %s10 = inlined_call_operand.hbm [shape: f32[1,128], index: 10, kind: input, shape index: {}]
  %s11 = inlined_call_operand.hbm [shape: f32[1,128], index: 11, kind: input, shape index: {}]
  %s12 = inlined_call_operand.hbm [shape: f32[128,256], index: 12, kind: input, shape index: {}]
  %s13 = inlined_call_operand.vmem [shape: f32[1,256], index: 13, kind: input, shape index: {}]
  %s14 = inlined_call_operand.hbm [shape: f32[1,256], index: 14, kind: input, shape index: {}]
  %s15 = inlined_call_operand.hbm [shape: f32[1,256], index: 15, kind: input, shape index: {}]
  %s16 = inlined_call_operand.hbm [shape: f32[256,128], index: 16, kind: input, shape index: {}]
  %s17 = inlined_call_operand.vmem [shape: f32[1,128], index: 17, kind: input, shape index: {}]
  %s18 = inlined_call_operand.vmem [shape: f32[8,128], index: 18, kind: output, shape index: {}]
  %s19 = sld [smem:[#allocation0]]
  $region126: #{gru_model_forward.1} parent=0
    _
  %s21 = ssub.s32 1, %s19
  %s22 = scalar_select 0, %s21, %s19
  $region1: #{gru_model_forward.1} parent=0
    #allocation2 [shape = 'u8[24576]{0}', space=vmem, size = 0x6000, scoped, tag = 'input window, operand 3, single buffered']
    #allocation3 [shape = 's32[1]{0}', space=sflag, size = 0x4, scoped, tag = 'scoped memory for gru_model_forward.1']
    #allocation4 [shape = 'u8[1536]{0}', space=vmem, size = 0x800, scoped, tag = 'input window, operand 5, single buffered']
    #allocation5 [shape = 's32[1]{0}', space=sflag, size = 0x4, scoped, tag = 'scoped memory for gru_model_forward.1']
    #allocation6 [shape = 'u8[196608]{0}', space=vmem, size = 0x30000, scoped, tag = 'input window, operand 6, single buffered']
    #allocation7 [shape = 'u8[1536]{0}', space=vmem, size = 0x800, scoped, tag = 'input window, operand 7, single buffered']
    #allocation8 [shape = 's32[1]{0}', space=sflag, size = 0x4, scoped, tag = 'scoped memory for gru_model_forward.1']
    #allocation9 [shape = 'u8[512]{0}', space=vmem, size = 0x400, scoped, tag = 'input window, operand 9, single buffered']
    #allocation10 [shape = 'u8[512]{0}', space=vmem, size = 0x400, scoped, tag = 'input window, operand 10, single buffered']
    #allocation11 [shape = 's32[1]{0}', space=sflag, size = 0x4, scoped, tag = 'scoped memory for gru_model_forward.1']
    #allocation12 [shape = 'u8[512]{0}', space=vmem, size = 0x400, scoped, tag = 'input window, operand 11, single buffered']
    #allocation13 [shape = 'u8[131072]{0}', space=vmem, size = 0x20000, scoped, tag = 'input window, operand 12, single buffered']
    #allocation14 [shape = 's32[1]{0}', space=sflag, size = 0x4, scoped, tag = 'scoped memory for gru_model_forward.1']
    #allocation15 [shape = 'u8[1024]{0}', space=vmem, size = 0x400, scoped, tag = 'input window, operand 14, single buffered']
    #allocation16 [shape = 'u8[1024]{0}', space=vmem, size = 0x400, scoped, tag = 'input window, operand 15, single buffered']
    #allocation17 [shape = 's32[1]{0}', space=sflag, size = 0x4, scoped, tag = 'scoped memory for gru_model_forward.1']
    #allocation18 [shape = 'u8[131072]{0}', space=vmem, size = 0x20000, scoped, tag = 'input window, operand 16, single buffered']
    %23 = vsyncpa [#allocation3], 0
    %24 = vsyncpa [#allocation5], 0
    %25 = vsyncpa [#allocation8], 0
    %26 = vsyncpa [#allocation11], 0
    %27 = vsyncpa [#allocation14], 0
    %28 = vsyncpa [#allocation17], 0
    // Predicated region
    $region2: #{gru_model_forward.1} parent=1 // pred_check
      _
    $region3: #{gru_model_forward.1} parent=1 // pred_check_branch
      %30 = sbr.rel (0) target = $region5
    $region4: #{gru_model_forward.1} parent=1 // pred_region
      _
    $region5: #{gru_model_forward.1} parent=1 // pred_fallthru
      _
    // Predicated region
    $region6: #{gru_model_forward.1} parent=1 // pred_check
      _
    $region7: #{gru_model_forward.1} parent=1 // pred_check_branch
      %32 = sbr.rel (0) target = $region9
    $region8: #{gru_model_forward.1} parent=1 // pred_region
      _
    $region9: #{gru_model_forward.1} parent=1 // pred_fallthru
      _
    // Predicated region
    $region10: #{gru_model_forward.1} parent=1 // pred_check
      _
    $region11: #{gru_model_forward.1} parent=1 // pred_check_branch
      %34 = sbr.rel (0) target = $region13
    $region12: #{gru_model_forward.1} parent=1 // pred_region
      _
    $region13: #{gru_model_forward.1} parent=1 // pred_fallthru
      _
    // Predicated region
    $region14: #{gru_model_forward.1} parent=1 // pred_check
      _
    $region15: #{gru_model_forward.1} parent=1 // pred_check_branch
      %36 = sbr.rel (0) target = $region17
    $region16: #{gru_model_forward.1} parent=1 // pred_region
      %s38 = ssub.s32 768, 768
      %39 = vsyncadd [#allocation3], %s38
      %s40 = sshll.u32 [#allocation2], 4
      %s41 = int_to_ptr.vmem [resolvable:$true] %s40
      %46 = dma.hbm_to_vmem [thread:$0]  %s3, 768, %s41, [#allocation3], 384, 384, 24
    $region17: #{gru_model_forward.1} parent=1 // pred_fallthru
      _
    // Predicated region
    $region18: #{gru_model_forward.1} parent=1 // pred_check
      _
    $region19: #{gru_model_forward.1} parent=1 // pred_check_branch
      %48 = sbr.rel (0) target = $region21
    $region20: #{gru_model_forward.1} parent=1 // pred_region
      _
    $region21: #{gru_model_forward.1} parent=1 // pred_fallthru
      _
    // Predicated region
    $region22: #{gru_model_forward.1} parent=1 // pred_check
      _
    $region23: #{gru_model_forward.1} parent=1 // pred_check_branch
      %50 = sbr.rel (0) target = $region25
    $region24: #{gru_model_forward.1} parent=1 // pred_region
      %s52 = ssub.s32 48, 48
      %53 = vsyncadd [#allocation5], %s52
      %s55 = sshll.u32 [#allocation4], 4
      %s56 = int_to_ptr.vmem [resolvable:$true] %s55
      %58 = dma.hbm_to_vmem [thread:$0]  %s5, 48, %s56, [#allocation5]
    $region25: #{gru_model_forward.1} parent=1 // pred_fallthru
      _
    // Predicated region
    $region26: #{gru_model_forward.1} parent=1 // pred_check
      _
    $region27: #{gru_model_forward.1} parent=1 // pred_check_branch
      %60 = sbr.rel (0) target = $region29
    $region28: #{gru_model_forward.1} parent=1 // pred_region
      %s62 = ssub.s32 6144, 6144
      %63 = vsyncadd [#allocation5], %s62
      %s64 = sshll.u32 [#allocation6], 4
      %s65 = int_to_ptr.vmem [resolvable:$true] %s64
      %70 = dma.hbm_to_vmem [thread:$0]  %s6, 6144, %s65, [#allocation5], 384, 384, 24
    $region29: #{gru_model_forward.1} parent=1 // pred_fallthru
      _
    // Predicated region
    $region30: #{gru_model_forward.1} parent=1 // pred_check
      _
    $region31: #{gru_model_forward.1} parent=1 // pred_check_branch
      %72 = sbr.rel (0) target = $region33
    $region32: #{gru_model_forward.1} parent=1 // pred_region
      %s74 = ssub.s32 48, 48
      %75 = vsyncadd [#allocation8], %s74
      %s77 = sshll.u32 [#allocation7], 4
      %s78 = int_to_ptr.vmem [resolvable:$true] %s77
      %80 = dma.hbm_to_vmem [thread:$0]  %s7, 48, %s78, [#allocation8]
    $region33: #{gru_model_forward.1} parent=1 // pred_fallthru
      _
    // Predicated region
    $region34: #{gru_model_forward.1} parent=1 // pred_check
      _
    $region35: #{gru_model_forward.1} parent=1 // pred_check_branch
      %82 = sbr.rel (0) target = $region37
    $region36: #{gru_model_forward.1} parent=1 // pred_region
      _
    $region37: #{gru_model_forward.1} parent=1 // pred_fallthru
      _
    // Predicated region
    $region38: #{gru_model_forward.1} parent=1 // pred_check
      _
    $region39: #{gru_model_forward.1} parent=1 // pred_check_branch
      %84 = sbr.rel (0) target = $region41
    $region40: #{gru_model_forward.1} parent=1 // pred_region
      %s86 = ssub.s32 16, 16
      %87 = vsyncadd [#allocation8], %s86
      %s89 = sshll.u32 [#allocation9], 4
      %s90 = int_to_ptr.vmem [resolvable:$true] %s89
      %92 = dma.hbm_to_vmem [thread:$0]  %s9, 16, %s90, [#allocation8]
    $region41: #{gru_model_forward.1} parent=1 // pred_fallthru
      _
    // Predicated region
    $region42: #{gru_model_forward.1} parent=1 // pred_check
      _
    $region43: #{gru_model_forward.1} parent=1 // pred_check_branch
      %94 = sbr.rel (0) target = $region45
    $region44: #{gru_model_forward.1} parent=1 // pred_region
      %s96 = ssub.s32 16, 16
      %97 = vsyncadd [#allocation11], %s96
      %s99 = sshll.u32 [#allocation10], 4
      %s100 = int_to_ptr.vmem [resolvable:$true] %s99
      %102 = dma.hbm_to_vmem [thread:$0]  %s10, 16, %s100, [#allocation11]
    $region45: #{gru_model_forward.1} parent=1 // pred_fallthru
      _
    // Predicated region
    $region46: #{gru_model_forward.1} parent=1 // pred_check
      _
    $region47: #{gru_model_forward.1} parent=1 // pred_check_branch
      %104 = sbr.rel (0) target = $region49
    $region48: #{gru_model_forward.1} parent=1 // pred_region
      %s106 = ssub.s32 16, 16
      %107 = vsyncadd [#allocation11], %s106
      %s109 = sshll.u32 [#allocation12], 4
      %s110 = int_to_ptr.vmem [resolvable:$true] %s109
      %112 = dma.hbm_to_vmem [thread:$0]  %s11, 16, %s110, [#allocation11]
    $region49: #{gru_model_forward.1} parent=1 // pred_fallthru
      _
    // Predicated region
    $region50: #{gru_model_forward.1} parent=1 // pred_check
      _
    $region51: #{gru_model_forward.1} parent=1 // pred_check_branch
      %114 = sbr.rel (0) target = $region53
    $region52: #{gru_model_forward.1} parent=1 // pred_region
      %s116 = ssub.s32 4096, 4096
      %117 = vsyncadd [#allocation14], %s116
      %s118 = sshll.u32 [#allocation13], 4
      %s119 = int_to_ptr.vmem [resolvable:$true] %s118
      %124 = dma.hbm_to_vmem [thread:$0]  %s12, 4096, %s119, [#allocation14], 256, 256, 16
    $region53: #{gru_model_forward.1} parent=1 // pred_fallthru
      _
    // Predicated region
    $region54: #{gru_model_forward.1} parent=1 // pred_check
      _
    $region55: #{gru_model_forward.1} parent=1 // pred_check_branch
      %126 = sbr.rel (0) target = $region57
    $region56: #{gru_model_forward.1} parent=1 // pred_region
      _
    $region57: #{gru_model_forward.1} parent=1 // pred_fallthru
      _
    // Predicated region
    $region58: #{gru_model_forward.1} parent=1 // pred_check
      _
    $region59: #{gru_model_forward.1} parent=1 // pred_check_branch
      %128 = sbr.rel (0) target = $region61
    $region60: #{gru_model_forward.1} parent=1 // pred_region
      %s130 = ssub.s32 32, 32
      %131 = vsyncadd [#allocation14], %s130
      %s133 = sshll.u32 [#allocation15], 4
      %s134 = int_to_ptr.vmem [resolvable:$true] %s133
      %136 = dma.hbm_to_vmem [thread:$0]  %s14, 32, %s134, [#allocation14]
    $region61: #{gru_model_forward.1} parent=1 // pred_fallthru
      _
    // Predicated region
    $region62: #{gru_model_forward.1} parent=1 // pred_check
      _
    $region63: #{gru_model_forward.1} parent=1 // pred_check_branch
      %138 = sbr.rel (0) target = $region65
    $region64: #{gru_model_forward.1} parent=1 // pred_region
      %s140 = ssub.s32 32, 32
      %141 = vsyncadd [#allocation17], %s140
      %s143 = sshll.u32 [#allocation16], 4
      %s144 = int_to_ptr.vmem [resolvable:$true] %s143
      %146 = dma.hbm_to_vmem [thread:$0]  %s15, 32, %s144, [#allocation17]
    $region65: #{gru_model_forward.1} parent=1 // pred_fallthru
      _
    // Predicated region
    $region66: #{gru_model_forward.1} parent=1 // pred_check
      _
    $region67: #{gru_model_forward.1} parent=1 // pred_check_branch
      %148 = sbr.rel (0) target = $region69
    $region68: #{gru_model_forward.1} parent=1 // pred_region
      %s150 = ssub.s32 4096, 4096
      %151 = vsyncadd [#allocation17], %s150
      %s152 = sshll.u32 [#allocation18], 4
      %s153 = int_to_ptr.vmem [resolvable:$true] %s152
      %158 = dma.hbm_to_vmem [thread:$0]  %s16, 4096, %s153, [#allocation17], 128, 128, 8
    $region69: #{gru_model_forward.1} parent=1 // pred_fallthru
      _
    // Predicated region
    $region70: #{gru_model_forward.1} parent=1 // pred_check
      _
    $region71: #{gru_model_forward.1} parent=1 // pred_check_branch
      %160 = sbr.rel (0) target = $region73
    $region72: #{gru_model_forward.1} parent=1 // pred_region
      _
    $region73: #{gru_model_forward.1} parent=1 // pred_fallthru
      _
    // Predicated region
    $region74: #{gru_model_forward.1} parent=1 // pred_check
      _
    $region75: #{gru_model_forward.1} parent=1 // pred_check_branch
      %162 = sbr.rel (0) target = $region77
    $region76: #{gru_model_forward.1} parent=1 // pred_region
      %163 = dma.done [#allocation3], 768
    $region77: #{gru_model_forward.1} parent=1 // pred_fallthru
      _
    // Predicated region
    $region78: #{gru_model_forward.1} parent=1 // pred_check
      _
    $region79: #{gru_model_forward.1} parent=1 // pred_check_branch
      %165 = sbr.rel (0) target = $region81
    $region80: #{gru_model_forward.1} parent=1 // pred_region
      %166 = dma.done [#allocation5], 48
    $region81: #{gru_model_forward.1} parent=1 // pred_fallthru
      _
    // Predicated region
    $region82: #{gru_model_forward.1} parent=1 // pred_check
      _
    $region83: #{gru_model_forward.1} parent=1 // pred_check_branch
      %168 = sbr.rel (0) target = $region85
    $region84: #{gru_model_forward.1} parent=1 // pred_region
      %169 = dma.done [#allocation5], 6144
    $region85: #{gru_model_forward.1} parent=1 // pred_fallthru
      _
    // Predicated region
    $region86: #{gru_model_forward.1} parent=1 // pred_check
      _
    $region87: #{gru_model_forward.1} parent=1 // pred_check_branch
      %171 = sbr.rel (0) target = $region89
    $region88: #{gru_model_forward.1} parent=1 // pred_region
      %172 = dma.done [#allocation8], 48
    $region89: #{gru_model_forward.1} parent=1 // pred_fallthru
      _
    // Predicated region
    $region90: #{gru_model_forward.1} parent=1 // pred_check
      _
    $region91: #{gru_model_forward.1} parent=1 // pred_check_branch
      %174 = sbr.rel (0) target = $region93
    $region92: #{gru_model_forward.1} parent=1 // pred_region
      %175 = dma.done [#allocation8], 16
    $region93: #{gru_model_forward.1} parent=1 // pred_fallthru
      _
    // Predicated region
    $region94: #{gru_model_forward.1} parent=1 // pred_check
      _
    $region95: #{gru_model_forward.1} parent=1 // pred_check_branch
      %177 = sbr.rel (0) target = $region97
    $region96: #{gru_model_forward.1} parent=1 // pred_region
      %178 = dma.done [#allocation11], 16
    $region97: #{gru_model_forward.1} parent=1 // pred_fallthru
      _
    // Predicated region
    $region98: #{gru_model_forward.1} parent=1 // pred_check
      _
    $region99: #{gru_model_forward.1} parent=1 // pred_check_branch
      %180 = sbr.rel (0) target = $region101
    $region100: #{gru_model_forward.1} parent=1 // pred_region
      %181 = dma.done [#allocation11], 16
    $region101: #{gru_model_forward.1} parent=1 // pred_fallthru
      _
    // Predicated region
    $region102: #{gru_model_forward.1} parent=1 // pred_check
      _
    $region103: #{gru_model_forward.1} parent=1 // pred_check_branch
      %183 = sbr.rel (0) target = $region105
    $region104: #{gru_model_forward.1} parent=1 // pred_region
      %184 = dma.done [#allocation14], 4096
    $region105: #{gru_model_forward.1} parent=1 // pred_fallthru
      _
    // Predicated region
    $region106: #{gru_model_forward.1} parent=1 // pred_check
      _
    $region107: #{gru_model_forward.1} parent=1 // pred_check_branch
      %186 = sbr.rel (0) target = $region109
    $region108: #{gru_model_forward.1} parent=1 // pred_region
      %187 = dma.done [#allocation14], 32
    $region109: #{gru_model_forward.1} parent=1 // pred_fallthru
      _
    // Predicated region
    $region110: #{gru_model_forward.1} parent=1 // pred_check
      _
    $region111: #{gru_model_forward.1} parent=1 // pred_check_branch
      %189 = sbr.rel (0) target = $region113
    $region112: #{gru_model_forward.1} parent=1 // pred_region
      %190 = dma.done [#allocation17], 32
    $region113: #{gru_model_forward.1} parent=1 // pred_fallthru
      _
    // Predicated region
    $region114: #{gru_model_forward.1} parent=1 // pred_check
      _
    $region115: #{gru_model_forward.1} parent=1 // pred_check_branch
      %192 = sbr.rel (0) target = $region117
    $region116: #{gru_model_forward.1} parent=1 // pred_region
      %193 = dma.done [#allocation17], 4096
    $region117: #{gru_model_forward.1} parent=1 // pred_fallthru
      _
    %v194 = vld [vmem:[%s0] sm:$0xff]
    %v195 = vld [vmem:[%s0 + $0x8] sm:$0xff]
    %v196 = vld [vmem:[%s0 + $0x10] sm:$0xff]
    %v197 = vld [vmem:[%s0 + $0x18] sm:$0xff]
    %v198 = vld [vmem:[%s0 + $0x20] sm:$0xff]
    %v199 = vld [vmem:[%s0 + $0x28] sm:$0xff]
    %v200 = vld [vmem:[%s0 + $0x30] sm:$0xff]
    %v201 = vld [vmem:[%s0 + $0x38] sm:$0xff]
    %v202 = vld [vmem:[%s1] sm:$0xf]
    %v203 = vld [vmem:[%s2] sm:$0x1]
    %v205 = vlaneseq
    %v206 = vshrl.u32 %v205, 7
    %v207 = vsub.s32 0, %v206
    %v208 = vrot.slane %v203, %v207
    %vm210 = vcmask 31744
    %v212 = vsel %vm210, %v194, 0
    %v215 = vsel %vm210, %v195, 0
    %v218 = vsel %vm210, %v196, 0
    %v221 = vsel %vm210, %v197, 0
    %v224 = vsel %vm210, %v198, 0
    %v227 = vsel %vm210, %v199, 0
    %v230 = vsel %vm210, %v200, 0
    %v233 = vsel %vm210, %v201, 0
    %vm235 = vcmask 1043456
    %v237 = vsel %vm235, %v202, 0
    %239 = vmatprep.subr.mxu0 0.0
    %240 = vmatpush1.msra.mxu0 %v237
    %241 = vmatprep.subr.mxu0 0.0
    %242 = vmatpush1.msra.mxu0 0.0
    %243 = vmatprep.subr.mxu0 0.0
    %244 = vmatpush1.msra.mxu0 0.0
    %245 = vmatprep.subr.mxu0 0.0
    %246 = vmatpush1.msra.mxu0 0.0
    %247 = vmatprep.subr.mxu0 0.0
    %248 = vmatpush1.msra.mxu0 0.0
    %249 = vmatprep.subr.mxu0 0.0
    %250 = vmatpush1.msra.mxu0 0.0
    %251 = vmatprep.subr.mxu0 0.0
    %252 = vmatpush1.msra.mxu0 0.0
    %253 = vmatprep.subr.mxu0 0.0
    %254 = vmatpush1.msra.mxu0 0.0
    %255 = vmatprep.subr.mxu0 0.0
    %256 = vmatpush1.msra.mxu0 0.0
    %257 = vmatprep.subr.mxu0 0.0
    %258 = vmatpush1.msra.mxu0 0.0
    %259 = vmatprep.subr.mxu0 0.0
    %260 = vmatpush1.msra.mxu0 0.0
    %261 = vmatprep.subr.mxu0 0.0
    %262 = vmatpush1.msra.mxu0 0.0
    %263 = vmatprep.subr.mxu0 0.0
    %264 = vmatpush1.msra.mxu0 0.0
    %265 = vmatprep.subr.mxu0 0.0
    %266 = vmatpush1.msra.mxu0 0.0
    %267 = vmatprep.subr.mxu0 0.0
    %268 = vmatpush1.msra.mxu0 0.0
    %269 = vmatprep.subr.mxu0 0.0
    %270 = vmatpush1.msra.mxu0 0.0
    %271 = vmatprep.subr.mxu0 0.0
    %272 = vmatpush1.msra.mxu0 0.0
    %273 = vmatprep.subr.mxu0 0.0
    %274 = vmatpush1.msra.mxu0 0.0
    %275 = vmatprep.subr.mxu0 0.0
    %276 = vmatpush1.msra.mxu0 0.0
    %277 = vmatprep.subr.mxu0 0.0
    %278 = vmatpush1.msra.mxu0 0.0
    %279 = vmatprep.subr.mxu0 0.0
    %280 = vmatpush1.msra.mxu0 0.0
    %281 = vmatprep.subr.mxu0 0.0
    %282 = vmatpush1.msra.mxu0 0.0
    %283 = vmatprep.subr.mxu0 0.0
    %284 = vmatpush1.msra.mxu0 0.0
    %285 = vmatprep.subr.mxu0 0.0
    %286 = vmatpush1.msra.mxu0 0.0
    %287 = vmatprep.subr.mxu0 0.0
    %288 = vmatpush1.msra.mxu0 0.0
    %289 = vmatprep.subr.mxu0 0.0
    %290 = vmatpush1.msra.mxu0 0.0
    %291 = vmatprep.subr.mxu0 0.0
    %292 = vmatpush1.msra.mxu0 0.0
    %293 = vmatprep.subr.mxu0 0.0
    %294 = vmatpush1.msra.mxu0 0.0
    %295 = vmatprep.subr.mxu0 0.0
    %296 = vmatpush1.msra.mxu0 0.0
    %297 = vmatprep.subr.mxu0 0.0
    %298 = vmatpush1.msra.mxu0 0.0
    %299 = vmatprep.subr.mxu0 0.0
    %300 = vmatpush1.msra.mxu0 0.0
    %301 = vmatprep.subr.mxu0 0.0
    %302 = vmatpush1.msra.mxu0 0.0
    %303 = vmatprep.mubr.f32.mxu0 0.0
    %304 = vmatmul.mubr.f32.gmra.mrb[0].mxu0 %v212
    %v305 = vpop.f32.mrb[0].mxu0
    %v306 = vadd.f32 %v208, %v305
    %v307 = vpop.f32.mrb[0].mxu0
    %308 = vmatprep.mubr.f32.mxu0 0.0
    %309 = vmatmul.mubr.f32.gmra.mrb[0].mxu0 %v215
    %v310 = vpop.f32.mrb[0].mxu0
    %v311 = vadd.f32 %v208, %v310
    %v312 = vpop.f32.mrb[0].mxu0
    %313 = vmatprep.mubr.f32.mxu0 0.0
    %314 = vmatmul.mubr.f32.gmra.mrb[0].mxu0 %v218
    %v315 = vpop.f32.mrb[0].mxu0
    %v316 = vadd.f32 %v208, %v315
    %v317 = vpop.f32.mrb[0].mxu0
    %318 = vmatprep.mubr.f32.mxu0 0.0
    %319 = vmatmul.mubr.f32.gmra.mrb[0].mxu0 %v221
    %v320 = vpop.f32.mrb[0].mxu0
    %v321 = vadd.f32 %v208, %v320
    %v322 = vpop.f32.mrb[0].mxu0
    %323 = vmatprep.mubr.f32.mxu0 0.0
    %324 = vmatmul.mubr.f32.gmra.mrb[0].mxu0 %v224
    %v325 = vpop.f32.mrb[0].mxu0
    %v326 = vadd.f32 %v208, %v325
    %v327 = vpop.f32.mrb[0].mxu0
    %328 = vmatprep.mubr.f32.mxu0 0.0
    %329 = vmatmul.mubr.f32.gmra.mrb[0].mxu0 %v227
    %v330 = vpop.f32.mrb[0].mxu0
    %v331 = vadd.f32 %v208, %v330
    %v332 = vpop.f32.mrb[0].mxu0
    %333 = vmatprep.mubr.f32.mxu0 0.0
    %334 = vmatmul.mubr.f32.gmra.mrb[0].mxu0 %v230
    %v335 = vpop.f32.mrb[0].mxu0
    %v336 = vadd.f32 %v208, %v335
    %v337 = vpop.f32.mrb[0].mxu0
    %338 = vmatprep.mubr.f32.mxu0 0.0
    %339 = vmatmul.mubr.f32.gmra.mrb[0].mxu0 %v233
    %v340 = vpop.f32.mrb[0].mxu0
    %v341 = vadd.f32 %v208, %v340
    %v342 = vpop.f32.mrb[0].mxu0
    %343 = vdwg.mxu0
    %v344 = vand.u32 2147483647, %v306
    %vm345 = vcmp.le.f32.partialorder %v344, 0.7853982
    %vm346 = vcmp.lt.s32.totalorder %v306, 0
    %v347 = vand.u32 %v306, 2139095040
    %v348 = vshrl.u32 %v347, 23
    %v349 = vsub.s32 %v348, 127
    %v350 = vand.u32 2147483647, %v306
    %v351 = vand.u32 %v350, 8388607
    %v352 = vor.u32 %v351, 8388608
    %v353 = vsub.s32 0, %v352
    %v354 = vadd.s32 %v349, 1
    %vm355 = vcmp.gt.s32.totalorder %v354, 0
    %v356 = vsel %vm355, %v354, 0
    %v357 = vshrl.u32 %v356, 5
    %v358 = vand.u32 %v356, 31
    %v359 = vsub.s32 32, %v358
    %v360 = vshrl.u32 683565275, %v359
    %v361 = vshll.u32 683565275, %v358
    %v362 = vshrl.u32 2475754826, %v359
    %v363 = vor.u32 %v361, %v362
    %v364 = vshll.u32 2475754826, %v358
    %v365 = vshrl.u32 2131351028, %v359
    %v366 = vor.u32 %v364, %v365
    %v367 = vshll.u32 2131351028, %v358
    %v368 = vshrl.u32 2102212464, %v359
    %v369 = vor.u32 %v367, %v368
    %v370 = vshll.u32 2102212464, %v358
    %v371 = vshrl.u32 920167782, %v359
    %v372 = vor.u32 %v370, %v371
    %v373 = vshll.u32 920167782, %v358
    %v374 = vshrl.u32 1326507024, %v359
    %v375 = vor.u32 %v373, %v374
    %vm376 = vcmp.lt.s32.totalorder %v357, 1
    %vm377 = vcmp.lt.s32.totalorder %v357, 2
    %vm378 = vcmp.lt.s32.totalorder %v357, 3
    %vm379 = vcmp.lt.s32.totalorder %v357, 4
    %v380 = vsel %vm376, %v360, %v363
    %v381 = vsel %vm379, %v369, 2102212464
    %v382 = vsel %vm378, %v366, %v381
    %v383 = vsel %vm377, %v380, %v382
    %v384 = vsel %vm376, %v363, %v366
    %v385 = vsel %vm379, %v372, 920167782
    %v386 = vsel %vm378, %v369, %v385
    %v387 = vsel %vm377, %v384, %v386
    %v388 = vsel %vm376, %v366, %v369
    %v389 = vsel %vm379, %v375, 1326507024
    %v390 = vsel %vm378, %v372, %v389
    %v391 = vsel %vm377, %v388, %v390
    %v392 = vshll.u32 %v352, 8
    %v393 = vmul.u32.u64.compose %v392, %v391
    %v394 = vextract.low.u32 %v393
    %v395 = vextract.high.u32 %v393
    %v396 = vmul.u32.u64.compose %v392, %v387
    %v397 = vextract.low.u32 %v396
    %v398 = vextract.high.u32 %v396
    %v399 = vmul.u32 %v392, %v383
    %v400 = vadd.s32 %v395, %v397
    %vm401 = vc.u32 %v395, %v397
    %v402 = vadd.s32 %v398, 1
    %v403 = vsel %vm401, %v402, %v398
    %v404 = vadd.s32 %v399, %v403
    %v405 = vadd.s32 %v404, 536870912
    %v406 = vshrl.u32 %v405, 30
    %v407 = vshll.u32 %v406, 30
    %v408 = vsub.s32 %v404, %v407
    %vm409 = vcmp.lt.s32.totalorder %v408, 0
    %v410 = vsub.s32 0, %v408
    %v411 = vsel %vm409, %v410, %v408
    %v412 = vclz %v411
    %v413 = vsub.s32 %v412, 2
    %vm414 = vcmp.gt.s32.totalorder 0, %v413
    %v415 = vsel %vm414, 0, %v413
    %v416 = vsub.s32 32, %v415
    %v417 = vshll.u32 %v408, %v415
    %v418 = vshrl.u32 %v400, %v416
    %v419 = vor.u32 %v417, %v418
    %v420 = vsub.s32 4294967266, %v415
    %v421 = vadd.s32 %v420, 127
    %v422 = vshll.u32 %v421, 23
    %v423 = vor.u32 4788187, %v422
    %v424 = vand.u32 2147483647, %v423
    %v426 = vcvt.s32.f32 %v419
    %v427 = vmul.f32 %v426, %v424
    %v428 = vxor.u32 %v427, 2147483648
    %v429 = vsel %vm346, %v428, %v427
    %v430 = vsub.s32 4, %v406
    %v431 = vsel %vm346, %v430, %v406
    %v432 = vsel %vm345, %v306, %v429
    %v433 = vsel %vm345, 0, %v431
    %v434 = vcosq.f32.pop %v432
    %v435 = vsinq.f32.pop %v432
    %vm436 = vweird.f32 %v306
    %v437 = vadd.s32 %v433, 3
    %v438 = vand.u32 %v437, 3
    %vm439 = vcmp.lt.s32.totalorder %v438, 2
    %vm440 = vcmp.eq.s32.totalorder %v438, 0
    %v441 = vxor.u32 %v435, 2147483648
    %v442 = vsel %vm440, %v434, %v441
    %vm443 = vcmp.eq.s32.totalorder %v438, 2
    %v444 = vxor.u32 %v434, 2147483648
    %v445 = vsel %vm443, %v444, %v435
    %v446 = vsel %vm439, %v442, %v445
    %v447 = vsel %vm436, nan, %v446
    %v448 = vand.u32 2147483647, %v311
    %vm449 = vcmp.le.f32.partialorder %v448, 0.7853982
    %vm450 = vcmp.lt.s32.totalorder %v311, 0
    %v451 = vand.u32 %v311, 2139095040
    %v452 = vshrl.u32 %v451, 23
    %v453 = vsub.s32 %v452, 127
    %v454 = vand.u32 2147483647, %v311
    %v455 = vand.u32 %v454, 8388607
    %v456 = vor.u32 %v455, 8388608
    %v457 = vsub.s32 0, %v456
    %v458 = vadd.s32 %v453, 1
    %vm459 = vcmp.gt.s32.totalorder %v458, 0
    %v460 = vsel %vm459, %v458, 0
    %v461 = vshrl.u32 %v460, 5
    %v462 = vand.u32 %v460, 31
    %v463 = vsub.s32 32, %v462
    %v464 = vshrl.u32 683565275, %v463
    %v465 = vshll.u32 683565275, %v462
    %v466 = vshrl.u32 2475754826, %v463
    %v467 = vor.u32 %v465, %v466
    %v468 = vshll.u32 2475754826, %v462
    %v469 = vshrl.u32 2131351028, %v463
    %v470 = vor.u32 %v468, %v469
    %v471 = vshll.u32 2131351028, %v462
    %v472 = vshrl.u32 2102212464, %v463
    %v473 = vor.u32 %v471, %v472
    %v474 = vshll.u32 2102212464, %v462
    %v475 = vshrl.u32 920167782, %v463
    %v476 = vor.u32 %v474, %v475
    %v477 = vshll.u32 920167782, %v462
    %v478 = vshrl.u32 1326507024, %v463
    %v479 = vor.u32 %v477, %v478
    %vm480 = vcmp.lt.s32.totalorder %v461, 1
    %vm481 = vcmp.lt.s32.totalorder %v461, 2
    %vm482 = vcmp.lt.s32.totalorder %v461, 3
    %vm483 = vcmp.lt.s32.totalorder %v461, 4
    %v484 = vsel %vm480, %v464, %v467
    %v485 = vsel %vm483, %v473, 2102212464
    %v486 = vsel %vm482, %v470, %v485
    %v487 = vsel %vm481, %v484, %v486
    %v488 = vsel %vm480, %v467, %v470
    %v489 = vsel %vm483, %v476, 920167782
    %v490 = vsel %vm482, %v473, %v489
    %v491 = vsel %vm481, %v488, %v490
    %v492 = vsel %vm480, %v470, %v473
    %v493 = vsel %vm483, %v479, 1326507024
    %v494 = vsel %vm482, %v476, %v493
    %v495 = vsel %vm481, %v492, %v494
    %v496 = vshll.u32 %v456, 8
    %v497 = vmul.u32.u64.compose %v496, %v495
    %v498 = vextract.low.u32 %v497
    %v499 = vextract.high.u32 %v497
    %v500 = vmul.u32.u64.compose %v496, %v491
    %v501 = vextract.low.u32 %v500
    %v502 = vextract.high.u32 %v500
    %v503 = vmul.u32 %v496, %v487
    %v504 = vadd.s32 %v499, %v501
    %vm505 = vc.u32 %v499, %v501
    %v506 = vadd.s32 %v502, 1
    %v507 = vsel %vm505, %v506, %v502
    %v508 = vadd.s32 %v503, %v507
    %v509 = vadd.s32 %v508, 536870912
    %v510 = vshrl.u32 %v509, 30
    %v511 = vshll.u32 %v510, 30
    %v512 = vsub.s32 %v508, %v511
    %vm513 = vcmp.lt.s32.totalorder %v512, 0
    %v514 = vsub.s32 0, %v512
    %v515 = vsel %vm513, %v514, %v512
    %v516 = vclz %v515
    %v517 = vsub.s32 %v516, 2
    %vm518 = vcmp.gt.s32.totalorder 0, %v517
    %v519 = vsel %vm518, 0, %v517
    %v520 = vsub.s32 32, %v519
    %v521 = vshll.u32 %v512, %v519
    %v522 = vshrl.u32 %v504, %v520
    %v523 = vor.u32 %v521, %v522
    %v524 = vsub.s32 4294967266, %v519
    %v525 = vadd.s32 %v524, 127
    %v526 = vshll.u32 %v525, 23
    %v527 = vor.u32 4788187, %v526
    %v528 = vand.u32 2147483647, %v527
    %v530 = vcvt.s32.f32 %v523
    %v531 = vmul.f32 %v530, %v528
    %v532 = vxor.u32 %v531, 2147483648
    %v533 = vsel %vm450, %v532, %v531
    %v534 = vsub.s32 4, %v510
    %v535 = vsel %vm450, %v534, %v510
    %v536 = vsel %vm449, %v311, %v533
    %v537 = vsel %vm449, 0, %v535
    %v538 = vcosq.f32.pop %v536
    %v539 = vsinq.f32.pop %v536
    %vm540 = vweird.f32 %v311
    %v541 = vadd.s32 %v537, 3
    %v542 = vand.u32 %v541, 3
    %vm543 = vcmp.lt.s32.totalorder %v542, 2
    %vm544 = vcmp.eq.s32.totalorder %v542, 0
    %v545 = vxor.u32 %v539, 2147483648
    %v546 = vsel %vm544, %v538, %v545
    %vm547 = vcmp.eq.s32.totalorder %v542, 2
    %v548 = vxor.u32 %v538, 2147483648
    %v549 = vsel %vm547, %v548, %v539
    %v550 = vsel %vm543, %v546, %v549
    %v551 = vsel %vm540, nan, %v550
    %v552 = vand.u32 2147483647, %v316
    %vm553 = vcmp.le.f32.partialorder %v552, 0.7853982
    %vm554 = vcmp.lt.s32.totalorder %v316, 0
    %v555 = vand.u32 %v316, 2139095040
    %v556 = vshrl.u32 %v555, 23
    %v557 = vsub.s32 %v556, 127
    %v558 = vand.u32 2147483647, %v316
    %v559 = vand.u32 %v558, 8388607
    %v560 = vor.u32 %v559, 8388608
    %v561 = vsub.s32 0, %v560
    %v562 = vadd.s32 %v557, 1
    %vm563 = vcmp.gt.s32.totalorder %v562, 0
    %v564 = vsel %vm563, %v562, 0
    %v565 = vshrl.u32 %v564, 5
    %v566 = vand.u32 %v564, 31
    %v567 = vsub.s32 32, %v566
    %v568 = vshrl.u32 683565275, %v567
    %v569 = vshll.u32 683565275, %v566
    %v570 = vshrl.u32 2475754826, %v567
    %v571 = vor.u32 %v569, %v570
    %v572 = vshll.u32 2475754826, %v566
    %v573 = vshrl.u32 2131351028, %v567
    %v574 = vor.u32 %v572, %v573
    %v575 = vshll.u32 2131351028, %v566
    %v576 = vshrl.u32 2102212464, %v567
    %v577 = vor.u32 %v575, %v576
    %v578 = vshll.u32 2102212464, %v566
    %v579 = vshrl.u32 920167782, %v567
    %v580 = vor.u32 %v578, %v579
    %v581 = vshll.u32 920167782, %v566
    %v582 = vshrl.u32 1326507024, %v567
    %v583 = vor.u32 %v581, %v582
    %vm584 = vcmp.lt.s32.totalorder %v565, 1
    %vm585 = vcmp.lt.s32.totalorder %v565, 2
    %vm586 = vcmp.lt.s32.totalorder %v565, 3
    %vm587 = vcmp.lt.s32.totalorder %v565, 4
    %v588 = vsel %vm584, %v568, %v571
    %v589 = vsel %vm587, %v577, 2102212464
    %v590 = vsel %vm586, %v574, %v589
    %v591 = vsel %vm585, %v588, %v590
    %v592 = vsel %vm584, %v571, %v574
    %v593 = vsel %vm587, %v580, 920167782
    %v594 = vsel %vm586, %v577, %v593
    %v595 = vsel %vm585, %v592, %v594
    %v596 = vsel %vm584, %v574, %v577
    %v597 = vsel %vm587, %v583, 1326507024
    %v598 = vsel %vm586, %v580, %v597
    %v599 = vsel %vm585, %v596, %v598
    %v600 = vshll.u32 %v560, 8
    %v601 = vmul.u32.u64.compose %v600, %v599
    %v602 = vextract.low.u32 %v601
    %v603 = vextract.high.u32 %v601
    %v604 = vmul.u32.u64.compose %v600, %v595
    %v605 = vextract.low.u32 %v604
    %v606 = vextract.high.u32 %v604
    %v607 = vmul.u32 %v600, %v591
    %v608 = vadd.s32 %v603, %v605
    %vm609 = vc.u32 %v603, %v605
    %v610 = vadd.s32 %v606, 1
    %v611 = vsel %vm609, %v610, %v606
    %v612 = vadd.s32 %v607, %v611
    %v613 = vadd.s32 %v612, 536870912
    %v614 = vshrl.u32 %v613, 30
    %v615 = vshll.u32 %v614, 30
    %v616 = vsub.s32 %v612, %v615
    %vm617 = vcmp.lt.s32.totalorder %v616, 0
    %v618 = vsub.s32 0, %v616
    %v619 = vsel %vm617, %v618, %v616
    %v620 = vclz %v619
    %v621 = vsub.s32 %v620, 2
    %vm622 = vcmp.gt.s32.totalorder 0, %v621
    %v623 = vsel %vm622, 0, %v621
    %v624 = vsub.s32 32, %v623
    %v625 = vshll.u32 %v616, %v623
    %v626 = vshrl.u32 %v608, %v624
    %v627 = vor.u32 %v625, %v626
    %v628 = vsub.s32 4294967266, %v623
    %v629 = vadd.s32 %v628, 127
    %v630 = vshll.u32 %v629, 23
    %v631 = vor.u32 4788187, %v630
    %v632 = vand.u32 2147483647, %v631
    %v634 = vcvt.s32.f32 %v627
    %v635 = vmul.f32 %v634, %v632
    %v636 = vxor.u32 %v635, 2147483648
    %v637 = vsel %vm554, %v636, %v635
    %v638 = vsub.s32 4, %v614
    %v639 = vsel %vm554, %v638, %v614
    %v640 = vsel %vm553, %v316, %v637
    %v641 = vsel %vm553, 0, %v639
    %v642 = vcosq.f32.pop %v640
    %v643 = vsinq.f32.pop %v640
    %vm644 = vweird.f32 %v316
    %v645 = vadd.s32 %v641, 3
    %v646 = vand.u32 %v645, 3
    %vm647 = vcmp.lt.s32.totalorder %v646, 2
    %vm648 = vcmp.eq.s32.totalorder %v646, 0
    %v649 = vxor.u32 %v643, 2147483648
    %v650 = vsel %vm648, %v642, %v649
    %vm651 = vcmp.eq.s32.totalorder %v646, 2
    %v652 = vxor.u32 %v642, 2147483648
    %v653 = vsel %vm651, %v652, %v643
    %v654 = vsel %vm647, %v650, %v653
    %v655 = vsel %vm644, nan, %v654
    %v656 = vand.u32 2147483647, %v321
    %vm657 = vcmp.le.f32.partialorder %v656, 0.7853982
    %vm658 = vcmp.lt.s32.totalorder %v321, 0
    %v659 = vand.u32 %v321, 2139095040
    %v660 = vshrl.u32 %v659, 23
    %v661 = vsub.s32 %v660, 127
    %v662 = vand.u32 2147483647, %v321
    %v663 = vand.u32 %v662, 8388607
    %v664 = vor.u32 %v663, 8388608
    %v665 = vsub.s32 0, %v664
    %v666 = vadd.s32 %v661, 1
    %vm667 = vcmp.gt.s32.totalorder %v666, 0
    %v668 = vsel %vm667, %v666, 0
    %v669 = vshrl.u32 %v668, 5
    %v670 = vand.u32 %v668, 31
    %v671 = vsub.s32 32, %v670
    %v672 = vshrl.u32 683565275, %v671
    %v673 = vshll.u32 683565275, %v670
    %v674 = vshrl.u32 2475754826, %v671
    %v675 = vor.u32 %v673, %v674
    %v676 = vshll.u32 2475754826, %v670
    %v677 = vshrl.u32 2131351028, %v671
    %v678 = vor.u32 %v676, %v677
    %v679 = vshll.u32 2131351028, %v670
    %v680 = vshrl.u32 2102212464, %v671
    %v681 = vor.u32 %v679, %v680
    %v682 = vshll.u32 2102212464, %v670
    %v683 = vshrl.u32 920167782, %v671
    %v684 = vor.u32 %v682, %v683
    %v685 = vshll.u32 920167782, %v670
    %v686 = vshrl.u32 1326507024, %v671
    %v687 = vor.u32 %v685, %v686
    %vm688 = vcmp.lt.s32.totalorder %v669, 1
    %vm689 = vcmp.lt.s32.totalorder %v669, 2
    %vm690 = vcmp.lt.s32.totalorder %v669, 3
    %vm691 = vcmp.lt.s32.totalorder %v669, 4
    %v692 = vsel %vm688, %v672, %v675
    %v693 = vsel %vm691, %v681, 2102212464
    %v694 = vsel %vm690, %v678, %v693
    %v695 = vsel %vm689, %v692, %v694
    %v696 = vsel %vm688, %v675, %v678
    %v697 = vsel %vm691, %v684, 920167782
    %v698 = vsel %vm690, %v681, %v697
    %v699 = vsel %vm689, %v696, %v698
    %v700 = vsel %vm688, %v678, %v681
    %v701 = vsel %vm691, %v687, 1326507024
    %v702 = vsel %vm690, %v684, %v701
    %v703 = vsel %vm689, %v700, %v702
    %v704 = vshll.u32 %v664, 8
    %v705 = vmul.u32.u64.compose %v704, %v703
    %v706 = vextract.low.u32 %v705
    %v707 = vextract.high.u32 %v705
    %v708 = vmul.u32.u64.compose %v704, %v699
    %v709 = vextract.low.u32 %v708
    %v710 = vextract.high.u32 %v708
    %v711 = vmul.u32 %v704, %v695
    %v712 = vadd.s32 %v707, %v709
    %vm713 = vc.u32 %v707, %v709
    %v714 = vadd.s32 %v710, 1
    %v715 = vsel %vm713, %v714, %v710
    %v716 = vadd.s32 %v711, %v715
    %v717 = vadd.s32 %v716, 536870912
    %v718 = vshrl.u32 %v717, 30
    %v719 = vshll.u32 %v718, 30
    %v720 = vsub.s32 %v716, %v719
    %vm721 = vcmp.lt.s32.totalorder %v720, 0
    %v722 = vsub.s32 0, %v720
    %v723 = vsel %vm721, %v722, %v720
    %v724 = vclz %v723
    %v725 = vsub.s32 %v724, 2
    %vm726 = vcmp.gt.s32.totalorder 0, %v725
    %v727 = vsel %vm726, 0, %v725
    %v728 = vsub.s32 32, %v727
    %v729 = vshll.u32 %v720, %v727
    %v730 = vshrl.u32 %v712, %v728
    %v731 = vor.u32 %v729, %v730
    %v732 = vsub.s32 4294967266, %v727
    %v733 = vadd.s32 %v732, 127
    %v734 = vshll.u32 %v733, 23
    %v735 = vor.u32 4788187, %v734
    %v736 = vand.u32 2147483647, %v735
    %v738 = vcvt.s32.f32 %v731
    %v739 = vmul.f32 %v738, %v736
    %v740 = vxor.u32 %v739, 2147483648
    %v741 = vsel %vm658, %v740, %v739
    %v742 = vsub.s32 4, %v718
    %v743 = vsel %vm658, %v742, %v718
    %v744 = vsel %vm657, %v321, %v741
    %v745 = vsel %vm657, 0, %v743
    %v746 = vcosq.f32.pop %v744
    %v747 = vsinq.f32.pop %v744
    %vm748 = vweird.f32 %v321
    %v749 = vadd.s32 %v745, 3
    %v750 = vand.u32 %v749, 3
    %vm751 = vcmp.lt.s32.totalorder %v750, 2
    %vm752 = vcmp.eq.s32.totalorder %v750, 0
    %v753 = vxor.u32 %v747, 2147483648
    %v754 = vsel %vm752, %v746, %v753
    %vm755 = vcmp.eq.s32.totalorder %v750, 2
    %v756 = vxor.u32 %v746, 2147483648
    %v757 = vsel %vm755, %v756, %v747
    %v758 = vsel %vm751, %v754, %v757
    %v759 = vsel %vm748, nan, %v758
    %v760 = vand.u32 2147483647, %v326
    %vm761 = vcmp.le.f32.partialorder %v760, 0.7853982
    %vm762 = vcmp.lt.s32.totalorder %v326, 0
    %v763 = vand.u32 %v326, 2139095040
    %v764 = vshrl.u32 %v763, 23
    %v765 = vsub.s32 %v764, 127
    %v766 = vand.u32 2147483647, %v326
    %v767 = vand.u32 %v766, 8388607
    %v768 = vor.u32 %v767, 8388608
    %v769 = vsub.s32 0, %v768
    %v770 = vadd.s32 %v765, 1
    %vm771 = vcmp.gt.s32.totalorder %v770, 0
    %v772 = vsel %vm771, %v770, 0
    %v773 = vshrl.u32 %v772, 5
    %v774 = vand.u32 %v772, 31
    %v775 = vsub.s32 32, %v774
    %v776 = vshrl.u32 683565275, %v775
    %v777 = vshll.u32 683565275, %v774
    %v778 = vshrl.u32 2475754826, %v775
    %v779 = vor.u32 %v777, %v778
    %v780 = vshll.u32 2475754826, %v774
    %v781 = vshrl.u32 2131351028, %v775
    %v782 = vor.u32 %v780, %v781
    %v783 = vshll.u32 2131351028, %v774
    %v784 = vshrl.u32 2102212464, %v775
    %v785 = vor.u32 %v783, %v784
    %v786 = vshll.u32 2102212464, %v774
    %v787 = vshrl.u32 920167782, %v775
    %v788 = vor.u32 %v786, %v787
    %v789 = vshll.u32 920167782, %v774
    %v790 = vshrl.u32 1326507024, %v775
    %v791 = vor.u32 %v789, %v790
    %vm792 = vcmp.lt.s32.totalorder %v773, 1
    %vm793 = vcmp.lt.s32.totalorder %v773, 2
    %vm794 = vcmp.lt.s32.totalorder %v773, 3
    %vm795 = vcmp.lt.s32.totalorder %v773, 4
    %v796 = vsel %vm792, %v776, %v779
    %v797 = vsel %vm795, %v785, 2102212464
    %v798 = vsel %vm794, %v782, %v797
    %v799 = vsel %vm793, %v796, %v798
    %v800 = vsel %vm792, %v779, %v782
    %v801 = vsel %vm795, %v788, 920167782
    %v802 = vsel %vm794, %v785, %v801
    %v803 = vsel %vm793, %v800, %v802
    %v804 = vsel %vm792, %v782, %v785
    %v805 = vsel %vm795, %v791, 1326507024
    %v806 = vsel %vm794, %v788, %v805
    %v807 = vsel %vm793, %v804, %v806
    %v808 = vshll.u32 %v768, 8
    %v809 = vmul.u32.u64.compose %v808, %v807
    %v810 = vextract.low.u32 %v809
    %v811 = vextract.high.u32 %v809
    %v812 = vmul.u32.u64.compose %v808, %v803
    %v813 = vextract.low.u32 %v812
    %v814 = vextract.high.u32 %v812
    %v815 = vmul.u32 %v808, %v799
    %v816 = vadd.s32 %v811, %v813
    %vm817 = vc.u32 %v811, %v813
    %v818 = vadd.s32 %v814, 1
    %v819 = vsel %vm817, %v818, %v814
    %v820 = vadd.s32 %v815, %v819
    %v821 = vadd.s32 %v820, 536870912
    %v822 = vshrl.u32 %v821, 30
    %v823 = vshll.u32 %v822, 30
    %v824 = vsub.s32 %v820, %v823
    %vm825 = vcmp.lt.s32.totalorder %v824, 0
    %v826 = vsub.s32 0, %v824
    %v827 = vsel %vm825, %v826, %v824
    %v828 = vclz %v827
    %v829 = vsub.s32 %v828, 2
    %vm830 = vcmp.gt.s32.totalorder 0, %v829
    %v831 = vsel %vm830, 0, %v829
    %v832 = vsub.s32 32, %v831
    %v833 = vshll.u32 %v824, %v831
    %v834 = vshrl.u32 %v816, %v832
    %v835 = vor.u32 %v833, %v834
    %v836 = vsub.s32 4294967266, %v831
    %v837 = vadd.s32 %v836, 127
    %v838 = vshll.u32 %v837, 23
    %v839 = vor.u32 4788187, %v838
    %v840 = vand.u32 2147483647, %v839
    %v842 = vcvt.s32.f32 %v835
    %v843 = vmul.f32 %v842, %v840
    %v844 = vxor.u32 %v843, 2147483648
    %v845 = vsel %vm762, %v844, %v843
    %v846 = vsub.s32 4, %v822
    %v847 = vsel %vm762, %v846, %v822
    %v848 = vsel %vm761, %v326, %v845
    %v849 = vsel %vm761, 0, %v847
    %v850 = vcosq.f32.pop %v848
    %v851 = vsinq.f32.pop %v848
    %vm852 = vweird.f32 %v326
    %v853 = vadd.s32 %v849, 3
    %v854 = vand.u32 %v853, 3
    %vm855 = vcmp.lt.s32.totalorder %v854, 2
    %vm856 = vcmp.eq.s32.totalorder %v854, 0
    %v857 = vxor.u32 %v851, 2147483648
    %v858 = vsel %vm856, %v850, %v857
    %vm859 = vcmp.eq.s32.totalorder %v854, 2
    %v860 = vxor.u32 %v850, 2147483648
    %v861 = vsel %vm859, %v860, %v851
    %v862 = vsel %vm855, %v858, %v861
    %v863 = vsel %vm852, nan, %v862
    %v864 = vand.u32 2147483647, %v331
    %vm865 = vcmp.le.f32.partialorder %v864, 0.7853982
    %vm866 = vcmp.lt.s32.totalorder %v331, 0
    %v867 = vand.u32 %v331, 2139095040
    %v868 = vshrl.u32 %v867, 23
    %v869 = vsub.s32 %v868, 127
    %v870 = vand.u32 2147483647, %v331
    %v871 = vand.u32 %v870, 8388607
    %v872 = vor.u32 %v871, 8388608
    %v873 = vsub.s32 0, %v872
    %v874 = vadd.s32 %v869, 1
    %vm875 = vcmp.gt.s32.totalorder %v874, 0
    %v876 = vsel %vm875, %v874, 0
    %v877 = vshrl.u32 %v876, 5
    %v878 = vand.u32 %v876, 31
    %v879 = vsub.s32 32, %v878
    %v880 = vshrl.u32 683565275, %v879
    %v881 = vshll.u32 683565275, %v878
    %v882 = vshrl.u32 2475754826, %v879
    %v883 = vor.u32 %v881, %v882
    %v884 = vshll.u32 2475754826, %v878
    %v885 = vshrl.u32 2131351028, %v879
    %v886 = vor.u32 %v884, %v885
    %v887 = vshll.u32 2131351028, %v878
    %v888 = vshrl.u32 2102212464, %v879
    %v889 = vor.u32 %v887, %v888
    %v890 = vshll.u32 2102212464, %v878
    %v891 = vshrl.u32 920167782, %v879
    %v892 = vor.u32 %v890, %v891
    %v893 = vshll.u32 920167782, %v878
    %v894 = vshrl.u32 1326507024, %v879
    %v895 = vor.u32 %v893, %v894
    %vm896 = vcmp.lt.s32.totalorder %v877, 1
    %vm897 = vcmp.lt.s32.totalorder %v877, 2
    %vm898 = vcmp.lt.s32.totalorder %v877, 3
    %vm899 = vcmp.lt.s32.totalorder %v877, 4
    %v900 = vsel %vm896, %v880, %v883
    %v901 = vsel %vm899, %v889, 2102212464
    %v902 = vsel %vm898, %v886, %v901
    %v903 = vsel %vm897, %v900, %v902
    %v904 = vsel %vm896, %v883, %v886
    %v905 = vsel %vm899, %v892, 920167782
    %v906 = vsel %vm898, %v889, %v905
    %v907 = vsel %vm897, %v904, %v906
    %v908 = vsel %vm896, %v886, %v889
    %v909 = vsel %vm899, %v895, 1326507024
    %v910 = vsel %vm898, %v892, %v909
    %v911 = vsel %vm897, %v908, %v910
    %v912 = vshll.u32 %v872, 8
    %v913 = vmul.u32.u64.compose %v912, %v911
    %v914 = vextract.low.u32 %v913
    %v915 = vextract.high.u32 %v913
    %v916 = vmul.u32.u64.compose %v912, %v907
    %v917 = vextract.low.u32 %v916
    %v918 = vextract.high.u32 %v916
    %v919 = vmul.u32 %v912, %v903
    %v920 = vadd.s32 %v915, %v917
    %vm921 = vc.u32 %v915, %v917
    %v922 = vadd.s32 %v918, 1
    %v923 = vsel %vm921, %v922, %v918
    %v924 = vadd.s32 %v919, %v923
    %v925 = vadd.s32 %v924, 536870912
    %v926 = vshrl.u32 %v925, 30
    %v927 = vshll.u32 %v926, 30
    %v928 = vsub.s32 %v924, %v927
    %vm929 = vcmp.lt.s32.totalorder %v928, 0
    %v930 = vsub.s32 0, %v928
    %v931 = vsel %vm929, %v930, %v928
    %v932 = vclz %v931
    %v933 = vsub.s32 %v932, 2
    %vm934 = vcmp.gt.s32.totalorder 0, %v933
    %v935 = vsel %vm934, 0, %v933
    %v936 = vsub.s32 32, %v935
    %v937 = vshll.u32 %v928, %v935
    %v938 = vshrl.u32 %v920, %v936
    %v939 = vor.u32 %v937, %v938
    %v940 = vsub.s32 4294967266, %v935
    %v941 = vadd.s32 %v940, 127
    %v942 = vshll.u32 %v941, 23
    %v943 = vor.u32 4788187, %v942
    %v944 = vand.u32 2147483647, %v943
    %v946 = vcvt.s32.f32 %v939
    %v947 = vmul.f32 %v946, %v944
    %v948 = vxor.u32 %v947, 2147483648
    %v949 = vsel %vm866, %v948, %v947
    %v950 = vsub.s32 4, %v926
    %v951 = vsel %vm866, %v950, %v926
    %v952 = vsel %vm865, %v331, %v949
    %v953 = vsel %vm865, 0, %v951
    %v954 = vcosq.f32.pop %v952
    %v955 = vsinq.f32.pop %v952
    %vm956 = vweird.f32 %v331
    %v957 = vadd.s32 %v953, 3
    %v958 = vand.u32 %v957, 3
    %vm959 = vcmp.lt.s32.totalorder %v958, 2
    %vm960 = vcmp.eq.s32.totalorder %v958, 0
    %v961 = vxor.u32 %v955, 2147483648
    %v962 = vsel %vm960, %v954, %v961
    %vm963 = vcmp.eq.s32.totalorder %v958, 2
    %v964 = vxor.u32 %v954, 2147483648
    %v965 = vsel %vm963, %v964, %v955
    %v966 = vsel %vm959, %v962, %v965
    %v967 = vsel %vm956, nan, %v966
    %v968 = vand.u32 2147483647, %v336
    %vm969 = vcmp.le.f32.partialorder %v968, 0.7853982
    %vm970 = vcmp.lt.s32.totalorder %v336, 0
    %v971 = vand.u32 %v336, 2139095040
    %v972 = vshrl.u32 %v971, 23
    %v973 = vsub.s32 %v972, 127
    %v974 = vand.u32 2147483647, %v336
    %v975 = vand.u32 %v974, 8388607
    %v976 = vor.u32 %v975, 8388608
    %v977 = vsub.s32 0, %v976
    %v978 = vadd.s32 %v973, 1
    %vm979 = vcmp.gt.s32.totalorder %v978, 0
    %v980 = vsel %vm979, %v978, 0
    %v981 = vshrl.u32 %v980, 5
    %v982 = vand.u32 %v980, 31
    %v983 = vsub.s32 32, %v982
    %v984 = vshrl.u32 683565275, %v983
    %v985 = vshll.u32 683565275, %v982
    %v986 = vshrl.u32 2475754826, %v983
    %v987 = vor.u32 %v985, %v986
    %v988 = vshll.u32 2475754826, %v982
    %v989 = vshrl.u32 2131351028, %v983
    %v990 = vor.u32 %v988, %v989
    %v991 = vshll.u32 2131351028, %v982
    %v992 = vshrl.u32 2102212464, %v983
    %v993 = vor.u32 %v991, %v992
    %v994 = vshll.u32 2102212464, %v982
    %v995 = vshrl.u32 920167782, %v983
    %v996 = vor.u32 %v994, %v995
    %v997 = vshll.u32 920167782, %v982
    %v998 = vshrl.u32 1326507024, %v983
    %v999 = vor.u32 %v997, %v998
    %vm1000 = vcmp.lt.s32.totalorder %v981, 1
    %vm1001 = vcmp.lt.s32.totalorder %v981, 2
    %vm1002 = vcmp.lt.s32.totalorder %v981, 3
    %vm1003 = vcmp.lt.s32.totalorder %v981, 4
    %v1004 = vsel %vm1000, %v984, %v987
    %v1005 = vsel %vm1003, %v993, 2102212464
    %v1006 = vsel %vm1002, %v990, %v1005
    %v1007 = vsel %vm1001, %v1004, %v1006
    %v1008 = vsel %vm1000, %v987, %v990
    %v1009 = vsel %vm1003, %v996, 920167782
    %v1010 = vsel %vm1002, %v993, %v1009
    %v1011 = vsel %vm1001, %v1008, %v1010
    %v1012 = vsel %vm1000, %v990, %v993
    %v1013 = vsel %vm1003, %v999, 1326507024
    %v1014 = vsel %vm1002, %v996, %v1013
    %v1015 = vsel %vm1001, %v1012, %v1014
    %v1016 = vshll.u32 %v976, 8
    %v1017 = vmul.u32.u64.compose %v1016, %v1015
    %v1018 = vextract.low.u32 %v1017
    %v1019 = vextract.high.u32 %v1017
    %v1020 = vmul.u32.u64.compose %v1016, %v1011
    %v1021 = vextract.low.u32 %v1020
    %v1022 = vextract.high.u32 %v1020
    %v1023 = vmul.u32 %v1016, %v1007
    %v1024 = vadd.s32 %v1019, %v1021
    %vm1025 = vc.u32 %v1019, %v1021
    %v1026 = vadd.s32 %v1022, 1
    %v1027 = vsel %vm1025, %v1026, %v1022
    %v1028 = vadd.s32 %v1023, %v1027
    %v1029 = vadd.s32 %v1028, 536870912
    %v1030 = vshrl.u32 %v1029, 30
    %v1031 = vshll.u32 %v1030, 30
    %v1032 = vsub.s32 %v1028, %v1031
    %vm1033 = vcmp.lt.s32.totalorder %v1032, 0
    %v1034 = vsub.s32 0, %v1032
    %v1035 = vsel %vm1033, %v1034, %v1032
    %v1036 = vclz %v1035
    %v1037 = vsub.s32 %v1036, 2
    %vm1038 = vcmp.gt.s32.totalorder 0, %v1037
    %v1039 = vsel %vm1038, 0, %v1037
    %v1040 = vsub.s32 32, %v1039
    %v1041 = vshll.u32 %v1032, %v1039
    %v1042 = vshrl.u32 %v1024, %v1040
    %v1043 = vor.u32 %v1041, %v1042
    %v1044 = vsub.s32 4294967266, %v1039
    %v1045 = vadd.s32 %v1044, 127
    %v1046 = vshll.u32 %v1045, 23
    %v1047 = vor.u32 4788187, %v1046
    %v1048 = vand.u32 2147483647, %v1047
    %v1050 = vcvt.s32.f32 %v1043
    %v1051 = vmul.f32 %v1050, %v1048
    %v1052 = vxor.u32 %v1051, 2147483648
    %v1053 = vsel %vm970, %v1052, %v1051
    %v1054 = vsub.s32 4, %v1030
    %v1055 = vsel %vm970, %v1054, %v1030
    %v1056 = vsel %vm969, %v336, %v1053
    %v1057 = vsel %vm969, 0, %v1055
    %v1058 = vcosq.f32.pop %v1056
    %v1059 = vsinq.f32.pop %v1056
    %vm1060 = vweird.f32 %v336
    %v1061 = vadd.s32 %v1057, 3
    %v1062 = vand.u32 %v1061, 3
    %vm1063 = vcmp.lt.s32.totalorder %v1062, 2
    %vm1064 = vcmp.eq.s32.totalorder %v1062, 0
    %v1065 = vxor.u32 %v1059, 2147483648
    %v1066 = vsel %vm1064, %v1058, %v1065
    %vm1067 = vcmp.eq.s32.totalorder %v1062, 2
    %v1068 = vxor.u32 %v1058, 2147483648
    %v1069 = vsel %vm1067, %v1068, %v1059
    %v1070 = vsel %vm1063, %v1066, %v1069
    %v1071 = vsel %vm1060, nan, %v1070
    %v1072 = vand.u32 2147483647, %v341
    %vm1073 = vcmp.le.f32.partialorder %v1072, 0.7853982
    %vm1074 = vcmp.lt.s32.totalorder %v341, 0
    %v1075 = vand.u32 %v341, 2139095040
    %v1076 = vshrl.u32 %v1075, 23
    %v1077 = vsub.s32 %v1076, 127
    %v1078 = vand.u32 2147483647, %v341
    %v1079 = vand.u32 %v1078, 8388607
    %v1080 = vor.u32 %v1079, 8388608
    %v1081 = vsub.s32 0, %v1080
    %v1082 = vadd.s32 %v1077, 1
    %vm1083 = vcmp.gt.s32.totalorder %v1082, 0
    %v1084 = vsel %vm1083, %v1082, 0
    %v1085 = vshrl.u32 %v1084, 5
    %v1086 = vand.u32 %v1084, 31
    %v1087 = vsub.s32 32, %v1086
    %v1088 = vshrl.u32 683565275, %v1087
    %v1089 = vshll.u32 683565275, %v1086
    %v1090 = vshrl.u32 2475754826, %v1087
    %v1091 = vor.u32 %v1089, %v1090
    %v1092 = vshll.u32 2475754826, %v1086
    %v1093 = vshrl.u32 2131351028, %v1087
    %v1094 = vor.u32 %v1092, %v1093
    %v1095 = vshll.u32 2131351028, %v1086
    %v1096 = vshrl.u32 2102212464, %v1087
    %v1097 = vor.u32 %v1095, %v1096
    %v1098 = vshll.u32 2102212464, %v1086
    %v1099 = vshrl.u32 920167782, %v1087
    %v1100 = vor.u32 %v1098, %v1099
    %v1101 = vshll.u32 920167782, %v1086
    %v1102 = vshrl.u32 1326507024, %v1087
    %v1103 = vor.u32 %v1101, %v1102
    %vm1104 = vcmp.lt.s32.totalorder %v1085, 1
    %vm1105 = vcmp.lt.s32.totalorder %v1085, 2
    %vm1106 = vcmp.lt.s32.totalorder %v1085, 3
    %vm1107 = vcmp.lt.s32.totalorder %v1085, 4
    %v1108 = vsel %vm1104, %v1088, %v1091
    %v1109 = vsel %vm1107, %v1097, 2102212464
    %v1110 = vsel %vm1106, %v1094, %v1109
    %v1111 = vsel %vm1105, %v1108, %v1110
    %v1112 = vsel %vm1104, %v1091, %v1094
    %v1113 = vsel %vm1107, %v1100, 920167782
    %v1114 = vsel %vm1106, %v1097, %v1113
    %v1115 = vsel %vm1105, %v1112, %v1114
    %v1116 = vsel %vm1104, %v1094, %v1097
    %v1117 = vsel %vm1107, %v1103, 1326507024
    %v1118 = vsel %vm1106, %v1100, %v1117
    %v1119 = vsel %vm1105, %v1116, %v1118
    %v1120 = vshll.u32 %v1080, 8
    %v1121 = vmul.u32.u64.compose %v1120, %v1119
    %v1122 = vextract.low.u32 %v1121
    %v1123 = vextract.high.u32 %v1121
    %v1124 = vmul.u32.u64.compose %v1120, %v1115
    %v1125 = vextract.low.u32 %v1124
    %v1126 = vextract.high.u32 %v1124
    %v1127 = vmul.u32 %v1120, %v1111
    %v1128 = vadd.s32 %v1123, %v1125
    %vm1129 = vc.u32 %v1123, %v1125
    %v1130 = vadd.s32 %v1126, 1
    %v1131 = vsel %vm1129, %v1130, %v1126
    %v1132 = vadd.s32 %v1127, %v1131
    %v1133 = vadd.s32 %v1132, 536870912
    %v1134 = vshrl.u32 %v1133, 30
    %v1135 = vshll.u32 %v1134, 30
    %v1136 = vsub.s32 %v1132, %v1135
    %vm1137 = vcmp.lt.s32.totalorder %v1136, 0
    %v1138 = vsub.s32 0, %v1136
    %v1139 = vsel %vm1137, %v1138, %v1136
    %v1140 = vclz %v1139
    %v1141 = vsub.s32 %v1140, 2
    %vm1142 = vcmp.gt.s32.totalorder 0, %v1141
    %v1143 = vsel %vm1142, 0, %v1141
    %v1144 = vsub.s32 32, %v1143
    %v1145 = vshll.u32 %v1136, %v1143
    %v1146 = vshrl.u32 %v1128, %v1144
    %v1147 = vor.u32 %v1145, %v1146
    %v1148 = vsub.s32 4294967266, %v1143
    %v1149 = vadd.s32 %v1148, 127
    %v1150 = vshll.u32 %v1149, 23
    %v1151 = vor.u32 4788187, %v1150
    %v1152 = vand.u32 2147483647, %v1151
    %v1154 = vcvt.s32.f32 %v1147
    %v1155 = vmul.f32 %v1154, %v1152
    %v1156 = vxor.u32 %v1155, 2147483648
    %v1157 = vsel %vm1074, %v1156, %v1155
    %v1158 = vsub.s32 4, %v1134
    %v1159 = vsel %vm1074, %v1158, %v1134
    %v1160 = vsel %vm1073, %v341, %v1157
    %v1161 = vsel %vm1073, 0, %v1159
    %v1162 = vcosq.f32.pop %v1160
    %v1163 = vsinq.f32.pop %v1160
    %vm1164 = vweird.f32 %v341
    %v1165 = vadd.s32 %v1161, 3
    %v1166 = vand.u32 %v1165, 3
    %vm1167 = vcmp.lt.s32.totalorder %v1166, 2
    %vm1168 = vcmp.eq.s32.totalorder %v1166, 0
    %v1169 = vxor.u32 %v1163, 2147483648
    %v1170 = vsel %vm1168, %v1162, %v1169
    %vm1171 = vcmp.eq.s32.totalorder %v1166, 2
    %v1172 = vxor.u32 %v1162, 2147483648
    %v1173 = vsel %vm1171, %v1172, %v1163
    %v1174 = vsel %vm1167, %v1170, %v1173
    %v1175 = vsel %vm1164, nan, %v1174
    %v1176 = vld [vmem:[#allocation2] sm:$0xff]
    %v1177 = vld [vmem:[#allocation2 + $0x8] sm:$0xff]
    %v1178 = vld [vmem:[#allocation2 + $0x10] sm:$0xff]
    %v1179 = vld [vmem:[#allocation2 + $0x18] sm:$0x7f]
    %v1180 = vld [vmem:[#allocation2 + $0x20] sm:$0x7f]
    %v1181 = vld [vmem:[#allocation2 + $0x28] sm:$0x7f]
    %v1182 = vld [vmem:[%s4] sm:$0xff]
    %v1183 = vld [vmem:[%s4 + $0x8] sm:$0xf]
    %v1186 = vcombine.high %v1182, %v1182
    %v1187 = vsel %vm235, %v1182, 0
    %v1189 = vsel %vm235, %v1186, 0
    %v1191 = vsel %vm235, %v1183, 0
    %1193 = vmatprep.subr.mxu0 %v1189
    %1194 = vmatpush1.msra.mxu0 %v1187
    %1195 = vmatprep.subr.mxu0 0.0
    %1196 = vmatpush1.msra.mxu0 0.0
    %1197 = vmatprep.subr.mxu0 0.0
    %1198 = vmatpush1.msra.mxu0 0.0
    %1199 = vmatprep.subr.mxu0 0.0
    %1200 = vmatpush1.msra.mxu0 0.0
    %1201 = vmatprep.subr.mxu0 0.0
    %1202 = vmatpush1.msra.mxu0 0.0
    %1203 = vmatprep.subr.mxu0 0.0
    %1204 = vmatpush1.msra.mxu0 0.0
    %1205 = vmatprep.subr.mxu0 0.0
    %1206 = vmatpush1.msra.mxu0 0.0
    %1207 = vmatprep.subr.mxu0 0.0
    %1208 = vmatpush1.msra.mxu0 0.0
    %1209 = vmatprep.subr.mxu0 0.0
    %1210 = vmatpush1.msra.mxu0 0.0
    %1211 = vmatprep.subr.mxu0 0.0
    %1212 = vmatpush1.msra.mxu0 0.0
    %1213 = vmatprep.subr.mxu0 0.0
    %1214 = vmatpush1.msra.mxu0 0.0
    %1215 = vmatprep.subr.mxu0 0.0
    %1216 = vmatpush1.msra.mxu0 0.0
    %1217 = vmatprep.subr.mxu0 0.0
    %1218 = vmatpush1.msra.mxu0 0.0
    %1219 = vmatprep.subr.mxu0 0.0
    %1220 = vmatpush1.msra.mxu0 0.0
    %1221 = vmatprep.subr.mxu0 0.0
    %1222 = vmatpush1.msra.mxu0 0.0
    %1223 = vmatprep.subr.mxu0 0.0
    %1224 = vmatpush1.msra.mxu0 0.0
    %1225 = vmatprep.subr.mxu0 0.0
    %1226 = vmatpush1.msra.mxu0 0.0
    %1227 = vmatprep.subr.mxu0 0.0
    %1228 = vmatpush1.msra.mxu0 0.0
    %1229 = vmatprep.subr.mxu0 0.0
    %1230 = vmatpush1.msra.mxu0 0.0
    %1231 = vmatprep.subr.mxu0 0.0
    %1232 = vmatpush1.msra.mxu0 0.0
    %1233 = vmatprep.subr.mxu0 0.0
    %1234 = vmatpush1.msra.mxu0 0.0
    %1235 = vmatprep.subr.mxu0 0.0
    %1236 = vmatpush1.msra.mxu0 0.0
    %1237 = vmatprep.subr.mxu0 0.0
    %1238 = vmatpush1.msra.mxu0 0.0
    %1239 = vmatprep.subr.mxu0 0.0
    %1240 = vmatpush1.msra.mxu0 0.0
    %1241 = vmatprep.subr.mxu0 0.0
    %1242 = vmatpush1.msra.mxu0 0.0
    %1243 = vmatprep.subr.mxu0 0.0
    %1244 = vmatpush1.msra.mxu0 0.0
    %1245 = vmatprep.subr.mxu0 0.0
    %1246 = vmatpush1.msra.mxu0 0.0
    %1247 = vmatprep.subr.mxu0 0.0
    %1248 = vmatpush1.msra.mxu0 0.0
    %1249 = vmatprep.subr.mxu0 0.0
    %1250 = vmatpush1.msra.mxu0 0.0
    %1251 = vmatprep.subr.mxu0 0.0
    %1252 = vmatpush1.msra.mxu0 0.0
    %1253 = vmatprep.subr.mxu0 0.0
    %1254 = vmatpush1.msra.mxu0 0.0
    %1255 = vmatprep.subr.mxu0 0.0
    %1256 = vmatpush1.msra.mxu0 0.0
    %1257 = vmatprep.mubr.f32.mxu0 0.0
    %1258 = vmatmul.mubr.f32.gmra.mrb[0].mxu0 %v212
    %v1259 = vpop.f32.mrb[0].mxu0
    %v1260 = vadd.f32 0.0, %v1259
    %v1261 = vpop.f32.mrb[0].mxu0
    %v1262 = vadd.f32 0.0, %v1261
    %1263 = vmatprep.mubr.f32.mxu0 0.0
    %1264 = vmatmul.mubr.f32.gmra.mrb[0].mxu0 %v215
    %v1265 = vpop.f32.mrb[0].mxu0
    %v1266 = vadd.f32 0.0, %v1265
    %v1267 = vpop.f32.mrb[0].mxu0
    %v1268 = vadd.f32 0.0, %v1267
    %1269 = vmatprep.mubr.f32.mxu0 0.0
    %1270 = vmatmul.mubr.f32.gmra.mrb[0].mxu0 %v218
    %v1271 = vpop.f32.mrb[0].mxu0
    %v1272 = vadd.f32 0.0, %v1271
    %v1273 = vpop.f32.mrb[0].mxu0
    %v1274 = vadd.f32 0.0, %v1273
    %1275 = vmatprep.mubr.f32.mxu0 0.0
    %1276 = vmatmul.mubr.f32.gmra.mrb[0].mxu0 %v221
    %v1277 = vpop.f32.mrb[0].mxu0
    %v1278 = vadd.f32 0.0, %v1277
    %v1279 = vpop.f32.mrb[0].mxu0
    %v1280 = vadd.f32 0.0, %v1279
    %1281 = vmatprep.mubr.f32.mxu0 0.0
    %1282 = vmatmul.mubr.f32.gmra.mrb[0].mxu0 %v224
    %v1283 = vpop.f32.mrb[0].mxu0
    %v1284 = vadd.f32 0.0, %v1283
    %v1285 = vpop.f32.mrb[0].mxu0
    %v1286 = vadd.f32 0.0, %v1285
    %1287 = vmatprep.mubr.f32.mxu0 0.0
    %1288 = vmatmul.mubr.f32.gmra.mrb[0].mxu0 %v227
    %v1289 = vpop.f32.mrb[0].mxu0
    %v1290 = vadd.f32 0.0, %v1289
    %v1291 = vpop.f32.mrb[0].mxu0
    %v1292 = vadd.f32 0.0, %v1291
    %1293 = vmatprep.mubr.f32.mxu0 0.0
    %1294 = vmatmul.mubr.f32.gmra.mrb[0].mxu0 %v230
    %v1295 = vpop.f32.mrb[0].mxu0
    %v1296 = vadd.f32 0.0, %v1295
    %v1297 = vpop.f32.mrb[0].mxu0
    %v1298 = vadd.f32 0.0, %v1297
    %1299 = vmatprep.mubr.f32.mxu0 0.0
    %1300 = vmatmul.mubr.f32.gmra.mrb[0].mxu0 %v233
    %v1301 = vpop.f32.mrb[0].mxu0
    %v1302 = vadd.f32 0.0, %v1301
    %v1303 = vpop.f32.mrb[0].mxu0
    %v1304 = vadd.f32 0.0, %v1303
    %1305 = vdwg.mxu0
    %1306 = vmatprep.subr.mxu0 0.0
    %1307 = vmatpush1.msra.mxu0 %v1191
    %1308 = vmatprep.subr.mxu0 0.0
    %1309 = vmatpush1.msra.mxu0 0.0
    %1310 = vmatprep.subr.mxu0 0.0
    %1311 = vmatpush1.msra.mxu0 0.0
    %1312 = vmatprep.subr.mxu0 0.0
    %1313 = vmatpush1.msra.mxu0 0.0
    %1314 = vmatprep.subr.mxu0 0.0
    %1315 = vmatpush1.msra.mxu0 0.0
    %1316 = vmatprep.subr.mxu0 0.0
    %1317 = vmatpush1.msra.mxu0 0.0
    %1318 = vmatprep.subr.mxu0 0.0
    %1319 = vmatpush1.msra.mxu0 0.0
    %1320 = vmatprep.subr.mxu0 0.0
    %1321 = vmatpush1.msra.mxu0 0.0
    %1322 = vmatprep.subr.mxu0 0.0
    %1323 = vmatpush1.msra.mxu0 0.0
    %1324 = vmatprep.subr.mxu0 0.0
    %1325 = vmatpush1.msra.mxu0 0.0
    %1326 = vmatprep.subr.mxu0 0.0
    %1327 = vmatpush1.msra.mxu0 0.0
    %1328 = vmatprep.subr.mxu0 0.0
    %1329 = vmatpush1.msra.mxu0 0.0
    %1330 = vmatprep.subr.mxu0 0.0
    %1331 = vmatpush1.msra.mxu0 0.0
    %1332 = vmatprep.subr.mxu0 0.0
    %1333 = vmatpush1.msra.mxu0 0.0
    %1334 = vmatprep.subr.mxu0 0.0
    %1335 = vmatpush1.msra.mxu0 0.0
    %1336 = vmatprep.subr.mxu0 0.0
    %1337 = vmatpush1.msra.mxu0 0.0
    %1338 = vmatprep.subr.mxu0 0.0
    %1339 = vmatpush1.msra.mxu0 0.0
    %1340 = vmatprep.subr.mxu0 0.0
    %1341 = vmatpush1.msra.mxu0 0.0
    %1342 = vmatprep.subr.mxu0 0.0
    %1343 = vmatpush1.msra.mxu0 0.0
    %1344 = vmatprep.subr.mxu0 0.0
    %1345 = vmatpush1.msra.mxu0 0.0
    %1346 = vmatprep.subr.mxu0 0.0
    %1347 = vmatpush1.msra.mxu0 0.0
    %1348 = vmatprep.subr.mxu0 0.0
    %1349 = vmatpush1.msra.mxu0 0.0
    %1350 = vmatprep.subr.mxu0 0.0
    %1351 = vmatpush1.msra.mxu0 0.0
    %1352 = vmatprep.subr.mxu0 0.0
    %1353 = vmatpush1.msra.mxu0 0.0
    %1354 = vmatprep.subr.mxu0 0.0
    %1355 = vmatpush1.msra.mxu0 0.0
    %1356 = vmatprep.subr.mxu0 0.0
    %1357 = vmatpush1.msra.mxu0 0.0
    %1358 = vmatprep.subr.mxu0 0.0
    %1359 = vmatpush1.msra.mxu0 0.0
    %1360 = vmatprep.subr.mxu0 0.0
    %1361 = vmatpush1.msra.mxu0 0.0
    %1362 = vmatprep.subr.mxu0 0.0
    %1363 = vmatpush1.msra.mxu0 0.0
    %1364 = vmatprep.subr.mxu0 0.0
    %1365 = vmatpush1.msra.mxu0 0.0
    %1366 = vmatprep.subr.mxu0 0.0
    %1367 = vmatpush1.msra.mxu0 0.0
    %1368 = vmatprep.subr.mxu0 0.0
    %1369 = vmatpush1.msra.mxu0 0.0
    %1370 = vmatprep.mubr.f32.mxu0 0.0
    %1371 = vmatmul.mubr.f32.gmra.mrb[0].mxu0 %v212
    %v1372 = vpop.f32.mrb[0].mxu0
    %v1373 = vadd.f32 0.0, %v1372
    %v1374 = vpop.f32.mrb[0].mxu0
    %1375 = vmatprep.mubr.f32.mxu0 0.0
    %1376 = vmatmul.mubr.f32.gmra.mrb[0].mxu0 %v215
    %v1377 = vpop.f32.mrb[0].mxu0
    %v1378 = vadd.f32 0.0, %v1377
    %v1379 = vpop.f32.mrb[0].mxu0
    %1380 = vmatprep.mubr.f32.mxu0 0.0
    %1381 = vmatmul.mubr.f32.gmra.mrb[0].mxu0 %v218
    %v1382 = vpop.f32.mrb[0].mxu0
    %v1383 = vadd.f32 0.0, %v1382
    %v1384 = vpop.f32.mrb[0].mxu0
    %1385 = vmatprep.mubr.f32.mxu0 0.0
    %1386 = vmatmul.mubr.f32.gmra.mrb[0].mxu0 %v221
    %v1387 = vpop.f32.mrb[0].mxu0
    %v1388 = vadd.f32 0.0, %v1387
    %v1389 = vpop.f32.mrb[0].mxu0
    %1390 = vmatprep.mubr.f32.mxu0 0.0
    %1391 = vmatmul.mubr.f32.gmra.mrb[0].mxu0 %v224
    %v1392 = vpop.f32.mrb[0].mxu0
    %v1393 = vadd.f32 0.0, %v1392
    %v1394 = vpop.f32.mrb[0].mxu0
    %1395 = vmatprep.mubr.f32.mxu0 0.0
    %1396 = vmatmul.mubr.f32.gmra.mrb[0].mxu0 %v227
    %v1397 = vpop.f32.mrb[0].mxu0
    %v1398 = vadd.f32 0.0, %v1397
    %v1399 = vpop.f32.mrb[0].mxu0
    %1400 = vmatprep.mubr.f32.mxu0 0.0
    %1401 = vmatmul.mubr.f32.gmra.mrb[0].mxu0 %v230
    %v1402 = vpop.f32.mrb[0].mxu0
    %v1403 = vadd.f32 0.0, %v1402
    %v1404 = vpop.f32.mrb[0].mxu0
    %1405 = vmatprep.mubr.f32.mxu0 0.0
    %1406 = vmatmul.mubr.f32.gmra.mrb[0].mxu0 %v233
    %v1407 = vpop.f32.mrb[0].mxu0
    %v1408 = vadd.f32 0.0, %v1407
    %v1409 = vpop.f32.mrb[0].mxu0
    %1410 = vdwg.mxu0
    %vm1411 = vcmask 121856
    %v1413 = vsel %vm1411, %v447, 0
    %v1416 = vsel %vm1411, %v551, 0
    %v1419 = vsel %vm1411, %v655, 0
    %v1422 = vsel %vm1411, %v759, 0
    %v1425 = vsel %vm1411, %v863, 0
    %v1428 = vsel %vm1411, %v967, 0
    %v1431 = vsel %vm1411, %v1071, 0
    %v1434 = vsel %vm1411, %v1175, 0
    %vm1436 = vcmask 1046528
    %v1438 = vsel %vm1436, %v1179, 0
    %v1441 = vsel %vm1436, %v1180, 0
    %v1444 = vsel %vm1436, %v1181, 0
    %1446 = vmatprep.subr.mxu0 %v1177
    %1447 = vmatpush1.msra.mxu0 %v1176
    %1448 = vmatprep.subr.mxu0 %v1441
    %1449 = vmatpush1.msra.mxu0 %v1438
    %1450 = vmatprep.subr.mxu0 0.0
    %1451 = vmatpush1.msra.mxu0 0.0
    %1452 = vmatprep.subr.mxu0 0.0
    %1453 = vmatpush1.msra.mxu0 0.0
    %1454 = vmatprep.subr.mxu0 0.0
    %1455 = vmatpush1.msra.mxu0 0.0
    %1456 = vmatprep.subr.mxu0 0.0
    %1457 = vmatpush1.msra.mxu0 0.0
    %1458 = vmatprep.subr.mxu0 0.0
    %1459 = vmatpush1.msra.mxu0 0.0
    %1460 = vmatprep.subr.mxu0 0.0
    %1461 = vmatpush1.msra.mxu0 0.0
    %1462 = vmatprep.subr.mxu0 0.0
    %1463 = vmatpush1.msra.mxu0 0.0
    %1464 = vmatprep.subr.mxu0 0.0
    %1465 = vmatpush1.msra.mxu0 0.0
    %1466 = vmatprep.subr.mxu0 0.0
    %1467 = vmatpush1.msra.mxu0 0.0
    %1468 = vmatprep.subr.mxu0 0.0
    %1469 = vmatpush1.msra.mxu0 0.0
    %1470 = vmatprep.subr.mxu0 0.0
    %1471 = vmatpush1.msra.mxu0 0.0
    %1472 = vmatprep.subr.mxu0 0.0
    %1473 = vmatpush1.msra.mxu0 0.0
    %1474 = vmatprep.subr.mxu0 0.0
    %1475 = vmatpush1.msra.mxu0 0.0
    %1476 = vmatprep.subr.mxu0 0.0
    %1477 = vmatpush1.msra.mxu0 0.0
    %1478 = vmatprep.subr.mxu0 0.0
    %1479 = vmatpush1.msra.mxu0 0.0
    %1480 = vmatprep.subr.mxu0 0.0
    %1481 = vmatpush1.msra.mxu0 0.0
    %1482 = vmatprep.subr.mxu0 0.0
    %1483 = vmatpush1.msra.mxu0 0.0
    %1484 = vmatprep.subr.mxu0 0.0
    %1485 = vmatpush1.msra.mxu0 0.0
    %1486 = vmatprep.subr.mxu0 0.0
    %1487 = vmatpush1.msra.mxu0 0.0
    %1488 = vmatprep.subr.mxu0 0.0
    %1489 = vmatpush1.msra.mxu0 0.0
    %1490 = vmatprep.subr.mxu0 0.0
    %1491 = vmatpush1.msra.mxu0 0.0
    %1492 = vmatprep.subr.mxu0 0.0
    %1493 = vmatpush1.msra.mxu0 0.0
    %1494 = vmatprep.subr.mxu0 0.0
    %1495 = vmatpush1.msra.mxu0 0.0
    %1496 = vmatprep.subr.mxu0 0.0
    %1497 = vmatpush1.msra.mxu0 0.0
    %1498 = vmatprep.subr.mxu0 0.0
    %1499 = vmatpush1.msra.mxu0 0.0
    %1500 = vmatprep.subr.mxu0 0.0
    %1501 = vmatpush1.msra.mxu0 0.0
    %1502 = vmatprep.subr.mxu0 0.0
    %1503 = vmatpush1.msra.mxu0 0.0
    %1504 = vmatprep.subr.mxu0 0.0
    %1505 = vmatpush1.msra.mxu0 0.0
    %1506 = vmatprep.subr.mxu0 0.0
    %1507 = vmatpush1.msra.mxu0 0.0
    %1508 = vmatprep.subr.mxu0 0.0
    %1509 = vmatpush1.msra.mxu0 0.0
    %1510 = vmatprep.mubr.f32.mxu0 0.0
    %1511 = vmatmul.mubr.f32.gmra.mrb[0].mxu0 %v1413
    %v1512 = vpop.f32.mrb[0].mxu0
    %v1513 = vadd.f32 %v1260, %v1512
    %v1514 = vpop.f32.mrb[0].mxu0
    %v1515 = vadd.f32 %v1262, %v1514
    %1516 = vmatprep.mubr.f32.mxu0 0.0
    %1517 = vmatmul.mubr.f32.gmra.mrb[0].mxu0 %v1416
    %v1518 = vpop.f32.mrb[0].mxu0
    %v1519 = vadd.f32 %v1266, %v1518
    %v1520 = vpop.f32.mrb[0].mxu0
    %v1521 = vadd.f32 %v1268, %v1520
    %1522 = vmatprep.mubr.f32.mxu0 0.0
    %1523 = vmatmul.mubr.f32.gmra.mrb[0].mxu0 %v1419
    %v1524 = vpop.f32.mrb[0].mxu0
    %v1525 = vadd.f32 %v1272, %v1524
    %v1526 = vpop.f32.mrb[0].mxu0
    %v1527 = vadd.f32 %v1274, %v1526
    %1528 = vmatprep.mubr.f32.mxu0 0.0
    %1529 = vmatmul.mubr.f32.gmra.mrb[0].mxu0 %v1422
    %v1530 = vpop.f32.mrb[0].mxu0
    %v1531 = vadd.f32 %v1278, %v1530
    %v1532 = vpop.f32.mrb[0].mxu0
    %v1533 = vadd.f32 %v1280, %v1532
    %1534 = vmatprep.mubr.f32.mxu0 0.0
    %1535 = vmatmul.mubr.f32.gmra.mrb[0].mxu0 %v1425
    %v1536 = vpop.f32.mrb[0].mxu0
    %v1537 = vadd.f32 %v1284, %v1536
    %v1538 = vpop.f32.mrb[0].mxu0
    %v1539 = vadd.f32 %v1286, %v1538
    %1540 = vmatprep.mubr.f32.mxu0 0.0
    %1541 = vmatmul.mubr.f32.gmra.mrb[0].mxu0 %v1428
    %v1542 = vpop.f32.mrb[0].mxu0
    %v1543 = vadd.f32 %v1290, %v1542
    %v1544 = vpop.f32.mrb[0].mxu0
    %v1545 = vadd.f32 %v1292, %v1544
    %1546 = vmatprep.mubr.f32.mxu0 0.0
    %1547 = vmatmul.mubr.f32.gmra.mrb[0].mxu0 %v1431
    %v1548 = vpop.f32.mrb[0].mxu0
    %v1549 = vadd.f32 %v1296, %v1548
    %v1550 = vpop.f32.mrb[0].mxu0
    %v1551 = vadd.f32 %v1298, %v1550
    %1552 = vmatprep.mubr.f32.mxu0 0.0
    %1553 = vmatmul.mubr.f32.gmra.mrb[0].mxu0 %v1434
    %v1554 = vpop.f32.mrb[0].mxu0
    %v1555 = vadd.f32 %v1302, %v1554
    %v1556 = vpop.f32.mrb[0].mxu0
    %v1557 = vadd.f32 %v1304, %v1556
    %1558 = vdwg.mxu0
    %1559 = vmatprep.subr.mxu0 0.0
    %1560 = vmatpush1.msra.mxu0 %v1178
    %1561 = vmatprep.subr.mxu0 0.0
    %1562 = vmatpush1.msra.mxu0 %v1444
    %1563 = vmatprep.subr.mxu0 0.0
    %1564 = vmatpush1.msra.mxu0 0.0
    %1565 = vmatprep.subr.mxu0 0.0
    %1566 = vmatpush1.msra.mxu0 0.0
    %1567 = vmatprep.subr.mxu0 0.0
    %1568 = vmatpush1.msra.mxu0 0.0
    %1569 = vmatprep.subr.mxu0 0.0
    %1570 = vmatpush1.msra.mxu0 0.0
    %1571 = vmatprep.subr.mxu0 0.0
    %1572 = vmatpush1.msra.mxu0 0.0
    %1573 = vmatprep.subr.mxu0 0.0
    %1574 = vmatpush1.msra.mxu0 0.0
    %1575 = vmatprep.subr.mxu0 0.0
    %1576 = vmatpush1.msra.mxu0 0.0
    %1577 = vmatprep.subr.mxu0 0.0
    %1578 = vmatpush1.msra.mxu0 0.0
    %1579 = vmatprep.subr.mxu0 0.0
    %1580 = vmatpush1.msra.mxu0 0.0
    %1581 = vmatprep.subr.mxu0 0.0
    %1582 = vmatpush1.msra.mxu0 0.0
    %1583 = vmatprep.subr.mxu0 0.0
    %1584 = vmatpush1.msra.mxu0 0.0
    %1585 = vmatprep.subr.mxu0 0.0
    %1586 = vmatpush1.msra.mxu0 0.0
    %1587 = vmatprep.subr.mxu0 0.0
    %1588 = vmatpush1.msra.mxu0 0.0
    %1589 = vmatprep.subr.mxu0 0.0
    %1590 = vmatpush1.msra.mxu0 0.0
    %1591 = vmatprep.subr.mxu0 0.0
    %1592 = vmatpush1.msra.mxu0 0.0
    %1593 = vmatprep.subr.mxu0 0.0
    %1594 = vmatpush1.msra.mxu0 0.0
    %1595 = vmatprep.subr.mxu0 0.0
    %1596 = vmatpush1.msra.mxu0 0.0
    %1597 = vmatprep.subr.mxu0 0.0
    %1598 = vmatpush1.msra.mxu0 0.0
    %1599 = vmatprep.subr.mxu0 0.0
    %1600 = vmatpush1.msra.mxu0 0.0
    %1601 = vmatprep.subr.mxu0 0.0
    %1602 = vmatpush1.msra.mxu0 0.0
    %1603 = vmatprep.subr.mxu0 0.0
    %1604 = vmatpush1.msra.mxu0 0.0
    %1605 = vmatprep.subr.mxu0 0.0
    %1606 = vmatpush1.msra.mxu0 0.0
    %1607 = vmatprep.subr.mxu0 0.0
    %1608 = vmatpush1.msra.mxu0 0.0
    %1609 = vmatprep.subr.mxu0 0.0
    %1610 = vmatpush1.msra.mxu0 0.0
    %1611 = vmatprep.subr.mxu0 0.0
    %1612 = vmatpush1.msra.mxu0 0.0
    %1613 = vmatprep.subr.mxu0 0.0
    %1614 = vmatpush1.msra.mxu0 0.0
    %1615 = vmatprep.subr.mxu0 0.0
    %1616 = vmatpush1.msra.mxu0 0.0
    %1617 = vmatprep.subr.mxu0 0.0
    %1618 = vmatpush1.msra.mxu0 0.0
    %1619 = vmatprep.subr.mxu0 0.0
    %1620 = vmatpush1.msra.mxu0 0.0
    %1621 = vmatprep.subr.mxu0 0.0
    %1622 = vmatpush1.msra.mxu0 0.0
    %1623 = vmatprep.mubr.f32.mxu0 0.0
    %1624 = vmatmul.mubr.f32.gmra.mrb[0].mxu0 %v1413
    %v1625 = vpop.f32.mrb[0].mxu0
    %v1626 = vadd.f32 %v1373, %v1625
    %v1627 = vpop.f32.mrb[0].mxu0
    %1628 = vmatprep.mubr.f32.mxu0 0.0
    %1629 = vmatmul.mubr.f32.gmra.mrb[0].mxu0 %v1416
    %v1630 = vpop.f32.mrb[0].mxu0
    %v1631 = vadd.f32 %v1378, %v1630
    %v1632 = vpop.f32.mrb[0].mxu0
    %1633 = vmatprep.mubr.f32.mxu0 0.0
    %1634 = vmatmul.mubr.f32.gmra.mrb[0].mxu0 %v1419
    %v1635 = vpop.f32.mrb[0].mxu0
    %v1636 = vadd.f32 %v1383, %v1635
    %v1637 = vpop.f32.mrb[0].mxu0
    %1638 = vmatprep.mubr.f32.mxu0 0.0
    %1639 = vmatmul.mubr.f32.gmra.mrb[0].mxu0 %v1422
    %v1640 = vpop.f32.mrb[0].mxu0
    %v1641 = vadd.f32 %v1388, %v1640
    %v1642 = vpop.f32.mrb[0].mxu0
    %1643 = vmatprep.mubr.f32.mxu0 0.0
    %1644 = vmatmul.mubr.f32.gmra.mrb[0].mxu0 %v1425
    %v1645 = vpop.f32.mrb[0].mxu0
    %v1646 = vadd.f32 %v1393, %v1645
    %v1647 = vpop.f32.mrb[0].mxu0
    %1648 = vmatprep.mubr.f32.mxu0 0.0
    %1649 = vmatmul.mubr.f32.gmra.mrb[0].mxu0 %v1428
    %v1650 = vpop.f32.mrb[0].mxu0
    %v1651 = vadd.f32 %v1398, %v1650
    %v1652 = vpop.f32.mrb[0].mxu0
    %1653 = vmatprep.mubr.f32.mxu0 0.0
    %1654 = vmatmul.mubr.f32.gmra.mrb[0].mxu0 %v1431
    %v1655 = vpop.f32.mrb[0].mxu0
    %v1656 = vadd.f32 %v1403, %v1655
    %v1657 = vpop.f32.mrb[0].mxu0
    %1658 = vmatprep.mubr.f32.mxu0 0.0
    %1659 = vmatmul.mubr.f32.gmra.mrb[0].mxu0 %v1434
    %v1660 = vpop.f32.mrb[0].mxu0
    %v1661 = vadd.f32 %v1408, %v1660
    %v1662 = vpop.f32.mrb[0].mxu0
    %1663 = vdwg.mxu0
    %v1664 = vld [vmem:[#allocation4] sm:$0x7]
    %v1666 = vlaneseq
    %v1667 = vshrl.u32 %v1666, 7
    %v1668 = vsub.s32 0, %v1667
    %v1669 = vrot.slane %v1664, %v1668
    %v1670 = vlaneseq
    %v1671 = vshrl.u32 %v1670, 7
    %v1672 = vsub.s32 1, %v1671
    %v1673 = vrot.slane %v1664, %v1672
    %v1674 = vlaneseq
    %v1675 = vshrl.u32 %v1674, 7
    %v1676 = vsub.s32 2, %v1675
    %v1677 = vrot.slane %v1664, %v1676
    %v1681 = vadd.f32 %v1513, %v1669
    %v1682 = vadd.f32 %v1515, %v1673
    %v1683 = vadd.f32 %v1626, %v1677
    %v1684 = vadd.f32 %v1519, %v1669
    %v1685 = vadd.f32 %v1521, %v1673
    %v1686 = vadd.f32 %v1631, %v1677
    %v1687 = vadd.f32 %v1525, %v1669
    %v1688 = vadd.f32 %v1527, %v1673
    %v1689 = vadd.f32 %v1636, %v1677
    %v1690 = vadd.f32 %v1531, %v1669
    %v1691 = vadd.f32 %v1533, %v1673
    %v1692 = vadd.f32 %v1641, %v1677
    %v1693 = vadd.f32 %v1537, %v1669
    %v1694 = vadd.f32 %v1539, %v1673
    %v1695 = vadd.f32 %v1646, %v1677
    %v1696 = vadd.f32 %v1543, %v1669
    %v1697 = vadd.f32 %v1545, %v1673
    %v1698 = vadd.f32 %v1651, %v1677
    %v1699 = vadd.f32 %v1549, %v1669
    %v1700 = vadd.f32 %v1551, %v1673
    %v1701 = vadd.f32 %v1656, %v1677
    %v1702 = vadd.f32 %v1555, %v1669
    %v1703 = vadd.f32 %v1557, %v1673
    %v1704 = vadd.f32 %v1661, %v1677
    %v1705 = vld [vmem:[#allocation6] sm:$0xff]
    %v1706 = vld [vmem:[#allocation6 + $0x8] sm:$0xff]
    %v1707 = vld [vmem:[#allocation6 + $0x10] sm:$0xff]
    %v1708 = vld [vmem:[#allocation6 + $0x18] sm:$0xff]
    %v1709 = vld [vmem:[#allocation6 + $0x20] sm:$0xff]
    %v1710 = vld [vmem:[#allocation6 + $0x28] sm:$0xff]
    %v1711 = vld [vmem:[#allocation6 + $0x30] sm:$0xff]
    %v1712 = vld [vmem:[#allocation6 + $0x38] sm:$0xff]
    %v1713 = vld [vmem:[#allocation6 + $0x40] sm:$0xff]
    %v1714 = vld [vmem:[#allocation6 + $0x48] sm:$0xff]
    %v1715 = vld [vmem:[#allocation6 + $0x50] sm:$0xff]
    %v1716 = vld [vmem:[#allocation6 + $0x58] sm:$0xff]
    %v1717 = vld [vmem:[#allocation6 + $0x60] sm:$0xff]
    %v1718 = vld [vmem:[#allocation6 + $0x68] sm:$0xff]
    %v1719 = vld [vmem:[#allocation6 + $0x70] sm:$0xff]
    %v1720 = vld [vmem:[#allocation6 + $0x78] sm:$0xff]
    %v1721 = vld [vmem:[#allocation6 + $0x80] sm:$0xff]
    %v1722 = vld [vmem:[#allocation6 + $0x88] sm:$0xff]
    %v1723 = vld [vmem:[#allocation6 + $0x90] sm:$0xff]
    %v1724 = vld [vmem:[#allocation6 + $0x98] sm:$0xff]
    %v1725 = vld [vmem:[#allocation6 + $0xa0] sm:$0xff]
    %v1726 = vld [vmem:[#allocation6 + $0xa8] sm:$0xff]
    %v1727 = vld [vmem:[#allocation6 + $0xb0] sm:$0xff]
    %v1728 = vld [vmem:[#allocation6 + $0xb8] sm:$0xff]
    %v1729 = vld [vmem:[#allocation6 + $0xc0] sm:$0xff]
    %v1730 = vld [vmem:[#allocation6 + $0xc8] sm:$0xff]
    %v1731 = vld [vmem:[#allocation6 + $0xd0] sm:$0xff]
    %v1732 = vld [vmem:[#allocation6 + $0xd8] sm:$0xff]
    %v1733 = vld [vmem:[#allocation6 + $0xe0] sm:$0xff]
    %v1734 = vld [vmem:[#allocation6 + $0xe8] sm:$0xff]
    %v1735 = vld [vmem:[#allocation6 + $0xf0] sm:$0xff]
    %v1736 = vld [vmem:[#allocation6 + $0xf8] sm:$0xff]
    %v1737 = vld [vmem:[#allocation6 + $0x100] sm:$0xff]
    %v1738 = vld [vmem:[#allocation6 + $0x108] sm:$0xff]
    %v1739 = vld [vmem:[#allocation6 + $0x110] sm:$0xff]
    %v1740 = vld [vmem:[#allocation6 + $0x118] sm:$0xff]
    %v1741 = vld [vmem:[#allocation6 + $0x120] sm:$0xff]
    %v1742 = vld [vmem:[#allocation6 + $0x128] sm:$0xff]
    %v1743 = vld [vmem:[#allocation6 + $0x130] sm:$0xff]
    %v1744 = vld [vmem:[#allocation6 + $0x138] sm:$0xff]
    %v1745 = vld [vmem:[#allocation6 + $0x140] sm:$0xff]
    %v1746 = vld [vmem:[#allocation6 + $0x148] sm:$0xff]
    %v1747 = vld [vmem:[#allocation6 + $0x150] sm:$0xff]
    %v1748 = vld [vmem:[#allocation6 + $0x158] sm:$0xff]
    %v1749 = vld [vmem:[#allocation6 + $0x160] sm:$0xff]
    %v1750 = vld [vmem:[#allocation6 + $0x168] sm:$0xff]
    %v1751 = vld [vmem:[#allocation6 + $0x170] sm:$0xff]
    %v1752 = vld [vmem:[#allocation6 + $0x178] sm:$0xff]
    %v1753 = vld [vmem:[#allocation7] sm:$0x7]
    %v1755 = vlaneseq
    %v1756 = vshrl.u32 %v1755, 7
    %v1757 = vsub.s32 0, %v1756
    %v1758 = vrot.slane %v1753, %v1757
    %v1759 = vlaneseq
    %v1760 = vshrl.u32 %v1759, 7
    %v1761 = vsub.s32 1, %v1760
    %v1762 = vrot.slane %v1753, %v1761
    %v1763 = vlaneseq
    %v1764 = vshrl.u32 %v1763, 7
    %v1765 = vsub.s32 2, %v1764
    %v1766 = vrot.slane %v1753, %v1765
    %1770 = vmatprep.subr.mxu0 %v1706
    %1771 = vmatpush1.msra.mxu0 %v1705
    %1772 = vmatprep.subr.mxu0 %v1709
    %1773 = vmatpush1.msra.mxu0 %v1708
    %1774 = vmatprep.subr.mxu0 %v1712
    %1775 = vmatpush1.msra.mxu0 %v1711
    %1776 = vmatprep.subr.mxu0 %v1715
    %1777 = vmatpush1.msra.mxu0 %v1714
    %1778 = vmatprep.subr.mxu0 %v1718
    %1779 = vmatpush1.msra.mxu0 %v1717
    %1780 = vmatprep.subr.mxu0 %v1721
    %1781 = vmatpush1.msra.mxu0 %v1720
    %1782 = vmatprep.subr.mxu0 %v1724
    %1783 = vmatpush1.msra.mxu0 %v1723
    %1784 = vmatprep.subr.mxu0 %v1727
    %1785 = vmatpush1.msra.mxu0 %v1726
    %1786 = vmatprep.subr.mxu0 %v1730
    %1787 = vmatpush1.msra.mxu0 %v1729
    %1788 = vmatprep.subr.mxu0 %v1733
    %1789 = vmatpush1.msra.mxu0 %v1732
    %1790 = vmatprep.subr.mxu0 %v1736
    %1791 = vmatpush1.msra.mxu0 %v1735
    %1792 = vmatprep.subr.mxu0 %v1739
    %1793 = vmatpush1.msra.mxu0 %v1738
    %1794 = vmatprep.subr.mxu0 %v1742
    %1795 = vmatpush1.msra.mxu0 %v1741
    %1796 = vmatprep.subr.mxu0 %v1745
    %1797 = vmatpush1.msra.mxu0 %v1744
    %1798 = vmatprep.subr.mxu0 %v1748
    %1799 = vmatpush1.msra.mxu0 %v1747
    %1800 = vmatprep.subr.mxu0 %v1751
    %1801 = vmatpush1.msra.mxu0 %v1750
    %1802 = vmatprep.subr.mxu0 0.0
    %1803 = vmatpush1.msra.mxu0 0.0
    %1804 = vmatprep.subr.mxu0 0.0
    %1805 = vmatpush1.msra.mxu0 0.0
    %1806 = vmatprep.subr.mxu0 0.0
    %1807 = vmatpush1.msra.mxu0 0.0
    %1808 = vmatprep.subr.mxu0 0.0
    %1809 = vmatpush1.msra.mxu0 0.0
    %1810 = vmatprep.subr.mxu0 0.0
    %1811 = vmatpush1.msra.mxu0 0.0
    %1812 = vmatprep.subr.mxu0 0.0
    %1813 = vmatpush1.msra.mxu0 0.0
    %1814 = vmatprep.subr.mxu0 0.0
    %1815 = vmatpush1.msra.mxu0 0.0
    %1816 = vmatprep.subr.mxu0 0.0
    %1817 = vmatpush1.msra.mxu0 0.0
    %1818 = vmatprep.subr.mxu0 0.0
    %1819 = vmatpush1.msra.mxu0 0.0
    %1820 = vmatprep.subr.mxu0 0.0
    %1821 = vmatpush1.msra.mxu0 0.0
    %1822 = vmatprep.subr.mxu0 0.0
    %1823 = vmatpush1.msra.mxu0 0.0
    %1824 = vmatprep.subr.mxu0 0.0
    %1825 = vmatpush1.msra.mxu0 0.0
    %1826 = vmatprep.subr.mxu0 0.0
    %1827 = vmatpush1.msra.mxu0 0.0
    %1828 = vmatprep.subr.mxu0 0.0
    %1829 = vmatpush1.msra.mxu0 0.0
    %1830 = vmatprep.subr.mxu0 0.0
    %1831 = vmatpush1.msra.mxu0 0.0
    %1832 = vmatprep.subr.mxu0 0.0
    %1833 = vmatpush1.msra.mxu0 0.0
    %1834 = vmatprep.mubr.f32.mxu0 0.0
    %1835 = vmatmul.mubr.f32.gmra.mrb[0].mxu0 0.0
    %v1836 = vpop.f32.mrb[0].mxu0
    %v1837 = vadd.f32 %v1758, %v1836
    %v1838 = vpop.f32.mrb[0].mxu0
    %v1839 = vadd.f32 %v1762, %v1838
    %1840 = vdwg.mxu0
    %1841 = vmatprep.subr.mxu0 0.0
    %1842 = vmatpush1.msra.mxu0 %v1707
    %1843 = vmatprep.subr.mxu0 0.0
    %1844 = vmatpush1.msra.mxu0 %v1710
    %1845 = vmatprep.subr.mxu0 0.0
    %1846 = vmatpush1.msra.mxu0 %v1713
    %1847 = vmatprep.subr.mxu0 0.0
    %1848 = vmatpush1.msra.mxu0 %v1716
    %1849 = vmatprep.subr.mxu0 0.0
    %1850 = vmatpush1.msra.mxu0 %v1719
    %1851 = vmatprep.subr.mxu0 0.0
    %1852 = vmatpush1.msra.mxu0 %v1722
    %1853 = vmatprep.subr.mxu0 0.0
    %1854 = vmatpush1.msra.mxu0 %v1725
    %1855 = vmatprep.subr.mxu0 0.0
    %1856 = vmatpush1.msra.mxu0 %v1728
    %1857 = vmatprep.subr.mxu0 0.0
    %1858 = vmatpush1.msra.mxu0 %v1731
    %1859 = vmatprep.subr.mxu0 0.0
    %1860 = vmatpush1.msra.mxu0 %v1734
    %1861 = vmatprep.subr.mxu0 0.0
    %1862 = vmatpush1.msra.mxu0 %v1737
    %1863 = vmatprep.subr.mxu0 0.0
    %1864 = vmatpush1.msra.mxu0 %v1740
    %1865 = vmatprep.subr.mxu0 0.0
    %1866 = vmatpush1.msra.mxu0 %v1743
    %1867 = vmatprep.subr.mxu0 0.0
    %1868 = vmatpush1.msra.mxu0 %v1746
    %1869 = vmatprep.subr.mxu0 0.0
    %1870 = vmatpush1.msra.mxu0 %v1749
    %1871 = vmatprep.subr.mxu0 0.0
    %1872 = vmatpush1.msra.mxu0 %v1752
    %1873 = vmatprep.subr.mxu0 0.0
    %1874 = vmatpush1.msra.mxu0 0.0
    %1875 = vmatprep.subr.mxu0 0.0
    %1876 = vmatpush1.msra.mxu0 0.0
    %1877 = vmatprep.subr.mxu0 0.0
    %1878 = vmatpush1.msra.mxu0 0.0
    %1879 = vmatprep.subr.mxu0 0.0
    %1880 = vmatpush1.msra.mxu0 0.0
    %1881 = vmatprep.subr.mxu0 0.0
    %1882 = vmatpush1.msra.mxu0 0.0
    %1883 = vmatprep.subr.mxu0 0.0
    %1884 = vmatpush1.msra.mxu0 0.0
    %1885 = vmatprep.subr.mxu0 0.0
    %1886 = vmatpush1.msra.mxu0 0.0
    %1887 = vmatprep.subr.mxu0 0.0
    %1888 = vmatpush1.msra.mxu0 0.0
    %1889 = vmatprep.subr.mxu0 0.0
    %1890 = vmatpush1.msra.mxu0 0.0
    %1891 = vmatprep.subr.mxu0 0.0
    %1892 = vmatpush1.msra.mxu0 0.0
    %1893 = vmatprep.subr.mxu0 0.0
    %1894 = vmatpush1.msra.mxu0 0.0
    %1895 = vmatprep.subr.mxu0 0.0
    %1896 = vmatpush1.msra.mxu0 0.0
    %1897 = vmatprep.subr.mxu0 0.0
    %1898 = vmatpush1.msra.mxu0 0.0
    %1899 = vmatprep.subr.mxu0 0.0
    %1900 = vmatpush1.msra.mxu0 0.0
    %1901 = vmatprep.subr.mxu0 0.0
    %1902 = vmatpush1.msra.mxu0 0.0
    %1903 = vmatprep.subr.mxu0 0.0
    %1904 = vmatpush1.msra.mxu0 0.0
    %1905 = vmatprep.mubr.f32.mxu0 0.0
    %1906 = vmatmul.mubr.f32.gmra.mrb[0].mxu0 0.0
    %v1907 = vpop.f32.mrb[0].mxu0
    %v1908 = vadd.f32 %v1766, %v1907
    %v1909 = vpop.f32.mrb[0].mxu0
    %1910 = vdwg.mxu0
    %v1911 = vadd.f32 %v1681, %v1837
    %v1912 = vxor.u32 %v1911, 2147483648
    %v1913 = vmul.f32 %v1912, 1.442695
    %v1914 = vpow.pop %v1913
    %v1915 = vadd.f32 %v1914, 1.0
    %v1916 = vrcp.pop %v1915
    %v1917 = vmul.f32 1.0, %v1916
    %v1918 = vadd.f32 %v1682, %v1839
    %v1919 = vxor.u32 %v1918, 2147483648
    %v1920 = vmul.f32 %v1919, 1.442695
    %v1921 = vpow.pop %v1920
    %v1922 = vadd.f32 %v1921, 1.0
    %v1923 = vrcp.pop %v1922
    %v1924 = vmul.f32 1.0, %v1923
    %v1925 = vmul.f32 %v1917, %v1908
    %v1926 = vadd.f32 %v1683, %v1925
    %v1927 = vtanh.pop %v1926
    %v1928 = vsub.f32 1.0, %v1924
    %v1929 = vmul.f32 %v1928, %v1927
    %v1930 = vmul.f32 %v1924, 0.0
    %v1931 = vadd.f32 %v1929, %v1930
    %1932 = vmatprep.subr.mxu0 %v1706
    %1933 = vmatpush1.msra.mxu0 %v1705
    %1934 = vmatprep.subr.mxu0 %v1709
    %1935 = vmatpush1.msra.mxu0 %v1708
    %1936 = vmatprep.subr.mxu0 %v1712
    %1937 = vmatpush1.msra.mxu0 %v1711
    %1938 = vmatprep.subr.mxu0 %v1715
    %1939 = vmatpush1.msra.mxu0 %v1714
    %1940 = vmatprep.subr.mxu0 %v1718
    %1941 = vmatpush1.msra.mxu0 %v1717
    %1942 = vmatprep.subr.mxu0 %v1721
    %1943 = vmatpush1.msra.mxu0 %v1720
    %1944 = vmatprep.subr.mxu0 %v1724
    %1945 = vmatpush1.msra.mxu0 %v1723
    %1946 = vmatprep.subr.mxu0 %v1727
    %1947 = vmatpush1.msra.mxu0 %v1726
    %1948 = vmatprep.subr.mxu0 %v1730
    %1949 = vmatpush1.msra.mxu0 %v1729
    %1950 = vmatprep.subr.mxu0 %v1733
    %1951 = vmatpush1.msra.mxu0 %v1732
    %1952 = vmatprep.subr.mxu0 %v1736
    %1953 = vmatpush1.msra.mxu0 %v1735
    %1954 = vmatprep.subr.mxu0 %v1739
    %1955 = vmatpush1.msra.mxu0 %v1738
    %1956 = vmatprep.subr.mxu0 %v1742
    %1957 = vmatpush1.msra.mxu0 %v1741
    %1958 = vmatprep.subr.mxu0 %v1745
    %1959 = vmatpush1.msra.mxu0 %v1744
    %1960 = vmatprep.subr.mxu0 %v1748
    %1961 = vmatpush1.msra.mxu0 %v1747
    %1962 = vmatprep.subr.mxu0 %v1751
    %1963 = vmatpush1.msra.mxu0 %v1750
    %1964 = vmatprep.subr.mxu0 0.0
    %1965 = vmatpush1.msra.mxu0 0.0
    %1966 = vmatprep.subr.mxu0 0.0
    %1967 = vmatpush1.msra.mxu0 0.0
    %1968 = vmatprep.subr.mxu0 0.0
    %1969 = vmatpush1.msra.mxu0 0.0
    %1970 = vmatprep.subr.mxu0 0.0
    %1971 = vmatpush1.msra.mxu0 0.0
    %1972 = vmatprep.subr.mxu0 0.0
    %1973 = vmatpush1.msra.mxu0 0.0
    %1974 = vmatprep.subr.mxu0 0.0
    %1975 = vmatpush1.msra.mxu0 0.0
    %1976 = vmatprep.subr.mxu0 0.0
    %1977 = vmatpush1.msra.mxu0 0.0
    %1978 = vmatprep.subr.mxu0 0.0
    %1979 = vmatpush1.msra.mxu0 0.0
    %1980 = vmatprep.subr.mxu0 0.0
    %1981 = vmatpush1.msra.mxu0 0.0
    %1982 = vmatprep.subr.mxu0 0.0
    %1983 = vmatpush1.msra.mxu0 0.0
    %1984 = vmatprep.subr.mxu0 0.0
    %1985 = vmatpush1.msra.mxu0 0.0
    %1986 = vmatprep.subr.mxu0 0.0
    %1987 = vmatpush1.msra.mxu0 0.0
    %1988 = vmatprep.subr.mxu0 0.0
    %1989 = vmatpush1.msra.mxu0 0.0
    %1990 = vmatprep.subr.mxu0 0.0
    %1991 = vmatpush1.msra.mxu0 0.0
    %1992 = vmatprep.subr.mxu0 0.0
    %1993 = vmatpush1.msra.mxu0 0.0
    %1994 = vmatprep.subr.mxu0 0.0
    %1995 = vmatpush1.msra.mxu0 0.0
    %1996 = vmatprep.mubr.f32.mxu0 0.0
    %1997 = vmatmul.mubr.f32.gmra.mrb[0].mxu0 %v1931
    %v1998 = vpop.f32.mrb[0].mxu0
    %v1999 = vadd.f32 %v1758, %v1998
    %v2000 = vpop.f32.mrb[0].mxu0
    %v2001 = vadd.f32 %v1762, %v2000
    %2002 = vdwg.mxu0
    %2003 = vmatprep.subr.mxu0 0.0
    %2004 = vmatpush1.msra.mxu0 %v1707
    %2005 = vmatprep.subr.mxu0 0.0
    %2006 = vmatpush1.msra.mxu0 %v1710
    %2007 = vmatprep.subr.mxu0 0.0
    %2008 = vmatpush1.msra.mxu0 %v1713
    %2009 = vmatprep.subr.mxu0 0.0
    %2010 = vmatpush1.msra.mxu0 %v1716
    %2011 = vmatprep.subr.mxu0 0.0
    %2012 = vmatpush1.msra.mxu0 %v1719
    %2013 = vmatprep.subr.mxu0 0.0
    %2014 = vmatpush1.msra.mxu0 %v1722
    %2015 = vmatprep.subr.mxu0 0.0
    %2016 = vmatpush1.msra.mxu0 %v1725
    %2017 = vmatprep.subr.mxu0 0.0
    %2018 = vmatpush1.msra.mxu0 %v1728
    %2019 = vmatprep.subr.mxu0 0.0
    %2020 = vmatpush1.msra.mxu0 %v1731
    %2021 = vmatprep.subr.mxu0 0.0
    %2022 = vmatpush1.msra.mxu0 %v1734
    %2023 = vmatprep.subr.mxu0 0.0
    %2024 = vmatpush1.msra.mxu0 %v1737
    %2025 = vmatprep.subr.mxu0 0.0
    %2026 = vmatpush1.msra.mxu0 %v1740
    %2027 = vmatprep.subr.mxu0 0.0
    %2028 = vmatpush1.msra.mxu0 %v1743
    %2029 = vmatprep.subr.mxu0 0.0
    %2030 = vmatpush1.msra.mxu0 %v1746
    %2031 = vmatprep.subr.mxu0 0.0
    %2032 = vmatpush1.msra.mxu0 %v1749
    %2033 = vmatprep.subr.mxu0 0.0
    %2034 = vmatpush1.msra.mxu0 %v1752
    %2035 = vmatprep.subr.mxu0 0.0
    %2036 = vmatpush1.msra.mxu0 0.0
    %2037 = vmatprep.subr.mxu0 0.0
    %2038 = vmatpush1.msra.mxu0 0.0
    %2039 = vmatprep.subr.mxu0 0.0
    %2040 = vmatpush1.msra.mxu0 0.0
    %2041 = vmatprep.subr.mxu0 0.0
    %2042 = vmatpush1.msra.mxu0 0.0
    %2043 = vmatprep.subr.mxu0 0.0
    %2044 = vmatpush1.msra.mxu0 0.0
    %2045 = vmatprep.subr.mxu0 0.0
    %2046 = vmatpush1.msra.mxu0 0.0
    %2047 = vmatprep.subr.mxu0 0.0
    %2048 = vmatpush1.msra.mxu0 0.0
    %2049 = vmatprep.subr.mxu0 0.0
    %2050 = vmatpush1.msra.mxu0 0.0
    %2051 = vmatprep.subr.mxu0 0.0
    %2052 = vmatpush1.msra.mxu0 0.0
    %2053 = vmatprep.subr.mxu0 0.0
    %2054 = vmatpush1.msra.mxu0 0.0
    %2055 = vmatprep.subr.mxu0 0.0
    %2056 = vmatpush1.msra.mxu0 0.0
    %2057 = vmatprep.subr.mxu0 0.0
    %2058 = vmatpush1.msra.mxu0 0.0
    %2059 = vmatprep.subr.mxu0 0.0
    %2060 = vmatpush1.msra.mxu0 0.0
    %2061 = vmatprep.subr.mxu0 0.0
    %2062 = vmatpush1.msra.mxu0 0.0
    %2063 = vmatprep.subr.mxu0 0.0
    %2064 = vmatpush1.msra.mxu0 0.0
    %2065 = vmatprep.subr.mxu0 0.0
    %2066 = vmatpush1.msra.mxu0 0.0
    %2067 = vmatprep.mubr.f32.mxu0 0.0
    %2068 = vmatmul.mubr.f32.gmra.mrb[0].mxu0 %v1931
    %v2069 = vpop.f32.mrb[0].mxu0
    %v2070 = vadd.f32 %v1766, %v2069
    %v2071 = vpop.f32.mrb[0].mxu0
    %2072 = vdwg.mxu0
    %v2073 = vadd.f32 %v1684, %v1999
    %v2074 = vxor.u32 %v2073, 2147483648
    %v2075 = vmul.f32 %v2074, 1.442695
    %v2076 = vpow.pop %v2075
    %v2077 = vadd.f32 %v2076, 1.0
    %v2078 = vrcp.pop %v2077
    %v2079 = vmul.f32 1.0, %v2078
    %v2080 = vadd.f32 %v1685, %v2001
    %v2081 = vxor.u32 %v2080, 2147483648
    %v2082 = vmul.f32 %v2081, 1.442695
    %v2083 = vpow.pop %v2082
    %v2084 = vadd.f32 %v2083, 1.0
    %v2085 = vrcp.pop %v2084
    %v2086 = vmul.f32 1.0, %v2085
    %v2087 = vmul.f32 %v2079, %v2070
    %v2088 = vadd.f32 %v1686, %v2087
    %v2089 = vtanh.pop %v2088
    %v2090 = vsub.f32 1.0, %v2086
    %v2091 = vmul.f32 %v2090, %v2089
    %v2092 = vmul.f32 %v2086, %v1931
    %v2093 = vadd.f32 %v2091, %v2092
    %2094 = vmatprep.subr.mxu0 %v1706
    %2095 = vmatpush1.msra.mxu0 %v1705
    %2096 = vmatprep.subr.mxu0 %v1709
    %2097 = vmatpush1.msra.mxu0 %v1708
    %2098 = vmatprep.subr.mxu0 %v1712
    %2099 = vmatpush1.msra.mxu0 %v1711
    %2100 = vmatprep.subr.mxu0 %v1715
    %2101 = vmatpush1.msra.mxu0 %v1714
    %2102 = vmatprep.subr.mxu0 %v1718
    %2103 = vmatpush1.msra.mxu0 %v1717
    %2104 = vmatprep.subr.mxu0 %v1721
    %2105 = vmatpush1.msra.mxu0 %v1720
    %2106 = vmatprep.subr.mxu0 %v1724
    %2107 = vmatpush1.msra.mxu0 %v1723
    %2108 = vmatprep.subr.mxu0 %v1727
    %2109 = vmatpush1.msra.mxu0 %v1726
    %2110 = vmatprep.subr.mxu0 %v1730
    %2111 = vmatpush1.msra.mxu0 %v1729
    %2112 = vmatprep.subr.mxu0 %v1733
    %2113 = vmatpush1.msra.mxu0 %v1732
    %2114 = vmatprep.subr.mxu0 %v1736
    %2115 = vmatpush1.msra.mxu0 %v1735
    %2116 = vmatprep.subr.mxu0 %v1739
    %2117 = vmatpush1.msra.mxu0 %v1738
    %2118 = vmatprep.subr.mxu0 %v1742
    %2119 = vmatpush1.msra.mxu0 %v1741
    %2120 = vmatprep.subr.mxu0 %v1745
    %2121 = vmatpush1.msra.mxu0 %v1744
    %2122 = vmatprep.subr.mxu0 %v1748
    %2123 = vmatpush1.msra.mxu0 %v1747
    %2124 = vmatprep.subr.mxu0 %v1751
    %2125 = vmatpush1.msra.mxu0 %v1750
    %2126 = vmatprep.subr.mxu0 0.0
    %2127 = vmatpush1.msra.mxu0 0.0
    %2128 = vmatprep.subr.mxu0 0.0
    %2129 = vmatpush1.msra.mxu0 0.0
    %2130 = vmatprep.subr.mxu0 0.0
    %2131 = vmatpush1.msra.mxu0 0.0
    %2132 = vmatprep.subr.mxu0 0.0
    %2133 = vmatpush1.msra.mxu0 0.0
    %2134 = vmatprep.subr.mxu0 0.0
    %2135 = vmatpush1.msra.mxu0 0.0
    %2136 = vmatprep.subr.mxu0 0.0
    %2137 = vmatpush1.msra.mxu0 0.0
    %2138 = vmatprep.subr.mxu0 0.0
    %2139 = vmatpush1.msra.mxu0 0.0
    %2140 = vmatprep.subr.mxu0 0.0
    %2141 = vmatpush1.msra.mxu0 0.0
    %2142 = vmatprep.subr.mxu0 0.0
    %2143 = vmatpush1.msra.mxu0 0.0
    %2144 = vmatprep.subr.mxu0 0.0
    %2145 = vmatpush1.msra.mxu0 0.0
    %2146 = vmatprep.subr.mxu0 0.0
    %2147 = vmatpush1.msra.mxu0 0.0
    %2148 = vmatprep.subr.mxu0 0.0
    %2149 = vmatpush1.msra.mxu0 0.0
    %2150 = vmatprep.subr.mxu0 0.0
    %2151 = vmatpush1.msra.mxu0 0.0
    %2152 = vmatprep.subr.mxu0 0.0
    %2153 = vmatpush1.msra.mxu0 0.0
    %2154 = vmatprep.subr.mxu0 0.0
    %2155 = vmatpush1.msra.mxu0 0.0
    %2156 = vmatprep.subr.mxu0 0.0
    %2157 = vmatpush1.msra.mxu0 0.0
    %2158 = vmatprep.mubr.f32.mxu0 0.0
    %2159 = vmatmul.mubr.f32.gmra.mrb[0].mxu0 %v2093
    %v2160 = vpop.f32.mrb[0].mxu0
    %v2161 = vadd.f32 %v1758, %v2160
    %v2162 = vpop.f32.mrb[0].mxu0
    %v2163 = vadd.f32 %v1762, %v2162
    %2164 = vdwg.mxu0
    %2165 = vmatprep.subr.mxu0 0.0
    %2166 = vmatpush1.msra.mxu0 %v1707
    %2167 = vmatprep.subr.mxu0 0.0
    %2168 = vmatpush1.msra.mxu0 %v1710
    %2169 = vmatprep.subr.mxu0 0.0
    %2170 = vmatpush1.msra.mxu0 %v1713
    %2171 = vmatprep.subr.mxu0 0.0
    %2172 = vmatpush1.msra.mxu0 %v1716
    %2173 = vmatprep.subr.mxu0 0.0
    %2174 = vmatpush1.msra.mxu0 %v1719
    %2175 = vmatprep.subr.mxu0 0.0
    %2176 = vmatpush1.msra.mxu0 %v1722
    %2177 = vmatprep.subr.mxu0 0.0
    %2178 = vmatpush1.msra.mxu0 %v1725
    %2179 = vmatprep.subr.mxu0 0.0
    %2180 = vmatpush1.msra.mxu0 %v1728
    %2181 = vmatprep.subr.mxu0 0.0
    %2182 = vmatpush1.msra.mxu0 %v1731
    %2183 = vmatprep.subr.mxu0 0.0
    %2184 = vmatpush1.msra.mxu0 %v1734
    %2185 = vmatprep.subr.mxu0 0.0
    %2186 = vmatpush1.msra.mxu0 %v1737
    %2187 = vmatprep.subr.mxu0 0.0
    %2188 = vmatpush1.msra.mxu0 %v1740
    %2189 = vmatprep.subr.mxu0 0.0
    %2190 = vmatpush1.msra.mxu0 %v1743
    %2191 = vmatprep.subr.mxu0 0.0
    %2192 = vmatpush1.msra.mxu0 %v1746
    %2193 = vmatprep.subr.mxu0 0.0
    %2194 = vmatpush1.msra.mxu0 %v1749
    %2195 = vmatprep.subr.mxu0 0.0
    %2196 = vmatpush1.msra.mxu0 %v1752
    %2197 = vmatprep.subr.mxu0 0.0
    %2198 = vmatpush1.msra.mxu0 0.0
    %2199 = vmatprep.subr.mxu0 0.0
    %2200 = vmatpush1.msra.mxu0 0.0
    %2201 = vmatprep.subr.mxu0 0.0
    %2202 = vmatpush1.msra.mxu0 0.0
    %2203 = vmatprep.subr.mxu0 0.0
    %2204 = vmatpush1.msra.mxu0 0.0
    %2205 = vmatprep.subr.mxu0 0.0
    %2206 = vmatpush1.msra.mxu0 0.0
    %2207 = vmatprep.subr.mxu0 0.0
    %2208 = vmatpush1.msra.mxu0 0.0
    %2209 = vmatprep.subr.mxu0 0.0
    %2210 = vmatpush1.msra.mxu0 0.0
    %2211 = vmatprep.subr.mxu0 0.0
    %2212 = vmatpush1.msra.mxu0 0.0
    %2213 = vmatprep.subr.mxu0 0.0
    %2214 = vmatpush1.msra.mxu0 0.0
    %2215 = vmatprep.subr.mxu0 0.0
    %2216 = vmatpush1.msra.mxu0 0.0
    %2217 = vmatprep.subr.mxu0 0.0
    %2218 = vmatpush1.msra.mxu0 0.0
    %2219 = vmatprep.subr.mxu0 0.0
    %2220 = vmatpush1.msra.mxu0 0.0
    %2221 = vmatprep.subr.mxu0 0.0
    %2222 = vmatpush1.msra.mxu0 0.0
    %2223 = vmatprep.subr.mxu0 0.0
    %2224 = vmatpush1.msra.mxu0 0.0
    %2225 = vmatprep.subr.mxu0 0.0
    %2226 = vmatpush1.msra.mxu0 0.0
    %2227 = vmatprep.subr.mxu0 0.0
    %2228 = vmatpush1.msra.mxu0 0.0
    %2229 = vmatprep.mubr.f32.mxu0 0.0
    %2230 = vmatmul.mubr.f32.gmra.mrb[0].mxu0 %v2093
    %v2231 = vpop.f32.mrb[0].mxu0
    %v2232 = vadd.f32 %v1766, %v2231
    %v2233 = vpop.f32.mrb[0].mxu0
    %2234 = vdwg.mxu0
    %v2235 = vadd.f32 %v1687, %v2161
    %v2236 = vxor.u32 %v2235, 2147483648
    %v2237 = vmul.f32 %v2236, 1.442695
    %v2238 = vpow.pop %v2237
    %v2239 = vadd.f32 %v2238, 1.0
    %v2240 = vrcp.pop %v2239
    %v2241 = vmul.f32 1.0, %v2240
    %v2242 = vadd.f32 %v1688, %v2163
    %v2243 = vxor.u32 %v2242, 2147483648
    %v2244 = vmul.f32 %v2243, 1.442695
    %v2245 = vpow.pop %v2244
    %v2246 = vadd.f32 %v2245, 1.0
    %v2247 = vrcp.pop %v2246
    %v2248 = vmul.f32 1.0, %v2247
    %v2249 = vmul.f32 %v2241, %v2232
    %v2250 = vadd.f32 %v1689, %v2249
    %v2251 = vtanh.pop %v2250
    %v2252 = vsub.f32 1.0, %v2248
    %v2253 = vmul.f32 %v2252, %v2251
    %v2254 = vmul.f32 %v2248, %v2093
    %v2255 = vadd.f32 %v2253, %v2254
    %2256 = vmatprep.subr.mxu0 %v1706
    %2257 = vmatpush1.msra.mxu0 %v1705
    %2258 = vmatprep.subr.mxu0 %v1709
    %2259 = vmatpush1.msra.mxu0 %v1708
    %2260 = vmatprep.subr.mxu0 %v1712
    %2261 = vmatpush1.msra.mxu0 %v1711
    %2262 = vmatprep.subr.mxu0 %v1715
    %2263 = vmatpush1.msra.mxu0 %v1714
    %2264 = vmatprep.subr.mxu0 %v1718
    %2265 = vmatpush1.msra.mxu0 %v1717
    %2266 = vmatprep.subr.mxu0 %v1721
    %2267 = vmatpush1.msra.mxu0 %v1720
    %2268 = vmatprep.subr.mxu0 %v1724
    %2269 = vmatpush1.msra.mxu0 %v1723
    %2270 = vmatprep.subr.mxu0 %v1727
    %2271 = vmatpush1.msra.mxu0 %v1726
    %2272 = vmatprep.subr.mxu0 %v1730
    %2273 = vmatpush1.msra.mxu0 %v1729
    %2274 = vmatprep.subr.mxu0 %v1733
    %2275 = vmatpush1.msra.mxu0 %v1732
    %2276 = vmatprep.subr.mxu0 %v1736
    %2277 = vmatpush1.msra.mxu0 %v1735
    %2278 = vmatprep.subr.mxu0 %v1739
    %2279 = vmatpush1.msra.mxu0 %v1738
    %2280 = vmatprep.subr.mxu0 %v1742
    %2281 = vmatpush1.msra.mxu0 %v1741
    %2282 = vmatprep.subr.mxu0 %v1745
    %2283 = vmatpush1.msra.mxu0 %v1744
    %2284 = vmatprep.subr.mxu0 %v1748
    %2285 = vmatpush1.msra.mxu0 %v1747
    %2286 = vmatprep.subr.mxu0 %v1751
    %2287 = vmatpush1.msra.mxu0 %v1750
    %2288 = vmatprep.subr.mxu0 0.0
    %2289 = vmatpush1.msra.mxu0 0.0
    %2290 = vmatprep.subr.mxu0 0.0
    %2291 = vmatpush1.msra.mxu0 0.0
    %2292 = vmatprep.subr.mxu0 0.0
    %2293 = vmatpush1.msra.mxu0 0.0
    %2294 = vmatprep.subr.mxu0 0.0
    %2295 = vmatpush1.msra.mxu0 0.0
    %2296 = vmatprep.subr.mxu0 0.0
    %2297 = vmatpush1.msra.mxu0 0.0
    %2298 = vmatprep.subr.mxu0 0.0
    %2299 = vmatpush1.msra.mxu0 0.0
    %2300 = vmatprep.subr.mxu0 0.0
    %2301 = vmatpush1.msra.mxu0 0.0
    %2302 = vmatprep.subr.mxu0 0.0
    %2303 = vmatpush1.msra.mxu0 0.0
    %2304 = vmatprep.subr.mxu0 0.0
    %2305 = vmatpush1.msra.mxu0 0.0
    %2306 = vmatprep.subr.mxu0 0.0
    %2307 = vmatpush1.msra.mxu0 0.0
    %2308 = vmatprep.subr.mxu0 0.0
    %2309 = vmatpush1.msra.mxu0 0.0
    %2310 = vmatprep.subr.mxu0 0.0
    %2311 = vmatpush1.msra.mxu0 0.0
    %2312 = vmatprep.subr.mxu0 0.0
    %2313 = vmatpush1.msra.mxu0 0.0
    %2314 = vmatprep.subr.mxu0 0.0
    %2315 = vmatpush1.msra.mxu0 0.0
    %2316 = vmatprep.subr.mxu0 0.0
    %2317 = vmatpush1.msra.mxu0 0.0
    %2318 = vmatprep.subr.mxu0 0.0
    %2319 = vmatpush1.msra.mxu0 0.0
    %2320 = vmatprep.mubr.f32.mxu0 0.0
    %2321 = vmatmul.mubr.f32.gmra.mrb[0].mxu0 %v2255
    %v2322 = vpop.f32.mrb[0].mxu0
    %v2323 = vadd.f32 %v1758, %v2322
    %v2324 = vpop.f32.mrb[0].mxu0
    %v2325 = vadd.f32 %v1762, %v2324
    %2326 = vdwg.mxu0
    %2327 = vmatprep.subr.mxu0 0.0
    %2328 = vmatpush1.msra.mxu0 %v1707
    %2329 = vmatprep.subr.mxu0 0.0
    %2330 = vmatpush1.msra.mxu0 %v1710
    %2331 = vmatprep.subr.mxu0 0.0
    %2332 = vmatpush1.msra.mxu0 %v1713
    %2333 = vmatprep.subr.mxu0 0.0
    %2334 = vmatpush1.msra.mxu0 %v1716
    %2335 = vmatprep.subr.mxu0 0.0
    %2336 = vmatpush1.msra.mxu0 %v1719
    %2337 = vmatprep.subr.mxu0 0.0
    %2338 = vmatpush1.msra.mxu0 %v1722
    %2339 = vmatprep.subr.mxu0 0.0
    %2340 = vmatpush1.msra.mxu0 %v1725
    %2341 = vmatprep.subr.mxu0 0.0
    %2342 = vmatpush1.msra.mxu0 %v1728
    %2343 = vmatprep.subr.mxu0 0.0
    %2344 = vmatpush1.msra.mxu0 %v1731
    %2345 = vmatprep.subr.mxu0 0.0
    %2346 = vmatpush1.msra.mxu0 %v1734
    %2347 = vmatprep.subr.mxu0 0.0
    %2348 = vmatpush1.msra.mxu0 %v1737
    %2349 = vmatprep.subr.mxu0 0.0
    %2350 = vmatpush1.msra.mxu0 %v1740
    %2351 = vmatprep.subr.mxu0 0.0
    %2352 = vmatpush1.msra.mxu0 %v1743
    %2353 = vmatprep.subr.mxu0 0.0
    %2354 = vmatpush1.msra.mxu0 %v1746
    %2355 = vmatprep.subr.mxu0 0.0
    %2356 = vmatpush1.msra.mxu0 %v1749
    %2357 = vmatprep.subr.mxu0 0.0
    %2358 = vmatpush1.msra.mxu0 %v1752
    %2359 = vmatprep.subr.mxu0 0.0
    %2360 = vmatpush1.msra.mxu0 0.0
    %2361 = vmatprep.subr.mxu0 0.0
    %2362 = vmatpush1.msra.mxu0 0.0
    %2363 = vmatprep.subr.mxu0 0.0
    %2364 = vmatpush1.msra.mxu0 0.0
    %2365 = vmatprep.subr.mxu0 0.0
    %2366 = vmatpush1.msra.mxu0 0.0
    %2367 = vmatprep.subr.mxu0 0.0
    %2368 = vmatpush1.msra.mxu0 0.0
    %2369 = vmatprep.subr.mxu0 0.0
    %2370 = vmatpush1.msra.mxu0 0.0
    %2371 = vmatprep.subr.mxu0 0.0
    %2372 = vmatpush1.msra.mxu0 0.0
    %2373 = vmatprep.subr.mxu0 0.0
    %2374 = vmatpush1.msra.mxu0 0.0
    %2375 = vmatprep.subr.mxu0 0.0
    %2376 = vmatpush1.msra.mxu0 0.0
    %2377 = vmatprep.subr.mxu0 0.0
    %2378 = vmatpush1.msra.mxu0 0.0
    %2379 = vmatprep.subr.mxu0 0.0
    %2380 = vmatpush1.msra.mxu0 0.0
    %2381 = vmatprep.subr.mxu0 0.0
    %2382 = vmatpush1.msra.mxu0 0.0
    %2383 = vmatprep.subr.mxu0 0.0
    %2384 = vmatpush1.msra.mxu0 0.0
    %2385 = vmatprep.subr.mxu0 0.0
    %2386 = vmatpush1.msra.mxu0 0.0
    %2387 = vmatprep.subr.mxu0 0.0
    %2388 = vmatpush1.msra.mxu0 0.0
    %2389 = vmatprep.subr.mxu0 0.0
    %2390 = vmatpush1.msra.mxu0 0.0
    %2391 = vmatprep.mubr.f32.mxu0 0.0
    %2392 = vmatmul.mubr.f32.gmra.mrb[0].mxu0 %v2255
    %v2393 = vpop.f32.mrb[0].mxu0
    %v2394 = vadd.f32 %v1766, %v2393
    %v2395 = vpop.f32.mrb[0].mxu0
    %2396 = vdwg.mxu0
    %v2397 = vadd.f32 %v1690, %v2323
    %v2398 = vxor.u32 %v2397, 2147483648
    %v2399 = vmul.f32 %v2398, 1.442695
    %v2400 = vpow.pop %v2399
    %v2401 = vadd.f32 %v2400, 1.0
    %v2402 = vrcp.pop %v2401
    %v2403 = vmul.f32 1.0, %v2402
    %v2404 = vadd.f32 %v1691, %v2325
    %v2405 = vxor.u32 %v2404, 2147483648
    %v2406 = vmul.f32 %v2405, 1.442695
    %v2407 = vpow.pop %v2406
    %v2408 = vadd.f32 %v2407, 1.0
    %v2409 = vrcp.pop %v2408
    %v2410 = vmul.f32 1.0, %v2409
    %v2411 = vmul.f32 %v2403, %v2394
    %v2412 = vadd.f32 %v1692, %v2411
    %v2413 = vtanh.pop %v2412
    %v2414 = vsub.f32 1.0, %v2410
    %v2415 = vmul.f32 %v2414, %v2413
    %v2416 = vmul.f32 %v2410, %v2255
    %v2417 = vadd.f32 %v2415, %v2416
    %2418 = vmatprep.subr.mxu0 %v1706
    %2419 = vmatpush1.msra.mxu0 %v1705
    %2420 = vmatprep.subr.mxu0 %v1709
    %2421 = vmatpush1.msra.mxu0 %v1708
    %2422 = vmatprep.subr.mxu0 %v1712
    %2423 = vmatpush1.msra.mxu0 %v1711
    %2424 = vmatprep.subr.mxu0 %v1715
    %2425 = vmatpush1.msra.mxu0 %v1714
    %2426 = vmatprep.subr.mxu0 %v1718
    %2427 = vmatpush1.msra.mxu0 %v1717
    %2428 = vmatprep.subr.mxu0 %v1721
    %2429 = vmatpush1.msra.mxu0 %v1720
    %2430 = vmatprep.subr.mxu0 %v1724
    %2431 = vmatpush1.msra.mxu0 %v1723
    %2432 = vmatprep.subr.mxu0 %v1727
    %2433 = vmatpush1.msra.mxu0 %v1726
    %2434 = vmatprep.subr.mxu0 %v1730
    %2435 = vmatpush1.msra.mxu0 %v1729
    %2436 = vmatprep.subr.mxu0 %v1733
    %2437 = vmatpush1.msra.mxu0 %v1732
    %2438 = vmatprep.subr.mxu0 %v1736
    %2439 = vmatpush1.msra.mxu0 %v1735
    %2440 = vmatprep.subr.mxu0 %v1739
    %2441 = vmatpush1.msra.mxu0 %v1738
    %2442 = vmatprep.subr.mxu0 %v1742
    %2443 = vmatpush1.msra.mxu0 %v1741
    %2444 = vmatprep.subr.mxu0 %v1745
    %2445 = vmatpush1.msra.mxu0 %v1744
    %2446 = vmatprep.subr.mxu0 %v1748
    %2447 = vmatpush1.msra.mxu0 %v1747
    %2448 = vmatprep.subr.mxu0 %v1751
    %2449 = vmatpush1.msra.mxu0 %v1750
    %2450 = vmatprep.subr.mxu0 0.0
    %2451 = vmatpush1.msra.mxu0 0.0
    %2452 = vmatprep.subr.mxu0 0.0
    %2453 = vmatpush1.msra.mxu0 0.0
    %2454 = vmatprep.subr.mxu0 0.0
    %2455 = vmatpush1.msra.mxu0 0.0
    %2456 = vmatprep.subr.mxu0 0.0
    %2457 = vmatpush1.msra.mxu0 0.0
    %2458 = vmatprep.subr.mxu0 0.0
    %2459 = vmatpush1.msra.mxu0 0.0
    %2460 = vmatprep.subr.mxu0 0.0
    %2461 = vmatpush1.msra.mxu0 0.0
    %2462 = vmatprep.subr.mxu0 0.0
    %2463 = vmatpush1.msra.mxu0 0.0
    %2464 = vmatprep.subr.mxu0 0.0
    %2465 = vmatpush1.msra.mxu0 0.0
    %2466 = vmatprep.subr.mxu0 0.0
    %2467 = vmatpush1.msra.mxu0 0.0
    %2468 = vmatprep.subr.mxu0 0.0
    %2469 = vmatpush1.msra.mxu0 0.0
    %2470 = vmatprep.subr.mxu0 0.0
    %2471 = vmatpush1.msra.mxu0 0.0
    %2472 = vmatprep.subr.mxu0 0.0
    %2473 = vmatpush1.msra.mxu0 0.0
    %2474 = vmatprep.subr.mxu0 0.0
    %2475 = vmatpush1.msra.mxu0 0.0
    %2476 = vmatprep.subr.mxu0 0.0
    %2477 = vmatpush1.msra.mxu0 0.0
    %2478 = vmatprep.subr.mxu0 0.0
    %2479 = vmatpush1.msra.mxu0 0.0
    %2480 = vmatprep.subr.mxu0 0.0
    %2481 = vmatpush1.msra.mxu0 0.0
    %2482 = vmatprep.mubr.f32.mxu0 0.0
    %2483 = vmatmul.mubr.f32.gmra.mrb[0].mxu0 %v2417
    %v2484 = vpop.f32.mrb[0].mxu0
    %v2485 = vadd.f32 %v1758, %v2484
    %v2486 = vpop.f32.mrb[0].mxu0
    %v2487 = vadd.f32 %v1762, %v2486
    %2488 = vdwg.mxu0
    %2489 = vmatprep.subr.mxu0 0.0
    %2490 = vmatpush1.msra.mxu0 %v1707
    %2491 = vmatprep.subr.mxu0 0.0
    %2492 = vmatpush1.msra.mxu0 %v1710
    %2493 = vmatprep.subr.mxu0 0.0
    %2494 = vmatpush1.msra.mxu0 %v1713
    %2495 = vmatprep.subr.mxu0 0.0
    %2496 = vmatpush1.msra.mxu0 %v1716
    %2497 = vmatprep.subr.mxu0 0.0
    %2498 = vmatpush1.msra.mxu0 %v1719
    %2499 = vmatprep.subr.mxu0 0.0
    %2500 = vmatpush1.msra.mxu0 %v1722
    %2501 = vmatprep.subr.mxu0 0.0
    %2502 = vmatpush1.msra.mxu0 %v1725
    %2503 = vmatprep.subr.mxu0 0.0
    %2504 = vmatpush1.msra.mxu0 %v1728
    %2505 = vmatprep.subr.mxu0 0.0
    %2506 = vmatpush1.msra.mxu0 %v1731
    %2507 = vmatprep.subr.mxu0 0.0
    %2508 = vmatpush1.msra.mxu0 %v1734
    %2509 = vmatprep.subr.mxu0 0.0
    %2510 = vmatpush1.msra.mxu0 %v1737
    %2511 = vmatprep.subr.mxu0 0.0
    %2512 = vmatpush1.msra.mxu0 %v1740
    %2513 = vmatprep.subr.mxu0 0.0
    %2514 = vmatpush1.msra.mxu0 %v1743
    %2515 = vmatprep.subr.mxu0 0.0
    %2516 = vmatpush1.msra.mxu0 %v1746
    %2517 = vmatprep.subr.mxu0 0.0
    %2518 = vmatpush1.msra.mxu0 %v1749
    %2519 = vmatprep.subr.mxu0 0.0
    %2520 = vmatpush1.msra.mxu0 %v1752
    %2521 = vmatprep.subr.mxu0 0.0
    %2522 = vmatpush1.msra.mxu0 0.0
    %2523 = vmatprep.subr.mxu0 0.0
    %2524 = vmatpush1.msra.mxu0 0.0
    %2525 = vmatprep.subr.mxu0 0.0
    %2526 = vmatpush1.msra.mxu0 0.0
    %2527 = vmatprep.subr.mxu0 0.0
    %2528 = vmatpush1.msra.mxu0 0.0
    %2529 = vmatprep.subr.mxu0 0.0
    %2530 = vmatpush1.msra.mxu0 0.0
    %2531 = vmatprep.subr.mxu0 0.0
    %2532 = vmatpush1.msra.mxu0 0.0
    %2533 = vmatprep.subr.mxu0 0.0
    %2534 = vmatpush1.msra.mxu0 0.0
    %2535 = vmatprep.subr.mxu0 0.0
    %2536 = vmatpush1.msra.mxu0 0.0
    %2537 = vmatprep.subr.mxu0 0.0
    %2538 = vmatpush1.msra.mxu0 0.0
    %2539 = vmatprep.subr.mxu0 0.0
    %2540 = vmatpush1.msra.mxu0 0.0
    %2541 = vmatprep.subr.mxu0 0.0
    %2542 = vmatpush1.msra.mxu0 0.0
    %2543 = vmatprep.subr.mxu0 0.0
    %2544 = vmatpush1.msra.mxu0 0.0
    %2545 = vmatprep.subr.mxu0 0.0
    %2546 = vmatpush1.msra.mxu0 0.0
    %2547 = vmatprep.subr.mxu0 0.0
    %2548 = vmatpush1.msra.mxu0 0.0
    %2549 = vmatprep.subr.mxu0 0.0
    %2550 = vmatpush1.msra.mxu0 0.0
    %2551 = vmatprep.subr.mxu0 0.0
    %2552 = vmatpush1.msra.mxu0 0.0
    %2553 = vmatprep.mubr.f32.mxu0 0.0
    %2554 = vmatmul.mubr.f32.gmra.mrb[0].mxu0 %v2417
    %v2555 = vpop.f32.mrb[0].mxu0
    %v2556 = vadd.f32 %v1766, %v2555
    %v2557 = vpop.f32.mrb[0].mxu0
    %2558 = vdwg.mxu0
    %v2559 = vadd.f32 %v1693, %v2485
    %v2560 = vxor.u32 %v2559, 2147483648
    %v2561 = vmul.f32 %v2560, 1.442695
    %v2562 = vpow.pop %v2561
    %v2563 = vadd.f32 %v2562, 1.0
    %v2564 = vrcp.pop %v2563
    %v2565 = vmul.f32 1.0, %v2564
    %v2566 = vadd.f32 %v1694, %v2487
    %v2567 = vxor.u32 %v2566, 2147483648
    %v2568 = vmul.f32 %v2567, 1.442695
    %v2569 = vpow.pop %v2568
    %v2570 = vadd.f32 %v2569, 1.0
    %v2571 = vrcp.pop %v2570
    %v2572 = vmul.f32 1.0, %v2571
    %v2573 = vmul.f32 %v2565, %v2556
    %v2574 = vadd.f32 %v1695, %v2573
    %v2575 = vtanh.pop %v2574
    %v2576 = vsub.f32 1.0, %v2572
    %v2577 = vmul.f32 %v2576, %v2575
    %v2578 = vmul.f32 %v2572, %v2417
    %v2579 = vadd.f32 %v2577, %v2578
    %2580 = vmatprep.subr.mxu0 %v1706
    %2581 = vmatpush1.msra.mxu0 %v1705
    %2582 = vmatprep.subr.mxu0 %v1709
    %2583 = vmatpush1.msra.mxu0 %v1708
    %2584 = vmatprep.subr.mxu0 %v1712
    %2585 = vmatpush1.msra.mxu0 %v1711
    %2586 = vmatprep.subr.mxu0 %v1715
    %2587 = vmatpush1.msra.mxu0 %v1714
    %2588 = vmatprep.subr.mxu0 %v1718
    %2589 = vmatpush1.msra.mxu0 %v1717
    %2590 = vmatprep.subr.mxu0 %v1721
    %2591 = vmatpush1.msra.mxu0 %v1720
    %2592 = vmatprep.subr.mxu0 %v1724
    %2593 = vmatpush1.msra.mxu0 %v1723
    %2594 = vmatprep.subr.mxu0 %v1727
    %2595 = vmatpush1.msra.mxu0 %v1726
    %2596 = vmatprep.subr.mxu0 %v1730
    %2597 = vmatpush1.msra.mxu0 %v1729
    %2598 = vmatprep.subr.mxu0 %v1733
    %2599 = vmatpush1.msra.mxu0 %v1732
    %2600 = vmatprep.subr.mxu0 %v1736
    %2601 = vmatpush1.msra.mxu0 %v1735
    %2602 = vmatprep.subr.mxu0 %v1739
    %2603 = vmatpush1.msra.mxu0 %v1738
    %2604 = vmatprep.subr.mxu0 %v1742
    %2605 = vmatpush1.msra.mxu0 %v1741
    %2606 = vmatprep.subr.mxu0 %v1745
    %2607 = vmatpush1.msra.mxu0 %v1744
    %2608 = vmatprep.subr.mxu0 %v1748
    %2609 = vmatpush1.msra.mxu0 %v1747
    %2610 = vmatprep.subr.mxu0 %v1751
    %2611 = vmatpush1.msra.mxu0 %v1750
    %2612 = vmatprep.subr.mxu0 0.0
    %2613 = vmatpush1.msra.mxu0 0.0
    %2614 = vmatprep.subr.mxu0 0.0
    %2615 = vmatpush1.msra.mxu0 0.0
    %2616 = vmatprep.subr.mxu0 0.0
    %2617 = vmatpush1.msra.mxu0 0.0
    %2618 = vmatprep.subr.mxu0 0.0
    %2619 = vmatpush1.msra.mxu0 0.0
    %2620 = vmatprep.subr.mxu0 0.0
    %2621 = vmatpush1.msra.mxu0 0.0
    %2622 = vmatprep.subr.mxu0 0.0
    %2623 = vmatpush1.msra.mxu0 0.0
    %2624 = vmatprep.subr.mxu0 0.0
    %2625 = vmatpush1.msra.mxu0 0.0
    %2626 = vmatprep.subr.mxu0 0.0
    %2627 = vmatpush1.msra.mxu0 0.0
    %2628 = vmatprep.subr.mxu0 0.0
    %2629 = vmatpush1.msra.mxu0 0.0
    %2630 = vmatprep.subr.mxu0 0.0
    %2631 = vmatpush1.msra.mxu0 0.0
    %2632 = vmatprep.subr.mxu0 0.0
    %2633 = vmatpush1.msra.mxu0 0.0
    %2634 = vmatprep.subr.mxu0 0.0
    %2635 = vmatpush1.msra.mxu0 0.0
    %2636 = vmatprep.subr.mxu0 0.0
    %2637 = vmatpush1.msra.mxu0 0.0
    %2638 = vmatprep.subr.mxu0 0.0
    %2639 = vmatpush1.msra.mxu0 0.0
    %2640 = vmatprep.subr.mxu0 0.0
    %2641 = vmatpush1.msra.mxu0 0.0
    %2642 = vmatprep.subr.mxu0 0.0
    %2643 = vmatpush1.msra.mxu0 0.0
    %2644 = vmatprep.mubr.f32.mxu0 0.0
    %2645 = vmatmul.mubr.f32.gmra.mrb[0].mxu0 %v2579
    %v2646 = vpop.f32.mrb[0].mxu0
    %v2647 = vadd.f32 %v1758, %v2646
    %v2648 = vpop.f32.mrb[0].mxu0
    %v2649 = vadd.f32 %v1762, %v2648
    %2650 = vdwg.mxu0
    %2651 = vmatprep.subr.mxu0 0.0
    %2652 = vmatpush1.msra.mxu0 %v1707
    %2653 = vmatprep.subr.mxu0 0.0
    %2654 = vmatpush1.msra.mxu0 %v1710
    %2655 = vmatprep.subr.mxu0 0.0
    %2656 = vmatpush1.msra.mxu0 %v1713
    %2657 = vmatprep.subr.mxu0 0.0
    %2658 = vmatpush1.msra.mxu0 %v1716
    %2659 = vmatprep.subr.mxu0 0.0
    %2660 = vmatpush1.msra.mxu0 %v1719
    %2661 = vmatprep.subr.mxu0 0.0
    %2662 = vmatpush1.msra.mxu0 %v1722
    %2663 = vmatprep.subr.mxu0 0.0
    %2664 = vmatpush1.msra.mxu0 %v1725
    %2665 = vmatprep.subr.mxu0 0.0
    %2666 = vmatpush1.msra.mxu0 %v1728
    %2667 = vmatprep.subr.mxu0 0.0
    %2668 = vmatpush1.msra.mxu0 %v1731
    %2669 = vmatprep.subr.mxu0 0.0
    %2670 = vmatpush1.msra.mxu0 %v1734
    %2671 = vmatprep.subr.mxu0 0.0
    %2672 = vmatpush1.msra.mxu0 %v1737
    %2673 = vmatprep.subr.mxu0 0.0
    %2674 = vmatpush1.msra.mxu0 %v1740
    %2675 = vmatprep.subr.mxu0 0.0
    %2676 = vmatpush1.msra.mxu0 %v1743
    %2677 = vmatprep.subr.mxu0 0.0
    %2678 = vmatpush1.msra.mxu0 %v1746
    %2679 = vmatprep.subr.mxu0 0.0
    %2680 = vmatpush1.msra.mxu0 %v1749
    %2681 = vmatprep.subr.mxu0 0.0
    %2682 = vmatpush1.msra.mxu0 %v1752
    %2683 = vmatprep.subr.mxu0 0.0
    %2684 = vmatpush1.msra.mxu0 0.0
    %2685 = vmatprep.subr.mxu0 0.0
    %2686 = vmatpush1.msra.mxu0 0.0
    %2687 = vmatprep.subr.mxu0 0.0
    %2688 = vmatpush1.msra.mxu0 0.0
    %2689 = vmatprep.subr.mxu0 0.0
    %2690 = vmatpush1.msra.mxu0 0.0
    %2691 = vmatprep.subr.mxu0 0.0
    %2692 = vmatpush1.msra.mxu0 0.0
    %2693 = vmatprep.subr.mxu0 0.0
    %2694 = vmatpush1.msra.mxu0 0.0
    %2695 = vmatprep.subr.mxu0 0.0
    %2696 = vmatpush1.msra.mxu0 0.0
    %2697 = vmatprep.subr.mxu0 0.0
    %2698 = vmatpush1.msra.mxu0 0.0
    %2699 = vmatprep.subr.mxu0 0.0
    %2700 = vmatpush1.msra.mxu0 0.0
    %2701 = vmatprep.subr.mxu0 0.0
    %2702 = vmatpush1.msra.mxu0 0.0
    %2703 = vmatprep.subr.mxu0 0.0
    %2704 = vmatpush1.msra.mxu0 0.0
    %2705 = vmatprep.subr.mxu0 0.0
    %2706 = vmatpush1.msra.mxu0 0.0
    %2707 = vmatprep.subr.mxu0 0.0
    %2708 = vmatpush1.msra.mxu0 0.0
    %2709 = vmatprep.subr.mxu0 0.0
    %2710 = vmatpush1.msra.mxu0 0.0
    %2711 = vmatprep.subr.mxu0 0.0
    %2712 = vmatpush1.msra.mxu0 0.0
    %2713 = vmatprep.subr.mxu0 0.0
    %2714 = vmatpush1.msra.mxu0 0.0
    %2715 = vmatprep.mubr.f32.mxu0 0.0
    %2716 = vmatmul.mubr.f32.gmra.mrb[0].mxu0 %v2579
    %v2717 = vpop.f32.mrb[0].mxu0
    %v2718 = vadd.f32 %v1766, %v2717
    %v2719 = vpop.f32.mrb[0].mxu0
    %2720 = vdwg.mxu0
    %v2721 = vadd.f32 %v1696, %v2647
    %v2722 = vxor.u32 %v2721, 2147483648
    %v2723 = vmul.f32 %v2722, 1.442695
    %v2724 = vpow.pop %v2723
    %v2725 = vadd.f32 %v2724, 1.0
    %v2726 = vrcp.pop %v2725
    %v2727 = vmul.f32 1.0, %v2726
    %v2728 = vadd.f32 %v1697, %v2649
    %v2729 = vxor.u32 %v2728, 2147483648
    %v2730 = vmul.f32 %v2729, 1.442695
    %v2731 = vpow.pop %v2730
    %v2732 = vadd.f32 %v2731, 1.0
    %v2733 = vrcp.pop %v2732
    %v2734 = vmul.f32 1.0, %v2733
    %v2735 = vmul.f32 %v2727, %v2718
    %v2736 = vadd.f32 %v1698, %v2735
    %v2737 = vtanh.pop %v2736
    %v2738 = vsub.f32 1.0, %v2734
    %v2739 = vmul.f32 %v2738, %v2737
    %v2740 = vmul.f32 %v2734, %v2579
    %v2741 = vadd.f32 %v2739, %v2740
    %2742 = vmatprep.subr.mxu0 %v1706
    %2743 = vmatpush1.msra.mxu0 %v1705
    %2744 = vmatprep.subr.mxu0 %v1709
    %2745 = vmatpush1.msra.mxu0 %v1708
    %2746 = vmatprep.subr.mxu0 %v1712
    %2747 = vmatpush1.msra.mxu0 %v1711
    %2748 = vmatprep.subr.mxu0 %v1715
    %2749 = vmatpush1.msra.mxu0 %v1714
    %2750 = vmatprep.subr.mxu0 %v1718
    %2751 = vmatpush1.msra.mxu0 %v1717
    %2752 = vmatprep.subr.mxu0 %v1721
    %2753 = vmatpush1.msra.mxu0 %v1720
    %2754 = vmatprep.subr.mxu0 %v1724
    %2755 = vmatpush1.msra.mxu0 %v1723
    %2756 = vmatprep.subr.mxu0 %v1727
    %2757 = vmatpush1.msra.mxu0 %v1726
    %2758 = vmatprep.subr.mxu0 %v1730
    %2759 = vmatpush1.msra.mxu0 %v1729
    %2760 = vmatprep.subr.mxu0 %v1733
    %2761 = vmatpush1.msra.mxu0 %v1732
    %2762 = vmatprep.subr.mxu0 %v1736
    %2763 = vmatpush1.msra.mxu0 %v1735
    %2764 = vmatprep.subr.mxu0 %v1739
    %2765 = vmatpush1.msra.mxu0 %v1738
    %2766 = vmatprep.subr.mxu0 %v1742
    %2767 = vmatpush1.msra.mxu0 %v1741
    %2768 = vmatprep.subr.mxu0 %v1745
    %2769 = vmatpush1.msra.mxu0 %v1744
    %2770 = vmatprep.subr.mxu0 %v1748
    %2771 = vmatpush1.msra.mxu0 %v1747
    %2772 = vmatprep.subr.mxu0 %v1751
    %2773 = vmatpush1.msra.mxu0 %v1750
    %2774 = vmatprep.subr.mxu0 0.0
    %2775 = vmatpush1.msra.mxu0 0.0
    %2776 = vmatprep.subr.mxu0 0.0
    %2777 = vmatpush1.msra.mxu0 0.0
    %2778 = vmatprep.subr.mxu0 0.0
    %2779 = vmatpush1.msra.mxu0 0.0
    %2780 = vmatprep.subr.mxu0 0.0
    %2781 = vmatpush1.msra.mxu0 0.0
    %2782 = vmatprep.subr.mxu0 0.0
    %2783 = vmatpush1.msra.mxu0 0.0
    %2784 = vmatprep.subr.mxu0 0.0
    %2785 = vmatpush1.msra.mxu0 0.0
    %2786 = vmatprep.subr.mxu0 0.0
    %2787 = vmatpush1.msra.mxu0 0.0
    %2788 = vmatprep.subr.mxu0 0.0
    %2789 = vmatpush1.msra.mxu0 0.0
    %2790 = vmatprep.subr.mxu0 0.0
    %2791 = vmatpush1.msra.mxu0 0.0
    %2792 = vmatprep.subr.mxu0 0.0
    %2793 = vmatpush1.msra.mxu0 0.0
    %2794 = vmatprep.subr.mxu0 0.0
    %2795 = vmatpush1.msra.mxu0 0.0
    %2796 = vmatprep.subr.mxu0 0.0
    %2797 = vmatpush1.msra.mxu0 0.0
    %2798 = vmatprep.subr.mxu0 0.0
    %2799 = vmatpush1.msra.mxu0 0.0
    %2800 = vmatprep.subr.mxu0 0.0
    %2801 = vmatpush1.msra.mxu0 0.0
    %2802 = vmatprep.subr.mxu0 0.0
    %2803 = vmatpush1.msra.mxu0 0.0
    %2804 = vmatprep.subr.mxu0 0.0
    %2805 = vmatpush1.msra.mxu0 0.0
    %2806 = vmatprep.mubr.f32.mxu0 0.0
    %2807 = vmatmul.mubr.f32.gmra.mrb[0].mxu0 %v2741
    %v2808 = vpop.f32.mrb[0].mxu0
    %v2809 = vadd.f32 %v1758, %v2808
    %v2810 = vpop.f32.mrb[0].mxu0
    %v2811 = vadd.f32 %v1762, %v2810
    %2812 = vdwg.mxu0
    %2813 = vmatprep.subr.mxu0 0.0
    %2814 = vmatpush1.msra.mxu0 %v1707
    %2815 = vmatprep.subr.mxu0 0.0
    %2816 = vmatpush1.msra.mxu0 %v1710
    %2817 = vmatprep.subr.mxu0 0.0
    %2818 = vmatpush1.msra.mxu0 %v1713
    %2819 = vmatprep.subr.mxu0 0.0
    %2820 = vmatpush1.msra.mxu0 %v1716
    %2821 = vmatprep.subr.mxu0 0.0
    %2822 = vmatpush1.msra.mxu0 %v1719
    %2823 = vmatprep.subr.mxu0 0.0
    %2824 = vmatpush1.msra.mxu0 %v1722
    %2825 = vmatprep.subr.mxu0 0.0
    %2826 = vmatpush1.msra.mxu0 %v1725
    %2827 = vmatprep.subr.mxu0 0.0
    %2828 = vmatpush1.msra.mxu0 %v1728
    %2829 = vmatprep.subr.mxu0 0.0
    %2830 = vmatpush1.msra.mxu0 %v1731
    %2831 = vmatprep.subr.mxu0 0.0
    %2832 = vmatpush1.msra.mxu0 %v1734
    %2833 = vmatprep.subr.mxu0 0.0
    %2834 = vmatpush1.msra.mxu0 %v1737
    %2835 = vmatprep.subr.mxu0 0.0
    %2836 = vmatpush1.msra.mxu0 %v1740
    %2837 = vmatprep.subr.mxu0 0.0
    %2838 = vmatpush1.msra.mxu0 %v1743
    %2839 = vmatprep.subr.mxu0 0.0
    %2840 = vmatpush1.msra.mxu0 %v1746
    %2841 = vmatprep.subr.mxu0 0.0
    %2842 = vmatpush1.msra.mxu0 %v1749
    %2843 = vmatprep.subr.mxu0 0.0
    %2844 = vmatpush1.msra.mxu0 %v1752
    %2845 = vmatprep.subr.mxu0 0.0
    %2846 = vmatpush1.msra.mxu0 0.0
    %2847 = vmatprep.subr.mxu0 0.0
    %2848 = vmatpush1.msra.mxu0 0.0
    %2849 = vmatprep.subr.mxu0 0.0
    %2850 = vmatpush1.msra.mxu0 0.0
    %2851 = vmatprep.subr.mxu0 0.0
    %2852 = vmatpush1.msra.mxu0 0.0
    %2853 = vmatprep.subr.mxu0 0.0
    %2854 = vmatpush1.msra.mxu0 0.0
    %2855 = vmatprep.subr.mxu0 0.0
    %2856 = vmatpush1.msra.mxu0 0.0
    %2857 = vmatprep.subr.mxu0 0.0
    %2858 = vmatpush1.msra.mxu0 0.0
    %2859 = vmatprep.subr.mxu0 0.0
    %2860 = vmatpush1.msra.mxu0 0.0
    %2861 = vmatprep.subr.mxu0 0.0
    %2862 = vmatpush1.msra.mxu0 0.0
    %2863 = vmatprep.subr.mxu0 0.0
    %2864 = vmatpush1.msra.mxu0 0.0
    %2865 = vmatprep.subr.mxu0 0.0
    %2866 = vmatpush1.msra.mxu0 0.0
    %2867 = vmatprep.subr.mxu0 0.0
    %2868 = vmatpush1.msra.mxu0 0.0
    %2869 = vmatprep.subr.mxu0 0.0
    %2870 = vmatpush1.msra.mxu0 0.0
    %2871 = vmatprep.subr.mxu0 0.0
    %2872 = vmatpush1.msra.mxu0 0.0
    %2873 = vmatprep.subr.mxu0 0.0
    %2874 = vmatpush1.msra.mxu0 0.0
    %2875 = vmatprep.subr.mxu0 0.0
    %2876 = vmatpush1.msra.mxu0 0.0
    %2877 = vmatprep.mubr.f32.mxu0 0.0
    %2878 = vmatmul.mubr.f32.gmra.mrb[0].mxu0 %v2741
    %v2879 = vpop.f32.mrb[0].mxu0
    %v2880 = vadd.f32 %v1766, %v2879
    %v2881 = vpop.f32.mrb[0].mxu0
    %2882 = vdwg.mxu0
    %v2883 = vadd.f32 %v1699, %v2809
    %v2884 = vxor.u32 %v2883, 2147483648
    %v2885 = vmul.f32 %v2884, 1.442695
    %v2886 = vpow.pop %v2885
    %v2887 = vadd.f32 %v2886, 1.0
    %v2888 = vrcp.pop %v2887
    %v2889 = vmul.f32 1.0, %v2888
    %v2890 = vadd.f32 %v1700, %v2811
    %v2891 = vxor.u32 %v2890, 2147483648
    %v2892 = vmul.f32 %v2891, 1.442695
    %v2893 = vpow.pop %v2892
    %v2894 = vadd.f32 %v2893, 1.0
    %v2895 = vrcp.pop %v2894
    %v2896 = vmul.f32 1.0, %v2895
    %v2897 = vmul.f32 %v2889, %v2880
    %v2898 = vadd.f32 %v1701, %v2897
    %v2899 = vtanh.pop %v2898
    %v2900 = vsub.f32 1.0, %v2896
    %v2901 = vmul.f32 %v2900, %v2899
    %v2902 = vmul.f32 %v2896, %v2741
    %v2903 = vadd.f32 %v2901, %v2902
    %2904 = vmatprep.subr.mxu0 %v1706
    %2905 = vmatpush1.msra.mxu0 %v1705
    %2906 = vmatprep.subr.mxu0 %v1709
    %2907 = vmatpush1.msra.mxu0 %v1708
    %2908 = vmatprep.subr.mxu0 %v1712
    %2909 = vmatpush1.msra.mxu0 %v1711
    %2910 = vmatprep.subr.mxu0 %v1715
    %2911 = vmatpush1.msra.mxu0 %v1714
    %2912 = vmatprep.subr.mxu0 %v1718
    %2913 = vmatpush1.msra.mxu0 %v1717
    %2914 = vmatprep.subr.mxu0 %v1721
    %2915 = vmatpush1.msra.mxu0 %v1720
    %2916 = vmatprep.subr.mxu0 %v1724
    %2917 = vmatpush1.msra.mxu0 %v1723
    %2918 = vmatprep.subr.mxu0 %v1727
    %2919 = vmatpush1.msra.mxu0 %v1726
    %2920 = vmatprep.subr.mxu0 %v1730
    %2921 = vmatpush1.msra.mxu0 %v1729
    %2922 = vmatprep.subr.mxu0 %v1733
    %2923 = vmatpush1.msra.mxu0 %v1732
    %2924 = vmatprep.subr.mxu0 %v1736
    %2925 = vmatpush1.msra.mxu0 %v1735
    %2926 = vmatprep.subr.mxu0 %v1739
    %2927 = vmatpush1.msra.mxu0 %v1738
    %2928 = vmatprep.subr.mxu0 %v1742
    %2929 = vmatpush1.msra.mxu0 %v1741
    %2930 = vmatprep.subr.mxu0 %v1745
    %2931 = vmatpush1.msra.mxu0 %v1744
    %2932 = vmatprep.subr.mxu0 %v1748
    %2933 = vmatpush1.msra.mxu0 %v1747
    %2934 = vmatprep.subr.mxu0 %v1751
    %2935 = vmatpush1.msra.mxu0 %v1750
    %2936 = vmatprep.subr.mxu0 0.0
    %2937 = vmatpush1.msra.mxu0 0.0
    %2938 = vmatprep.subr.mxu0 0.0
    %2939 = vmatpush1.msra.mxu0 0.0
    %2940 = vmatprep.subr.mxu0 0.0
    %2941 = vmatpush1.msra.mxu0 0.0
    %2942 = vmatprep.subr.mxu0 0.0
    %2943 = vmatpush1.msra.mxu0 0.0
    %2944 = vmatprep.subr.mxu0 0.0
    %2945 = vmatpush1.msra.mxu0 0.0
    %2946 = vmatprep.subr.mxu0 0.0
    %2947 = vmatpush1.msra.mxu0 0.0
    %2948 = vmatprep.subr.mxu0 0.0
    %2949 = vmatpush1.msra.mxu0 0.0
    %2950 = vmatprep.subr.mxu0 0.0
    %2951 = vmatpush1.msra.mxu0 0.0
    %2952 = vmatprep.subr.mxu0 0.0
    %2953 = vmatpush1.msra.mxu0 0.0
    %2954 = vmatprep.subr.mxu0 0.0
    %2955 = vmatpush1.msra.mxu0 0.0
    %2956 = vmatprep.subr.mxu0 0.0
    %2957 = vmatpush1.msra.mxu0 0.0
    %2958 = vmatprep.subr.mxu0 0.0
    %2959 = vmatpush1.msra.mxu0 0.0
    %2960 = vmatprep.subr.mxu0 0.0
    %2961 = vmatpush1.msra.mxu0 0.0
    %2962 = vmatprep.subr.mxu0 0.0
    %2963 = vmatpush1.msra.mxu0 0.0
    %2964 = vmatprep.subr.mxu0 0.0
    %2965 = vmatpush1.msra.mxu0 0.0
    %2966 = vmatprep.subr.mxu0 0.0
    %2967 = vmatpush1.msra.mxu0 0.0
    %2968 = vmatprep.mubr.f32.mxu0 0.0
    %2969 = vmatmul.mubr.f32.gmra.mrb[0].mxu0 %v2903
    %v2970 = vpop.f32.mrb[0].mxu0
    %v2971 = vadd.f32 %v1758, %v2970
    %v2972 = vpop.f32.mrb[0].mxu0
    %v2973 = vadd.f32 %v1762, %v2972
    %2974 = vdwg.mxu0
    %2975 = vmatprep.subr.mxu0 0.0
    %2976 = vmatpush1.msra.mxu0 %v1707
    %2977 = vmatprep.subr.mxu0 0.0
    %2978 = vmatpush1.msra.mxu0 %v1710
    %2979 = vmatprep.subr.mxu0 0.0
    %2980 = vmatpush1.msra.mxu0 %v1713
    %2981 = vmatprep.subr.mxu0 0.0
    %2982 = vmatpush1.msra.mxu0 %v1716
    %2983 = vmatprep.subr.mxu0 0.0
    %2984 = vmatpush1.msra.mxu0 %v1719
    %2985 = vmatprep.subr.mxu0 0.0
    %2986 = vmatpush1.msra.mxu0 %v1722
    %2987 = vmatprep.subr.mxu0 0.0
    %2988 = vmatpush1.msra.mxu0 %v1725
    %2989 = vmatprep.subr.mxu0 0.0
    %2990 = vmatpush1.msra.mxu0 %v1728
    %2991 = vmatprep.subr.mxu0 0.0
    %2992 = vmatpush1.msra.mxu0 %v1731
    %2993 = vmatprep.subr.mxu0 0.0
    %2994 = vmatpush1.msra.mxu0 %v1734
    %2995 = vmatprep.subr.mxu0 0.0
    %2996 = vmatpush1.msra.mxu0 %v1737
    %2997 = vmatprep.subr.mxu0 0.0
    %2998 = vmatpush1.msra.mxu0 %v1740
    %2999 = vmatprep.subr.mxu0 0.0
    %3000 = vmatpush1.msra.mxu0 %v1743
    %3001 = vmatprep.subr.mxu0 0.0
    %3002 = vmatpush1.msra.mxu0 %v1746
    %3003 = vmatprep.subr.mxu0 0.0
    %3004 = vmatpush1.msra.mxu0 %v1749
    %3005 = vmatprep.subr.mxu0 0.0
    %3006 = vmatpush1.msra.mxu0 %v1752
    %3007 = vmatprep.subr.mxu0 0.0
    %3008 = vmatpush1.msra.mxu0 0.0
    %3009 = vmatprep.subr.mxu0 0.0
    %3010 = vmatpush1.msra.mxu0 0.0
    %3011 = vmatprep.subr.mxu0 0.0
    %3012 = vmatpush1.msra.mxu0 0.0
    %3013 = vmatprep.subr.mxu0 0.0
    %3014 = vmatpush1.msra.mxu0 0.0
    %3015 = vmatprep.subr.mxu0 0.0
    %3016 = vmatpush1.msra.mxu0 0.0
    %3017 = vmatprep.subr.mxu0 0.0
    %3018 = vmatpush1.msra.mxu0 0.0
    %3019 = vmatprep.subr.mxu0 0.0
    %3020 = vmatpush1.msra.mxu0 0.0
    %3021 = vmatprep.subr.mxu0 0.0
    %3022 = vmatpush1.msra.mxu0 0.0
    %3023 = vmatprep.subr.mxu0 0.0
    %3024 = vmatpush1.msra.mxu0 0.0
    %3025 = vmatprep.subr.mxu0 0.0
    %3026 = vmatpush1.msra.mxu0 0.0
    %3027 = vmatprep.subr.mxu0 0.0
    %3028 = vmatpush1.msra.mxu0 0.0
    %3029 = vmatprep.subr.mxu0 0.0
    %3030 = vmatpush1.msra.mxu0 0.0
    %3031 = vmatprep.subr.mxu0 0.0
    %3032 = vmatpush1.msra.mxu0 0.0
    %3033 = vmatprep.subr.mxu0 0.0
    %3034 = vmatpush1.msra.mxu0 0.0
    %3035 = vmatprep.subr.mxu0 0.0
    %3036 = vmatpush1.msra.mxu0 0.0
    %3037 = vmatprep.subr.mxu0 0.0
    %3038 = vmatpush1.msra.mxu0 0.0
    %3039 = vmatprep.mubr.f32.mxu0 0.0
    %3040 = vmatmul.mubr.f32.gmra.mrb[0].mxu0 %v2903
    %v3041 = vpop.f32.mrb[0].mxu0
    %v3042 = vadd.f32 %v1766, %v3041
    %v3043 = vpop.f32.mrb[0].mxu0
    %3044 = vdwg.mxu0
    %v3045 = vadd.f32 %v1702, %v2971
    %v3046 = vxor.u32 %v3045, 2147483648
    %v3047 = vmul.f32 %v3046, 1.442695
    %v3048 = vpow.pop %v3047
    %v3049 = vadd.f32 %v3048, 1.0
    %v3050 = vrcp.pop %v3049
    %v3051 = vmul.f32 1.0, %v3050
    %v3052 = vadd.f32 %v1703, %v2973
    %v3053 = vxor.u32 %v3052, 2147483648
    %v3054 = vmul.f32 %v3053, 1.442695
    %v3055 = vpow.pop %v3054
    %v3056 = vadd.f32 %v3055, 1.0
    %v3057 = vrcp.pop %v3056
    %v3058 = vmul.f32 1.0, %v3057
    %v3059 = vmul.f32 %v3051, %v3042
    %v3060 = vadd.f32 %v1704, %v3059
    %v3061 = vtanh.pop %v3060
    %v3062 = vsub.f32 1.0, %v3058
    %v3063 = vmul.f32 %v3062, %v3061
    %v3064 = vmul.f32 %v3058, %v2903
    %v3065 = vadd.f32 %v3063, %v3064
    %v3066 = vlaneseq
    %v3067 = vshrl.u32 %v3066, 7
    %vm3068 = vcmp.lt.s32.totalorder %v3067, 2
    %v3069 = vsel %vm3068, 1, 0
    %v3070 = vcvt.s32.f32 %v3069
    %v3071 = vld [vmem:[%s8] sm:$0xff]
    %v3072 = vld [vmem:[%s8 + $0x8] sm:$0xff]
    %v3073 = vld [vmem:[%s8 + $0x10] sm:$0xff]
    %v3074 = vld [vmem:[%s8 + $0x18] sm:$0xff]
    %v3075 = vld [vmem:[%s8 + $0x20] sm:$0xff]
    %v3076 = vld [vmem:[%s8 + $0x28] sm:$0xff]
    %v3077 = vld [vmem:[%s8 + $0x30] sm:$0xff]
    %v3078 = vld [vmem:[%s8 + $0x38] sm:$0xff]
    %v3079 = vld [vmem:[%s8 + $0x40] sm:$0xff]
    %v3080 = vld [vmem:[%s8 + $0x48] sm:$0xff]
    %v3081 = vld [vmem:[%s8 + $0x50] sm:$0xff]
    %v3082 = vld [vmem:[%s8 + $0x58] sm:$0xff]
    %v3083 = vld [vmem:[%s8 + $0x60] sm:$0xff]
    %v3084 = vld [vmem:[%s8 + $0x68] sm:$0xff]
    %v3085 = vld [vmem:[%s8 + $0x70] sm:$0xff]
    %v3086 = vld [vmem:[%s8 + $0x78] sm:$0xff]
    %v3087 = vld [vmem:[#allocation9] sm:$0x1]
    %v3089 = vlaneseq
    %v3090 = vshrl.u32 %v3089, 7
    %v3091 = vsub.s32 0, %v3090
    %v3092 = vrot.slane %v3087, %v3091
    %3094 = vmatprep.subr.mxu0 0.0
    %3095 = vmatpush1.msra.mxu0 %v3071
    %3096 = vmatprep.subr.mxu0 0.0
    %3097 = vmatpush1.msra.mxu0 %v3072
    %3098 = vmatprep.subr.mxu0 0.0
    %3099 = vmatpush1.msra.mxu0 %v3073
    %3100 = vmatprep.subr.mxu0 0.0
    %3101 = vmatpush1.msra.mxu0 %v3074
    %3102 = vmatprep.subr.mxu0 0.0
    %3103 = vmatpush1.msra.mxu0 %v3075
    %3104 = vmatprep.subr.mxu0 0.0
    %3105 = vmatpush1.msra.mxu0 %v3076
    %3106 = vmatprep.subr.mxu0 0.0
    %3107 = vmatpush1.msra.mxu0 %v3077
    %3108 = vmatprep.subr.mxu0 0.0
    %3109 = vmatpush1.msra.mxu0 %v3078
    %3110 = vmatprep.subr.mxu0 0.0
    %3111 = vmatpush1.msra.mxu0 %v3079
    %3112 = vmatprep.subr.mxu0 0.0
    %3113 = vmatpush1.msra.mxu0 %v3080
    %3114 = vmatprep.subr.mxu0 0.0
    %3115 = vmatpush1.msra.mxu0 %v3081
    %3116 = vmatprep.subr.mxu0 0.0
    %3117 = vmatpush1.msra.mxu0 %v3082
    %3118 = vmatprep.subr.mxu0 0.0
    %3119 = vmatpush1.msra.mxu0 %v3083
    %3120 = vmatprep.subr.mxu0 0.0
    %3121 = vmatpush1.msra.mxu0 %v3084
    %3122 = vmatprep.subr.mxu0 0.0
    %3123 = vmatpush1.msra.mxu0 %v3085
    %3124 = vmatprep.subr.mxu0 0.0
    %3125 = vmatpush1.msra.mxu0 %v3086
    %3126 = vmatprep.subr.mxu0 0.0
    %3127 = vmatpush1.msra.mxu0 0.0
    %3128 = vmatprep.subr.mxu0 0.0
    %3129 = vmatpush1.msra.mxu0 0.0
    %3130 = vmatprep.subr.mxu0 0.0
    %3131 = vmatpush1.msra.mxu0 0.0
    %3132 = vmatprep.subr.mxu0 0.0
    %3133 = vmatpush1.msra.mxu0 0.0
    %3134 = vmatprep.subr.mxu0 0.0
    %3135 = vmatpush1.msra.mxu0 0.0
    %3136 = vmatprep.subr.mxu0 0.0
    %3137 = vmatpush1.msra.mxu0 0.0
    %3138 = vmatprep.subr.mxu0 0.0
    %3139 = vmatpush1.msra.mxu0 0.0
    %3140 = vmatprep.subr.mxu0 0.0
    %3141 = vmatpush1.msra.mxu0 0.0
    %3142 = vmatprep.subr.mxu0 0.0
    %3143 = vmatpush1.msra.mxu0 0.0
    %3144 = vmatprep.subr.mxu0 0.0
    %3145 = vmatpush1.msra.mxu0 0.0
    %3146 = vmatprep.subr.mxu0 0.0
    %3147 = vmatpush1.msra.mxu0 0.0
    %3148 = vmatprep.subr.mxu0 0.0
    %3149 = vmatpush1.msra.mxu0 0.0
    %3150 = vmatprep.subr.mxu0 0.0
    %3151 = vmatpush1.msra.mxu0 0.0
    %3152 = vmatprep.subr.mxu0 0.0
    %3153 = vmatpush1.msra.mxu0 0.0
    %3154 = vmatprep.subr.mxu0 0.0
    %3155 = vmatpush1.msra.mxu0 0.0
    %3156 = vmatprep.subr.mxu0 0.0
    %3157 = vmatpush1.msra.mxu0 0.0
    %3158 = vmatprep.mubr.f32.mxu0 0.0
    %3159 = vmatmul.mubr.f32.gmra.mrb[0].mxu0 %v3065
    %v3160 = vpop.f32.mrb[0].mxu0
    %v3161 = vadd.f32 %v3092, %v3160
    %v3162 = vpop.f32.mrb[0].mxu0
    %3163 = vdwg.mxu0
    %v3164 = vmul.f32 %v3161, %v3070
    %v3165 = vrot.slane %v3164, 4
    %v3166 = vadd.f32 %v3164, %v3165
    %v3167 = vrot.slane %v3166, 2
    %v3168 = vadd.f32 %v3166, %v3167
    %v3169 = vrot.slane %v3168, 1
    %v3170 = vadd.f32 %v3168, %v3169
    %v3171 = vmul.f32 %v3170, 0.5
    %v3172 = vmul.f32 %v3164, %v3161
    %v3173 = vrot.slane %v3172, 4
    %v3174 = vadd.f32 %v3172, %v3173
    %v3175 = vrot.slane %v3174, 2
    %v3176 = vadd.f32 %v3174, %v3175
    %v3177 = vrot.slane %v3176, 1
    %v3178 = vadd.f32 %v3176, %v3177
    %v3179 = vmul.f32 %v3178, 0.5
    %v3180 = vmul.f32 %v3171, %v3171
    %v3181 = vsub.f32 %v3179, %v3180
    %v3182 = vmax.f32 %v3181, 0.0
    %v3183 = vsub.f32 %v3161, %v3171
    %v3184 = vadd.f32 %v3182, 1e-05
    %v3185 = vrsqrt.pop %v3184
    %v3186 = vmul.f32 %v3183, %v3185
    %v3187 = vld [vmem:[#allocation10] sm:$0x1]
    %v3189 = vlaneseq
    %v3190 = vshrl.u32 %v3189, 7
    %v3191 = vsub.s32 0, %v3190
    %v3192 = vrot.slane %v3187, %v3191
    %v3194 = vmul.f32 %v3186, %v3192
    %v3195 = vld [vmem:[#allocation12] sm:$0x1]
    %v3197 = vlaneseq
    %v3198 = vshrl.u32 %v3197, 7
    %v3199 = vsub.s32 0, %v3198
    %v3200 = vrot.slane %v3195, %v3199
    %v3202 = vadd.f32 %v3194, %v3200
    %v3203 = vld [vmem:[#allocation13] sm:$0xff]
    %v3204 = vld [vmem:[#allocation13 + $0x8] sm:$0xff]
    %v3205 = vld [vmem:[#allocation13 + $0x10] sm:$0xff]
    %v3206 = vld [vmem:[#allocation13 + $0x18] sm:$0xff]
    %v3207 = vld [vmem:[#allocation13 + $0x20] sm:$0xff]
    %v3208 = vld [vmem:[#allocation13 + $0x28] sm:$0xff]
    %v3209 = vld [vmem:[#allocation13 + $0x30] sm:$0xff]
    %v3210 = vld [vmem:[#allocation13 + $0x38] sm:$0xff]
    %v3211 = vld [vmem:[#allocation13 + $0x40] sm:$0xff]
    %v3212 = vld [vmem:[#allocation13 + $0x48] sm:$0xff]
    %v3213 = vld [vmem:[#allocation13 + $0x50] sm:$0xff]
    %v3214 = vld [vmem:[#allocation13 + $0x58] sm:$0xff]
    %v3215 = vld [vmem:[#allocation13 + $0x60] sm:$0xff]
    %v3216 = vld [vmem:[#allocation13 + $0x68] sm:$0xff]
    %v3217 = vld [vmem:[#allocation13 + $0x70] sm:$0xff]
    %v3218 = vld [vmem:[#allocation13 + $0x78] sm:$0xff]
    %v3219 = vld [vmem:[#allocation13 + $0x80] sm:$0xff]
    %v3220 = vld [vmem:[#allocation13 + $0x88] sm:$0xff]
    %v3221 = vld [vmem:[#allocation13 + $0x90] sm:$0xff]
    %v3222 = vld [vmem:[#allocation13 + $0x98] sm:$0xff]
    %v3223 = vld [vmem:[#allocation13 + $0xa0] sm:$0xff]
    %v3224 = vld [vmem:[#allocation13 + $0xa8] sm:$0xff]
    %v3225 = vld [vmem:[#allocation13 + $0xb0] sm:$0xff]
    %v3226 = vld [vmem:[#allocation13 + $0xb8] sm:$0xff]
    %v3227 = vld [vmem:[#allocation13 + $0xc0] sm:$0xff]
    %v3228 = vld [vmem:[#allocation13 + $0xc8] sm:$0xff]
    %v3229 = vld [vmem:[#allocation13 + $0xd0] sm:$0xff]
    %v3230 = vld [vmem:[#allocation13 + $0xd8] sm:$0xff]
    %v3231 = vld [vmem:[#allocation13 + $0xe0] sm:$0xff]
    %v3232 = vld [vmem:[#allocation13 + $0xe8] sm:$0xff]
    %v3233 = vld [vmem:[#allocation13 + $0xf0] sm:$0xff]
    %v3234 = vld [vmem:[#allocation13 + $0xf8] sm:$0xff]
    %v3235 = vld [vmem:[%s13] sm:$0x3]
    %v3237 = vlaneseq
    %v3238 = vshrl.u32 %v3237, 7
    %v3239 = vsub.s32 0, %v3238
    %v3240 = vrot.slane %v3235, %v3239
    %v3241 = vlaneseq
    %v3242 = vshrl.u32 %v3241, 7
    %v3243 = vsub.s32 1, %v3242
    %v3244 = vrot.slane %v3235, %v3243
    %3247 = vmatprep.subr.mxu0 %v3204
    %3248 = vmatpush1.msra.mxu0 %v3203
    %3249 = vmatprep.subr.mxu0 %v3206
    %3250 = vmatpush1.msra.mxu0 %v3205
    %3251 = vmatprep.subr.mxu0 %v3208
    %3252 = vmatpush1.msra.mxu0 %v3207
    %3253 = vmatprep.subr.mxu0 %v3210
    %3254 = vmatpush1.msra.mxu0 %v3209
    %3255 = vmatprep.subr.mxu0 %v3212
    %3256 = vmatpush1.msra.mxu0 %v3211
    %3257 = vmatprep.subr.mxu0 %v3214
    %3258 = vmatpush1.msra.mxu0 %v3213
    %3259 = vmatprep.subr.mxu0 %v3216
    %3260 = vmatpush1.msra.mxu0 %v3215
    %3261 = vmatprep.subr.mxu0 %v3218
    %3262 = vmatpush1.msra.mxu0 %v3217
    %3263 = vmatprep.subr.mxu0 %v3220
    %3264 = vmatpush1.msra.mxu0 %v3219
    %3265 = vmatprep.subr.mxu0 %v3222
    %3266 = vmatpush1.msra.mxu0 %v3221
    %3267 = vmatprep.subr.mxu0 %v3224
    %3268 = vmatpush1.msra.mxu0 %v3223
    %3269 = vmatprep.subr.mxu0 %v3226
    %3270 = vmatpush1.msra.mxu0 %v3225
    %3271 = vmatprep.subr.mxu0 %v3228
    %3272 = vmatpush1.msra.mxu0 %v3227
    %3273 = vmatprep.subr.mxu0 %v3230
    %3274 = vmatpush1.msra.mxu0 %v3229
    %3275 = vmatprep.subr.mxu0 %v3232
    %3276 = vmatpush1.msra.mxu0 %v3231
    %3277 = vmatprep.subr.mxu0 %v3234
    %3278 = vmatpush1.msra.mxu0 %v3233
    %3279 = vmatprep.subr.mxu0 0.0
    %3280 = vmatpush1.msra.mxu0 0.0
    %3281 = vmatprep.subr.mxu0 0.0
    %3282 = vmatpush1.msra.mxu0 0.0
    %3283 = vmatprep.subr.mxu0 0.0
    %3284 = vmatpush1.msra.mxu0 0.0
    %3285 = vmatprep.subr.mxu0 0.0
    %3286 = vmatpush1.msra.mxu0 0.0
    %3287 = vmatprep.subr.mxu0 0.0
    %3288 = vmatpush1.msra.mxu0 0.0
    %3289 = vmatprep.subr.mxu0 0.0
    %3290 = vmatpush1.msra.mxu0 0.0
    %3291 = vmatprep.subr.mxu0 0.0
    %3292 = vmatpush1.msra.mxu0 0.0
    %3293 = vmatprep.subr.mxu0 0.0
    %3294 = vmatpush1.msra.mxu0 0.0
    %3295 = vmatprep.subr.mxu0 0.0
    %3296 = vmatpush1.msra.mxu0 0.0
    %3297 = vmatprep.subr.mxu0 0.0
    %3298 = vmatpush1.msra.mxu0 0.0
    %3299 = vmatprep.subr.mxu0 0.0
    %3300 = vmatpush1.msra.mxu0 0.0
    %3301 = vmatprep.subr.mxu0 0.0
    %3302 = vmatpush1.msra.mxu0 0.0
    %3303 = vmatprep.subr.mxu0 0.0
    %3304 = vmatpush1.msra.mxu0 0.0
    %3305 = vmatprep.subr.mxu0 0.0
    %3306 = vmatpush1.msra.mxu0 0.0
    %3307 = vmatprep.subr.mxu0 0.0
    %3308 = vmatpush1.msra.mxu0 0.0
    %3309 = vmatprep.subr.mxu0 0.0
    %3310 = vmatpush1.msra.mxu0 0.0
    %3311 = vmatprep.mubr.f32.mxu0 0.0
    %3312 = vmatmul.mubr.f32.gmra.mrb[0].mxu0 %v3202
    %v3313 = vpop.f32.mrb[0].mxu0
    %v3314 = vadd.f32 %v3240, %v3313
    %v3315 = vpop.f32.mrb[0].mxu0
    %v3316 = vadd.f32 %v3244, %v3315
    %3317 = vdwg.mxu0
    %v3318 = vmul.f32 %v3314, %v3070
    %v3319 = vmul.f32 %v3316, %v3070
    %v3320 = vrot.slane %v3318, 4
    %v3321 = vadd.f32 %v3318, %v3320
    %v3322 = vrot.slane %v3321, 2
    %v3323 = vadd.f32 %v3321, %v3322
    %v3324 = vrot.slane %v3323, 1
    %v3325 = vadd.f32 %v3323, %v3324
    %v3326 = vrot.slane %v3319, 4
    %v3327 = vadd.f32 %v3319, %v3326
    %v3328 = vrot.slane %v3327, 2
    %v3329 = vadd.f32 %v3327, %v3328
    %v3330 = vrot.slane %v3329, 1
    %v3331 = vadd.f32 %v3329, %v3330
    %v3332 = vmul.f32 %v3325, 0.5
    %v3333 = vmul.f32 %v3331, 0.5
    %v3334 = vmul.f32 %v3318, %v3314
    %v3335 = vmul.f32 %v3319, %v3316
    %v3336 = vrot.slane %v3334, 4
    %v3337 = vadd.f32 %v3334, %v3336
    %v3338 = vrot.slane %v3337, 2
    %v3339 = vadd.f32 %v3337, %v3338
    %v3340 = vrot.slane %v3339, 1
    %v3341 = vadd.f32 %v3339, %v3340
    %v3342 = vrot.slane %v3335, 4
    %v3343 = vadd.f32 %v3335, %v3342
    %v3344 = vrot.slane %v3343, 2
    %v3345 = vadd.f32 %v3343, %v3344
    %v3346 = vrot.slane %v3345, 1
    %v3347 = vadd.f32 %v3345, %v3346
    %v3348 = vmul.f32 %v3341, 0.5
    %v3349 = vmul.f32 %v3347, 0.5
    %v3350 = vmul.f32 %v3332, %v3332
    %v3351 = vmul.f32 %v3333, %v3333
    %v3352 = vsub.f32 %v3348, %v3350
    %v3353 = vsub.f32 %v3349, %v3351
    %v3354 = vmax.f32 %v3352, 0.0
    %v3355 = vmax.f32 %v3353, 0.0
    %v3356 = vsub.f32 %v3314, %v3332
    %v3357 = vsub.f32 %v3316, %v3333
    %v3358 = vadd.f32 %v3354, 1e-05
    %v3359 = vadd.f32 %v3355, 1e-05
    %v3360 = vrsqrt.pop %v3358
    %v3361 = vrsqrt.pop %v3359
    %v3362 = vmul.f32 %v3356, %v3360
    %v3363 = vmul.f32 %v3357, %v3361
    %v3364 = vld [vmem:[#allocation15] sm:$0x3]
    %v3366 = vlaneseq
    %v3367 = vshrl.u32 %v3366, 7
    %v3368 = vsub.s32 0, %v3367
    %v3369 = vrot.slane %v3364, %v3368
    %v3370 = vlaneseq
    %v3371 = vshrl.u32 %v3370, 7
    %v3372 = vsub.s32 1, %v3371
    %v3373 = vrot.slane %v3364, %v3372
    %v3376 = vmul.f32 %v3362, %v3369
    %v3377 = vmul.f32 %v3363, %v3373
    %v3378 = vld [vmem:[#allocation16] sm:$0x3]
    %v3380 = vlaneseq
    %v3381 = vshrl.u32 %v3380, 7
    %v3382 = vsub.s32 0, %v3381
    %v3383 = vrot.slane %v3378, %v3382
    %v3384 = vlaneseq
    %v3385 = vshrl.u32 %v3384, 7
    %v3386 = vsub.s32 1, %v3385
    %v3387 = vrot.slane %v3378, %v3386
    %v3390 = vadd.f32 %v3376, %v3383
    %v3391 = vadd.f32 %v3377, %v3387
    %v3392 = vld [vmem:[#allocation18] sm:$0xff]
    %v3393 = vld [vmem:[#allocation18 + $0x8] sm:$0xff]
    %v3394 = vld [vmem:[#allocation18 + $0x10] sm:$0xff]
    %v3395 = vld [vmem:[#allocation18 + $0x18] sm:$0xff]
    %v3396 = vld [vmem:[#allocation18 + $0x20] sm:$0xff]
    %v3397 = vld [vmem:[#allocation18 + $0x28] sm:$0xff]
    %v3398 = vld [vmem:[#allocation18 + $0x30] sm:$0xff]
    %v3399 = vld [vmem:[#allocation18 + $0x38] sm:$0xff]
    %v3400 = vld [vmem:[#allocation18 + $0x40] sm:$0xff]
    %v3401 = vld [vmem:[#allocation18 + $0x48] sm:$0xff]
    %v3402 = vld [vmem:[#allocation18 + $0x50] sm:$0xff]
    %v3403 = vld [vmem:[#allocation18 + $0x58] sm:$0xff]
    %v3404 = vld [vmem:[#allocation18 + $0x60] sm:$0xff]
    %v3405 = vld [vmem:[#allocation18 + $0x68] sm:$0xff]
    %v3406 = vld [vmem:[#allocation18 + $0x70] sm:$0xff]
    %v3407 = vld [vmem:[#allocation18 + $0x78] sm:$0xff]
    %v3408 = vld [vmem:[#allocation18 + $0x80] sm:$0xff]
    %v3409 = vld [vmem:[#allocation18 + $0x88] sm:$0xff]
    %v3410 = vld [vmem:[#allocation18 + $0x90] sm:$0xff]
    %v3411 = vld [vmem:[#allocation18 + $0x98] sm:$0xff]
    %v3412 = vld [vmem:[#allocation18 + $0xa0] sm:$0xff]
    %v3413 = vld [vmem:[#allocation18 + $0xa8] sm:$0xff]
    %v3414 = vld [vmem:[#allocation18 + $0xb0] sm:$0xff]
    %v3415 = vld [vmem:[#allocation18 + $0xb8] sm:$0xff]
    %v3416 = vld [vmem:[#allocation18 + $0xc0] sm:$0xff]
    %v3417 = vld [vmem:[#allocation18 + $0xc8] sm:$0xff]
    %v3418 = vld [vmem:[#allocation18 + $0xd0] sm:$0xff]
    %v3419 = vld [vmem:[#allocation18 + $0xd8] sm:$0xff]
    %v3420 = vld [vmem:[#allocation18 + $0xe0] sm:$0xff]
    %v3421 = vld [vmem:[#allocation18 + $0xe8] sm:$0xff]
    %v3422 = vld [vmem:[#allocation18 + $0xf0] sm:$0xff]
    %v3423 = vld [vmem:[#allocation18 + $0xf8] sm:$0xff]
    %v3424 = vld [vmem:[%s17] sm:$0x1]
    %v3426 = vlaneseq
    %v3427 = vshrl.u32 %v3426, 7
    %v3428 = vsub.s32 0, %v3427
    %v3429 = vrot.slane %v3424, %v3428
    %3431 = vmatprep.subr.mxu0 0.0
    %3432 = vmatpush1.msra.mxu0 %v3392
    %3433 = vmatprep.subr.mxu0 0.0
    %3434 = vmatpush1.msra.mxu0 %v3393
    %3435 = vmatprep.subr.mxu0 0.0
    %3436 = vmatpush1.msra.mxu0 %v3394
    %3437 = vmatprep.subr.mxu0 0.0
    %3438 = vmatpush1.msra.mxu0 %v3395
    %3439 = vmatprep.subr.mxu0 0.0
    %3440 = vmatpush1.msra.mxu0 %v3396
    %3441 = vmatprep.subr.mxu0 0.0
    %3442 = vmatpush1.msra.mxu0 %v3397
    %3443 = vmatprep.subr.mxu0 0.0
    %3444 = vmatpush1.msra.mxu0 %v3398
    %3445 = vmatprep.subr.mxu0 0.0
    %3446 = vmatpush1.msra.mxu0 %v3399
    %3447 = vmatprep.subr.mxu0 0.0
    %3448 = vmatpush1.msra.mxu0 %v3400
    %3449 = vmatprep.subr.mxu0 0.0
    %3450 = vmatpush1.msra.mxu0 %v3401
    %3451 = vmatprep.subr.mxu0 0.0
    %3452 = vmatpush1.msra.mxu0 %v3402
    %3453 = vmatprep.subr.mxu0 0.0
    %3454 = vmatpush1.msra.mxu0 %v3403
    %3455 = vmatprep.subr.mxu0 0.0
    %3456 = vmatpush1.msra.mxu0 %v3404
    %3457 = vmatprep.subr.mxu0 0.0
    %3458 = vmatpush1.msra.mxu0 %v3405
    %3459 = vmatprep.subr.mxu0 0.0
    %3460 = vmatpush1.msra.mxu0 %v3406
    %3461 = vmatprep.subr.mxu0 0.0
    %3462 = vmatpush1.msra.mxu0 %v3407
    %3463 = vmatprep.subr.mxu0 0.0
    %3464 = vmatpush1.msra.mxu0 %v3408
    %3465 = vmatprep.subr.mxu0 0.0
    %3466 = vmatpush1.msra.mxu0 %v3409
    %3467 = vmatprep.subr.mxu0 0.0
    %3468 = vmatpush1.msra.mxu0 %v3410
    %3469 = vmatprep.subr.mxu0 0.0
    %3470 = vmatpush1.msra.mxu0 %v3411
    %3471 = vmatprep.subr.mxu0 0.0
    %3472 = vmatpush1.msra.mxu0 %v3412
    %3473 = vmatprep.subr.mxu0 0.0
    %3474 = vmatpush1.msra.mxu0 %v3413
    %3475 = vmatprep.subr.mxu0 0.0
    %3476 = vmatpush1.msra.mxu0 %v3414
    %3477 = vmatprep.subr.mxu0 0.0
    %3478 = vmatpush1.msra.mxu0 %v3415
    %3479 = vmatprep.subr.mxu0 0.0
    %3480 = vmatpush1.msra.mxu0 %v3416
    %3481 = vmatprep.subr.mxu0 0.0
    %3482 = vmatpush1.msra.mxu0 %v3417
    %3483 = vmatprep.subr.mxu0 0.0
    %3484 = vmatpush1.msra.mxu0 %v3418
    %3485 = vmatprep.subr.mxu0 0.0
    %3486 = vmatpush1.msra.mxu0 %v3419
    %3487 = vmatprep.subr.mxu0 0.0
    %3488 = vmatpush1.msra.mxu0 %v3420
    %3489 = vmatprep.subr.mxu0 0.0
    %3490 = vmatpush1.msra.mxu0 %v3421
    %3491 = vmatprep.subr.mxu0 0.0
    %3492 = vmatpush1.msra.mxu0 %v3422
    %3493 = vmatprep.subr.mxu0 0.0
    %3494 = vmatpush1.msra.mxu0 %v3423
    %3495 = vmatprep.mubr.f32.mxu0 %v3391
    %3496 = vmatmul.mubr.f32.gmra.mrb[0].mxu0 %v3390
    %v3497 = vpop.f32.mrb[0].mxu0
    %v3498 = vadd.f32 %v3429, %v3497
    %v3499 = vpop.f32.mrb[0].mxu0
    %3500 = vdwg.mxu0
    %3501 = vst [vmem:[%s18] sm:$0xff] %v3498
    // Predicated region
    $region118: #{gru_model_forward.1} parent=1 // pred_check
      _
    $region119: #{gru_model_forward.1} parent=1 // pred_check_branch
      %3503 = sbr.rel (0) target = $region121
    $region120: #{gru_model_forward.1} parent=1 // pred_region
      _
    $region121: #{gru_model_forward.1} parent=1 // pred_fallthru
      _
    // Predicated region
    $region122: #{gru_model_forward.1} parent=1 // pred_check
      _
    $region123: #{gru_model_forward.1} parent=1 // pred_check_branch
      %3505 = sbr.rel (0) target = $region125
    $region124: #{gru_model_forward.1} parent=1 // pred_region
      _
    $region125: #{gru_model_forward.1} parent=1 // pred_fallthru
      _
    %3506 = vsyncpa [#allocation3], 1
    %3507 = vsyncpa [#allocation5], 1
    %3508 = vsyncpa [#allocation8], 1
    %3509 = vsyncpa [#allocation11], 1
    %3510 = vsyncpa [#allocation14], 1
    %3511 = vsyncpa [#allocation17], 1

</llo_original>
